<compile_context>
chip_gen: v7x
topology: tpu7x:2x2x1
jax: 0.10.0
libtpu: 0.0.40
codegen_flags: <defaults>
</compile_context>

<pallas_src>
import functools

import numpy as np
import jax
import jax.numpy as jnp
from jax.experimental import pallas as pl
from jax.experimental.pallas import tpu as pltpu

KSIZE = 3
STRIDE = 2


def _conv_out(size):
    return (size - (KSIZE - 1) - 1) // STRIDE + 1


# ------------------------------ Pallas kernel --------------------------------
def _dqn_fused_kernel(*refs, n_layers):
    """Entire DQNUser forward on VMEM-resident operands."""
    x_ref = refs[0]
    layer_refs = refs[1:1 + 4 * n_layers]
    h1w_ref, h1b_ref, h2w_ref, h2b_ref, out_ref = refs[1 + 4 * n_layers:]

    a = x_ref[...]                                    # (N*H, W*Cin) f32
    for li in range(n_layers):
        sel_ref, w_ref, s_ref, b_ref = layer_refs[4 * li:4 * li + 4]
        acc = None
        for kh in range(KSIZE):
            # stride-2 row pick via exact 0/1 matmul: (N*OH, W*Cin)
            rows = jnp.dot(sel_ref[kh], a, preferred_element_type=jnp.float32)
            # block-banded weight handles kw + stride-2 columns:
            # (N*OH, W*Cin) @ (W*Cin, OW*Cout) -> (N*OH, OW*Cout)
            part = jnp.dot(rows.astype(jnp.bfloat16), w_ref[kh],
                           preferred_element_type=jnp.float32)
            acc = part if acc is None else acc + part
        y = acc * s_ref[...] + b_ref[...]             # conv bias + BN(eval), folded
        a = jnp.maximum(y, 0.0) if li < n_layers - 1 else y

    # Final spatial is 1x1 -> `a` is already the (N, C_last) flattened features
    # in PyTorch's NCHW flatten order.
    a = 1.0 / (1.0 + jnp.exp(-a))                     # sigmoid
    h = jnp.dot(a.astype(jnp.bfloat16), h1w_ref[...],
                preferred_element_type=jnp.float32) + h1b_ref[...]
    o = jnp.dot(h.astype(jnp.bfloat16), h2w_ref[...],
                preferred_element_type=jnp.float32) + h2b_ref[...]
    out_ref[...] = o.astype(out_ref.dtype)


# ------------------------------ forward wrapper -------------------------------
def dqn_user_forward(x_nchw, flat_params, *, n_layers, outputs):
    n, c, h, w = x_nchw.shape
    # NCHW -> NHWC -> 2D (N*H, W*C): the lane-dense layout the kernel chains on.
    x2d = jnp.transpose(x_nchw, (0, 2, 3, 1)).reshape(n * h, w * c)
    vmem = pl.BlockSpec(memory_space=pltpu.MemorySpace.VMEM)
    return pl.pallas_call(
        functools.partial(_dqn_fused_kernel, n_layers=n_layers),
        out_shape=jax.ShapeDtypeStruct((n, outputs), jnp.float32),
        in_specs=[vmem] * (1 + len(flat_params)),
        out_specs=vmem,
    )(x2d, *flat_params)


# ------------------------------ parameter setup -------------------------------
def _init_params(key, h, w, outputs, n_layers, batch):
    """Synthetic DQNUser parameters, prepacked for the fused Pallas kernel."""
    eps = 1e-5
    n_filters = 16
    chans = [3] + [n_filters * 2 ** i for i in range(n_layers)]
    hh, ww = h, w
    flat = []
    for li in range(n_layers):
        cin, cout = chans[li], chans[li + 1]
        oh, ow = _conv_out(hh), _conv_out(ww)
        key, kw_, kb, kg, kbe, km, kv = jax.random.split(key, 7)
        w_oihw = np.asarray(0.1 * jax.random.normal(kw_, (cout, cin, KSIZE, KSIZE), jnp.float32))
        conv_b = np.asarray(0.05 * jax.random.normal(kb, (cout,), jnp.float32))
        gamma = np.asarray(1.0 + 0.1 * jax.random.normal(kg, (cout,), jnp.float32))
        beta = np.asarray(0.1 * jax.random.normal(kbe, (cout,), jnp.float32))
        r_mean = np.asarray(0.05 * jax.random.normal(km, (cout,), jnp.float32))
        r_var = np.asarray(1.0 + 0.1 * jax.random.uniform(kv, (cout,), jnp.float32))

        # stride-2 row-selection constants: sel[kh, n*OH+oh, n*H + 2*oh + kh] = 1
        sel = np.zeros((KSIZE, batch * oh, batch * hh), np.float32)
        for kh in range(KSIZE):
            for n in range(batch):
                for o in range(oh):
                    sel[kh, n * oh + o, n * hh + STRIDE * o + kh] = 1.0

        # block-banded conv weights:
        # bigw[kh, w*Cin + c, ow*Cout + co] = W[co, c, kh, w - 2*ow] (if in band)
        bigw = np.zeros((KSIZE, ww * cin, ow * cout), np.float32)
        for kh in range(KSIZE):
            for kw in range(KSIZE):
                blk = w_oihw[:, :, kh, kw].T          # (Cin, Cout)
                for o in range(ow):
                    col = STRIDE * o + kw
                    bigw[kh, col * cin:(col + 1) * cin, o * cout:(o + 1) * cout] = blk

        # fold conv bias + eval-mode BN into per-channel scale/bias, tile to OW*Cout
        scale = gamma / np.sqrt(r_var + eps)
        bias = (conv_b - r_mean) * scale + beta
        scale_t = np.tile(scale, ow).reshape(1, ow * cout).astype(np.float32)
        bias_t = np.tile(bias, ow).reshape(1, ow * cout).astype(np.float32)

        flat += [jnp.asarray(sel),
                 jnp.asarray(bigw, dtype=jnp.bfloat16),
                 jnp.asarray(scale_t),
                 jnp.asarray(bias_t)]
        hh, ww = oh, ow

    assert hh == 1 and ww == 1, "fused head assumes the conv stack ends at 1x1 spatial"
    lin_in = hh * ww * chans[-1]
    key, k1, k1b, k2, k2b = jax.random.split(key, 5)
    h1w = 0.1 * jax.random.normal(k1, (lin_in, 16), jnp.float32)   # Linear weight, pre-transposed
    h1b = 0.05 * jax.random.normal(k1b, (1, 16), jnp.float32)
    h2w = 0.1 * jax.random.normal(k2, (16, outputs), jnp.float32)
    h2b = 0.05 * jax.random.normal(k2b, (1, outputs), jnp.float32)
    flat += [h1w.astype(jnp.bfloat16), h1b, h2w.astype(jnp.bfloat16), h2b]
    return flat


if __name__ == "__main__":
    H = W = 32        # spatial 32 -> 15 -> 7 -> 3 -> 1
    N_LAYERS = 4      # channels 3 -> 16 -> 32 -> 64 -> 128
    OUTPUTS = 4
    BATCH = 2

    key = jax.random.PRNGKey(0)
    k_params, k_x = jax.random.split(key)
    flat_params = _init_params(k_params, H, W, OUTPUTS, N_LAYERS, BATCH)

    x = jax.random.normal(k_x, (BATCH, 3, H, W), jnp.float32)

    fwd = jax.jit(lambda xx: dqn_user_forward(
        xx, flat_params, n_layers=N_LAYERS, outputs=OUTPUTS))
    out = jax.block_until_ready(fwd(x))
    assert out.shape == (BATCH, OUTPUTS), out.shape
    assert bool(jnp.all(jnp.isfinite(out))), "non-finite output"
    print("KERNEL_OK")
</pallas_src>

<mosaic_0001>
module attributes {stable_mosaic.version = 11 : i64} {
  func.func @_dqn_fused_kernel(%arg0: memref<64x96xf32, #tpu.memory_space<vmem>>, %arg1: memref<3x30x64xf32, #tpu.memory_space<vmem>>, %arg2: memref<3x96x240xbf16, #tpu.memory_space<vmem>>, %arg3: memref<1x240xf32, #tpu.memory_space<vmem>>, %arg4: memref<1x240xf32, #tpu.memory_space<vmem>>, %arg5: memref<3x14x30xf32, #tpu.memory_space<vmem>>, %arg6: memref<3x240x224xbf16, #tpu.memory_space<vmem>>, %arg7: memref<1x224xf32, #tpu.memory_space<vmem>>, %arg8: memref<1x224xf32, #tpu.memory_space<vmem>>, %arg9: memref<3x6x14xf32, #tpu.memory_space<vmem>>, %arg10: memref<3x224x192xbf16, #tpu.memory_space<vmem>>, %arg11: memref<1x192xf32, #tpu.memory_space<vmem>>, %arg12: memref<1x192xf32, #tpu.memory_space<vmem>>, %arg13: memref<3x2x6xf32, #tpu.memory_space<vmem>>, %arg14: memref<3x192x128xbf16, #tpu.memory_space<vmem>>, %arg15: memref<1x128xf32, #tpu.memory_space<vmem>>, %arg16: memref<1x128xf32, #tpu.memory_space<vmem>>, %arg17: memref<128x16xbf16, #tpu.memory_space<vmem>>, %arg18: memref<1x16xf32, #tpu.memory_space<vmem>>, %arg19: memref<16x4xbf16, #tpu.memory_space<vmem>>, %arg20: memref<1x4xf32, #tpu.memory_space<vmem>>, %arg21: memref<2x4xf32, #tpu.memory_space<vmem>>) attributes {dimension_semantics = [], scalar_prefetch = 0 : i64, scratch_operands = 0 : i64, tpu.core_type = #tpu.core_type<tc>} {
    %c0 = arith.constant 0 : index
    %c0_0 = arith.constant 0 : index
    %0 = vector.load %arg0[%c0, %c0_0] : memref<64x96xf32, #tpu.memory_space<vmem>>, vector<64x96xf32>
    %c0_1 = arith.constant 0 : index
    %c0_2 = arith.constant 0 : index
    %c0_3 = arith.constant 0 : index
    %1 = vector.load %arg1[%c0_1, %c0_2, %c0_3] : memref<3x30x64xf32, #tpu.memory_space<vmem>>, vector<1x30x64xf32>
    %2 = vector.shape_cast %1 : vector<1x30x64xf32> to vector<30x64xf32>
    %cst = arith.constant dense<0.000000e+00> : vector<30x96xf32>
    %3 = tpu.matmul %2, %0, %cst {dimension_numbers = #tpu.dot_dimension_numbers<[1], [0], [0], [1], [0, 0, 1, 1], [], []>} : vector<30x64xf32>, vector<64x96xf32>, vector<30x96xf32> -> vector<30x96xf32>
    %4 = arith.truncf %3 : vector<30x96xf32> to vector<30x96xbf16>
    %c0_4 = arith.constant 0 : index
    %c0_5 = arith.constant 0 : index
    %c0_6 = arith.constant 0 : index
    %5 = vector.load %arg2[%c0_4, %c0_5, %c0_6] : memref<3x96x240xbf16, #tpu.memory_space<vmem>>, vector<1x96x240xbf16>
    %6 = vector.shape_cast %5 : vector<1x96x240xbf16> to vector<96x240xbf16>
    %cst_7 = arith.constant dense<0.000000e+00> : vector<30x240xf32>
    %7 = tpu.matmul %4, %6, %cst_7 {dimension_numbers = #tpu.dot_dimension_numbers<[1], [0], [0], [1], [0, 0, 1, 1], [], []>} : vector<30x96xbf16>, vector<96x240xbf16>, vector<30x240xf32> -> vector<30x240xf32>
    %c1 = arith.constant 1 : index
    %c0_8 = arith.constant 0 : index
    %c0_9 = arith.constant 0 : index
    %8 = vector.load %arg1[%c1, %c0_8, %c0_9] : memref<3x30x64xf32, #tpu.memory_space<vmem>>, vector<1x30x64xf32>
    %9 = vector.shape_cast %8 : vector<1x30x64xf32> to vector<30x64xf32>
    %cst_10 = arith.constant dense<0.000000e+00> : vector<30x96xf32>
    %10 = tpu.matmul %9, %0, %cst_10 {dimension_numbers = #tpu.dot_dimension_numbers<[1], [0], [0], [1], [0, 0, 1, 1], [], []>} : vector<30x64xf32>, vector<64x96xf32>, vector<30x96xf32> -> vector<30x96xf32>
    %11 = arith.truncf %10 : vector<30x96xf32> to vector<30x96xbf16>
    %c1_11 = arith.constant 1 : index
    %c0_12 = arith.constant 0 : index
    %c0_13 = arith.constant 0 : index
    %12 = vector.load %arg2[%c1_11, %c0_12, %c0_13] : memref<3x96x240xbf16, #tpu.memory_space<vmem>>, vector<1x96x240xbf16>
    %13 = vector.shape_cast %12 : vector<1x96x240xbf16> to vector<96x240xbf16>
    %cst_14 = arith.constant dense<0.000000e+00> : vector<30x240xf32>
    %14 = tpu.matmul %11, %13, %cst_14 {dimension_numbers = #tpu.dot_dimension_numbers<[1], [0], [0], [1], [0, 0, 1, 1], [], []>} : vector<30x96xbf16>, vector<96x240xbf16>, vector<30x240xf32> -> vector<30x240xf32>
    %15 = arith.addf %7, %14 : vector<30x240xf32>
    %c2 = arith.constant 2 : index
    %c0_15 = arith.constant 0 : index
    %c0_16 = arith.constant 0 : index
    %16 = vector.load %arg1[%c2, %c0_15, %c0_16] : memref<3x30x64xf32, #tpu.memory_space<vmem>>, vector<1x30x64xf32>
    %17 = vector.shape_cast %16 : vector<1x30x64xf32> to vector<30x64xf32>
    %cst_17 = arith.constant dense<0.000000e+00> : vector<30x96xf32>
    %18 = tpu.matmul %17, %0, %cst_17 {dimension_numbers = #tpu.dot_dimension_numbers<[1], [0], [0], [1], [0, 0, 1, 1], [], []>} : vector<30x64xf32>, vector<64x96xf32>, vector<30x96xf32> -> vector<30x96xf32>
    %19 = arith.truncf %18 : vector<30x96xf32> to vector<30x96xbf16>
    %c2_18 = arith.constant 2 : index
    %c0_19 = arith.constant 0 : index
    %c0_20 = arith.constant 0 : index
    %20 = vector.load %arg2[%c2_18, %c0_19, %c0_20] : memref<3x96x240xbf16, #tpu.memory_space<vmem>>, vector<1x96x240xbf16>
    %21 = vector.shape_cast %20 : vector<1x96x240xbf16> to vector<96x240xbf16>
    %cst_21 = arith.constant dense<0.000000e+00> : vector<30x240xf32>
    %22 = tpu.matmul %19, %21, %cst_21 {dimension_numbers = #tpu.dot_dimension_numbers<[1], [0], [0], [1], [0, 0, 1, 1], [], []>} : vector<30x96xbf16>, vector<96x240xbf16>, vector<30x240xf32> -> vector<30x240xf32>
    %23 = arith.addf %15, %22 : vector<30x240xf32>
    %c0_22 = arith.constant 0 : index
    %c0_23 = arith.constant 0 : index
    %24 = vector.load %arg3[%c0_22, %c0_23] : memref<1x240xf32, #tpu.memory_space<vmem>>, vector<1x240xf32>
    %25 = vector.broadcast %24 : vector<1x240xf32> to vector<30x240xf32>
    %26 = arith.mulf %23, %25 : vector<30x240xf32>
    %c0_24 = arith.constant 0 : index
    %c0_25 = arith.constant 0 : index
    %27 = vector.load %arg4[%c0_24, %c0_25] : memref<1x240xf32, #tpu.memory_space<vmem>>, vector<1x240xf32>
    %28 = vector.broadcast %27 : vector<1x240xf32> to vector<30x240xf32>
    %29 = arith.addf %26, %28 : vector<30x240xf32>
    %cst_26 = arith.constant 0.000000e+00 : f32
    %30 = vector.broadcast %cst_26 : f32 to vector<30x240xf32>
    %31 = arith.maximumf %29, %30 : vector<30x240xf32>
    %c0_27 = arith.constant 0 : index
    %c0_28 = arith.constant 0 : index
    %c0_29 = arith.constant 0 : index
    %32 = vector.load %arg5[%c0_27, %c0_28, %c0_29] : memref<3x14x30xf32, #tpu.memory_space<vmem>>, vector<1x14x30xf32>
    %33 = vector.shape_cast %32 : vector<1x14x30xf32> to vector<14x30xf32>
    %cst_30 = arith.constant dense<0.000000e+00> : vector<14x240xf32>
    %34 = tpu.matmul %33, %31, %cst_30 {dimension_numbers = #tpu.dot_dimension_numbers<[1], [0], [0], [1], [0, 0, 1, 1], [], []>} : vector<14x30xf32>, vector<30x240xf32>, vector<14x240xf32> -> vector<14x240xf32>
    %35 = arith.truncf %34 : vector<14x240xf32> to vector<14x240xbf16>
    %c0_31 = arith.constant 0 : index
    %c0_32 = arith.constant 0 : index
    %c0_33 = arith.constant 0 : index
    %36 = vector.load %arg6[%c0_31, %c0_32, %c0_33] : memref<3x240x224xbf16, #tpu.memory_space<vmem>>, vector<1x240x224xbf16>
    %37 = vector.shape_cast %36 : vector<1x240x224xbf16> to vector<240x224xbf16>
    %cst_34 = arith.constant dense<0.000000e+00> : vector<14x224xf32>
    %38 = tpu.matmul %35, %37, %cst_34 {dimension_numbers = #tpu.dot_dimension_numbers<[1], [0], [0], [1], [0, 0, 1, 1], [], []>} : vector<14x240xbf16>, vector<240x224xbf16>, vector<14x224xf32> -> vector<14x224xf32>
    %c1_35 = arith.constant 1 : index
    %c0_36 = arith.constant 0 : index
    %c0_37 = arith.constant 0 : index
    %39 = vector.load %arg5[%c1_35, %c0_36, %c0_37] : memref<3x14x30xf32, #tpu.memory_space<vmem>>, vector<1x14x30xf32>
    %40 = vector.shape_cast %39 : vector<1x14x30xf32> to vector<14x30xf32>
    %cst_38 = arith.constant dense<0.000000e+00> : vector<14x240xf32>
    %41 = tpu.matmul %40, %31, %cst_38 {dimension_numbers = #tpu.dot_dimension_numbers<[1], [0], [0], [1], [0, 0, 1, 1], [], []>} : vector<14x30xf32>, vector<30x240xf32>, vector<14x240xf32> -> vector<14x240xf32>
    %42 = arith.truncf %41 : vector<14x240xf32> to vector<14x240xbf16>
    %c1_39 = arith.constant 1 : index
    %c0_40 = arith.constant 0 : index
    %c0_41 = arith.constant 0 : index
    %43 = vector.load %arg6[%c1_39, %c0_40, %c0_41] : memref<3x240x224xbf16, #tpu.memory_space<vmem>>, vector<1x240x224xbf16>
    %44 = vector.shape_cast %43 : vector<1x240x224xbf16> to vector<240x224xbf16>
    %cst_42 = arith.constant dense<0.000000e+00> : vector<14x224xf32>
    %45 = tpu.matmul %42, %44, %cst_42 {dimension_numbers = #tpu.dot_dimension_numbers<[1], [0], [0], [1], [0, 0, 1, 1], [], []>} : vector<14x240xbf16>, vector<240x224xbf16>, vector<14x224xf32> -> vector<14x224xf32>
    %46 = arith.addf %38, %45 : vector<14x224xf32>
    %c2_43 = arith.constant 2 : index
    %c0_44 = arith.constant 0 : index
    %c0_45 = arith.constant 0 : index
    %47 = vector.load %arg5[%c2_43, %c0_44, %c0_45] : memref<3x14x30xf32, #tpu.memory_space<vmem>>, vector<1x14x30xf32>
    %48 = vector.shape_cast %47 : vector<1x14x30xf32> to vector<14x30xf32>
    %cst_46 = arith.constant dense<0.000000e+00> : vector<14x240xf32>
    %49 = tpu.matmul %48, %31, %cst_46 {dimension_numbers = #tpu.dot_dimension_numbers<[1], [0], [0], [1], [0, 0, 1, 1], [], []>} : vector<14x30xf32>, vector<30x240xf32>, vector<14x240xf32> -> vector<14x240xf32>
    %50 = arith.truncf %49 : vector<14x240xf32> to vector<14x240xbf16>
    %c2_47 = arith.constant 2 : index
    %c0_48 = arith.constant 0 : index
    %c0_49 = arith.constant 0 : index
    %51 = vector.load %arg6[%c2_47, %c0_48, %c0_49] : memref<3x240x224xbf16, #tpu.memory_space<vmem>>, vector<1x240x224xbf16>
    %52 = vector.shape_cast %51 : vector<1x240x224xbf16> to vector<240x224xbf16>
    %cst_50 = arith.constant dense<0.000000e+00> : vector<14x224xf32>
    %53 = tpu.matmul %50, %52, %cst_50 {dimension_numbers = #tpu.dot_dimension_numbers<[1], [0], [0], [1], [0, 0, 1, 1], [], []>} : vector<14x240xbf16>, vector<240x224xbf16>, vector<14x224xf32> -> vector<14x224xf32>
    %54 = arith.addf %46, %53 : vector<14x224xf32>
    %c0_51 = arith.constant 0 : index
    %c0_52 = arith.constant 0 : index
    %55 = vector.load %arg7[%c0_51, %c0_52] : memref<1x224xf32, #tpu.memory_space<vmem>>, vector<1x224xf32>
    %56 = vector.broadcast %55 : vector<1x224xf32> to vector<14x224xf32>
    %57 = arith.mulf %54, %56 : vector<14x224xf32>
    %c0_53 = arith.constant 0 : index
    %c0_54 = arith.constant 0 : index
    %58 = vector.load %arg8[%c0_53, %c0_54] : memref<1x224xf32, #tpu.memory_space<vmem>>, vector<1x224xf32>
    %59 = vector.broadcast %58 : vector<1x224xf32> to vector<14x224xf32>
    %60 = arith.addf %57, %59 : vector<14x224xf32>
    %cst_55 = arith.constant 0.000000e+00 : f32
    %61 = vector.broadcast %cst_55 : f32 to vector<14x224xf32>
    %62 = arith.maximumf %60, %61 : vector<14x224xf32>
    %c0_56 = arith.constant 0 : index
    %c0_57 = arith.constant 0 : index
    %c0_58 = arith.constant 0 : index
    %63 = vector.load %arg9[%c0_56, %c0_57, %c0_58] : memref<3x6x14xf32, #tpu.memory_space<vmem>>, vector<1x6x14xf32>
    %64 = vector.shape_cast %63 : vector<1x6x14xf32> to vector<6x14xf32>
    %cst_59 = arith.constant dense<0.000000e+00> : vector<6x224xf32>
    %65 = tpu.matmul %64, %62, %cst_59 {dimension_numbers = #tpu.dot_dimension_numbers<[1], [0], [0], [1], [0, 0, 1, 1], [], []>} : vector<6x14xf32>, vector<14x224xf32>, vector<6x224xf32> -> vector<6x224xf32>
    %66 = arith.truncf %65 : vector<6x224xf32> to vector<6x224xbf16>
    %c0_60 = arith.constant 0 : index
    %c0_61 = arith.constant 0 : index
    %c0_62 = arith.constant 0 : index
    %67 = vector.load %arg10[%c0_60, %c0_61, %c0_62] : memref<3x224x192xbf16, #tpu.memory_space<vmem>>, vector<1x224x192xbf16>
    %68 = vector.shape_cast %67 : vector<1x224x192xbf16> to vector<224x192xbf16>
    %cst_63 = arith.constant dense<0.000000e+00> : vector<6x192xf32>
    %69 = tpu.matmul %66, %68, %cst_63 {dimension_numbers = #tpu.dot_dimension_numbers<[1], [0], [0], [1], [0, 0, 1, 1], [], []>} : vector<6x224xbf16>, vector<224x192xbf16>, vector<6x192xf32> -> vector<6x192xf32>
    %c1_64 = arith.constant 1 : index
    %c0_65 = arith.constant 0 : index
    %c0_66 = arith.constant 0 : index
    %70 = vector.load %arg9[%c1_64, %c0_65, %c0_66] : memref<3x6x14xf32, #tpu.memory_space<vmem>>, vector<1x6x14xf32>
    %71 = vector.shape_cast %70 : vector<1x6x14xf32> to vector<6x14xf32>
    %cst_67 = arith.constant dense<0.000000e+00> : vector<6x224xf32>
    %72 = tpu.matmul %71, %62, %cst_67 {dimension_numbers = #tpu.dot_dimension_numbers<[1], [0], [0], [1], [0, 0, 1, 1], [], []>} : vector<6x14xf32>, vector<14x224xf32>, vector<6x224xf32> -> vector<6x224xf32>
    %73 = arith.truncf %72 : vector<6x224xf32> to vector<6x224xbf16>
    %c1_68 = arith.constant 1 : index
    %c0_69 = arith.constant 0 : index
    %c0_70 = arith.constant 0 : index
    %74 = vector.load %arg10[%c1_68, %c0_69, %c0_70] : memref<3x224x192xbf16, #tpu.memory_space<vmem>>, vector<1x224x192xbf16>
    %75 = vector.shape_cast %74 : vector<1x224x192xbf16> to vector<224x192xbf16>
    %cst_71 = arith.constant dense<0.000000e+00> : vector<6x192xf32>
    %76 = tpu.matmul %73, %75, %cst_71 {dimension_numbers = #tpu.dot_dimension_numbers<[1], [0], [0], [1], [0, 0, 1, 1], [], []>} : vector<6x224xbf16>, vector<224x192xbf16>, vector<6x192xf32> -> vector<6x192xf32>
    %77 = arith.addf %69, %76 : vector<6x192xf32>
    %c2_72 = arith.constant 2 : index
    %c0_73 = arith.constant 0 : index
    %c0_74 = arith.constant 0 : index
    %78 = vector.load %arg9[%c2_72, %c0_73, %c0_74] : memref<3x6x14xf32, #tpu.memory_space<vmem>>, vector<1x6x14xf32>
    %79 = vector.shape_cast %78 : vector<1x6x14xf32> to vector<6x14xf32>
    %cst_75 = arith.constant dense<0.000000e+00> : vector<6x224xf32>
    %80 = tpu.matmul %79, %62, %cst_75 {dimension_numbers = #tpu.dot_dimension_numbers<[1], [0], [0], [1], [0, 0, 1, 1], [], []>} : vector<6x14xf32>, vector<14x224xf32>, vector<6x224xf32> -> vector<6x224xf32>
    %81 = arith.truncf %80 : vector<6x224xf32> to vector<6x224xbf16>
    %c2_76 = arith.constant 2 : index
    %c0_77 = arith.constant 0 : index
    %c0_78 = arith.constant 0 : index
    %82 = vector.load %arg10[%c2_76, %c0_77, %c0_78] : memref<3x224x192xbf16, #tpu.memory_space<vmem>>, vector<1x224x192xbf16>
    %83 = vector.shape_cast %82 : vector<1x224x192xbf16> to vector<224x192xbf16>
    %cst_79 = arith.constant dense<0.000000e+00> : vector<6x192xf32>
    %84 = tpu.matmul %81, %83, %cst_79 {dimension_numbers = #tpu.dot_dimension_numbers<[1], [0], [0], [1], [0, 0, 1, 1], [], []>} : vector<6x224xbf16>, vector<224x192xbf16>, vector<6x192xf32> -> vector<6x192xf32>
    %85 = arith.addf %77, %84 : vector<6x192xf32>
    %c0_80 = arith.constant 0 : index
    %c0_81 = arith.constant 0 : index
    %86 = vector.load %arg11[%c0_80, %c0_81] : memref<1x192xf32, #tpu.memory_space<vmem>>, vector<1x192xf32>
    %87 = vector.broadcast %86 : vector<1x192xf32> to vector<6x192xf32>
    %88 = arith.mulf %85, %87 : vector<6x192xf32>
    %c0_82 = arith.constant 0 : index
    %c0_83 = arith.constant 0 : index
    %89 = vector.load %arg12[%c0_82, %c0_83] : memref<1x192xf32, #tpu.memory_space<vmem>>, vector<1x192xf32>
    %90 = vector.broadcast %89 : vector<1x192xf32> to vector<6x192xf32>
    %91 = arith.addf %88, %90 : vector<6x192xf32>
    %cst_84 = arith.constant 0.000000e+00 : f32
    %92 = vector.broadcast %cst_84 : f32 to vector<6x192xf32>
    %93 = arith.maximumf %91, %92 : vector<6x192xf32>
    %c0_85 = arith.constant 0 : index
    %c0_86 = arith.constant 0 : index
    %c0_87 = arith.constant 0 : index
    %94 = vector.load %arg13[%c0_85, %c0_86, %c0_87] : memref<3x2x6xf32, #tpu.memory_space<vmem>>, vector<1x2x6xf32>
    %95 = vector.shape_cast %94 : vector<1x2x6xf32> to vector<2x6xf32>
    %cst_88 = arith.constant dense<0.000000e+00> : vector<2x192xf32>
    %96 = tpu.matmul %95, %93, %cst_88 {dimension_numbers = #tpu.dot_dimension_numbers<[1], [0], [0], [1], [0, 0, 1, 1], [], []>} : vector<2x6xf32>, vector<6x192xf32>, vector<2x192xf32> -> vector<2x192xf32>
    %97 = arith.truncf %96 : vector<2x192xf32> to vector<2x192xbf16>
    %c0_89 = arith.constant 0 : index
    %c0_90 = arith.constant 0 : index
    %c0_91 = arith.constant 0 : index
    %98 = vector.load %arg14[%c0_89, %c0_90, %c0_91] : memref<3x192x128xbf16, #tpu.memory_space<vmem>>, vector<1x192x128xbf16>
    %99 = vector.shape_cast %98 : vector<1x192x128xbf16> to vector<192x128xbf16>
    %cst_92 = arith.constant dense<0.000000e+00> : vector<2x128xf32>
    %100 = tpu.matmul %97, %99, %cst_92 {dimension_numbers = #tpu.dot_dimension_numbers<[1], [0], [0], [1], [0, 0, 1, 1], [], []>} : vector<2x192xbf16>, vector<192x128xbf16>, vector<2x128xf32> -> vector<2x128xf32>
    %c1_93 = arith.constant 1 : index
    %c0_94 = arith.constant 0 : index
    %c0_95 = arith.constant 0 : index
    %101 = vector.load %arg13[%c1_93, %c0_94, %c0_95] : memref<3x2x6xf32, #tpu.memory_space<vmem>>, vector<1x2x6xf32>
    %102 = vector.shape_cast %101 : vector<1x2x6xf32> to vector<2x6xf32>
    %cst_96 = arith.constant dense<0.000000e+00> : vector<2x192xf32>
    %103 = tpu.matmul %102, %93, %cst_96 {dimension_numbers = #tpu.dot_dimension_numbers<[1], [0], [0], [1], [0, 0, 1, 1], [], []>} : vector<2x6xf32>, vector<6x192xf32>, vector<2x192xf32> -> vector<2x192xf32>
    %104 = arith.truncf %103 : vector<2x192xf32> to vector<2x192xbf16>
    %c1_97 = arith.constant 1 : index
    %c0_98 = arith.constant 0 : index
    %c0_99 = arith.constant 0 : index
    %105 = vector.load %arg14[%c1_97, %c0_98, %c0_99] : memref<3x192x128xbf16, #tpu.memory_space<vmem>>, vector<1x192x128xbf16>
    %106 = vector.shape_cast %105 : vector<1x192x128xbf16> to vector<192x128xbf16>
    %cst_100 = arith.constant dense<0.000000e+00> : vector<2x128xf32>
    %107 = tpu.matmul %104, %106, %cst_100 {dimension_numbers = #tpu.dot_dimension_numbers<[1], [0], [0], [1], [0, 0, 1, 1], [], []>} : vector<2x192xbf16>, vector<192x128xbf16>, vector<2x128xf32> -> vector<2x128xf32>
    %108 = arith.addf %100, %107 : vector<2x128xf32>
    %c2_101 = arith.constant 2 : index
    %c0_102 = arith.constant 0 : index
    %c0_103 = arith.constant 0 : index
    %109 = vector.load %arg13[%c2_101, %c0_102, %c0_103] : memref<3x2x6xf32, #tpu.memory_space<vmem>>, vector<1x2x6xf32>
    %110 = vector.shape_cast %109 : vector<1x2x6xf32> to vector<2x6xf32>
    %cst_104 = arith.constant dense<0.000000e+00> : vector<2x192xf32>
    %111 = tpu.matmul %110, %93, %cst_104 {dimension_numbers = #tpu.dot_dimension_numbers<[1], [0], [0], [1], [0, 0, 1, 1], [], []>} : vector<2x6xf32>, vector<6x192xf32>, vector<2x192xf32> -> vector<2x192xf32>
    %112 = arith.truncf %111 : vector<2x192xf32> to vector<2x192xbf16>
    %c2_105 = arith.constant 2 : index
    %c0_106 = arith.constant 0 : index
    %c0_107 = arith.constant 0 : index
    %113 = vector.load %arg14[%c2_105, %c0_106, %c0_107] : memref<3x192x128xbf16, #tpu.memory_space<vmem>>, vector<1x192x128xbf16>
    %114 = vector.shape_cast %113 : vector<1x192x128xbf16> to vector<192x128xbf16>
    %cst_108 = arith.constant dense<0.000000e+00> : vector<2x128xf32>
    %115 = tpu.matmul %112, %114, %cst_108 {dimension_numbers = #tpu.dot_dimension_numbers<[1], [0], [0], [1], [0, 0, 1, 1], [], []>} : vector<2x192xbf16>, vector<192x128xbf16>, vector<2x128xf32> -> vector<2x128xf32>
    %116 = arith.addf %108, %115 : vector<2x128xf32>
    %c0_109 = arith.constant 0 : index
    %c0_110 = arith.constant 0 : index
    %117 = vector.load %arg15[%c0_109, %c0_110] : memref<1x128xf32, #tpu.memory_space<vmem>>, vector<1x128xf32>
    %118 = vector.broadcast %117 : vector<1x128xf32> to vector<2x128xf32>
    %119 = arith.mulf %116, %118 : vector<2x128xf32>
    %c0_111 = arith.constant 0 : index
    %c0_112 = arith.constant 0 : index
    %120 = vector.load %arg16[%c0_111, %c0_112] : memref<1x128xf32, #tpu.memory_space<vmem>>, vector<1x128xf32>
    %121 = vector.broadcast %120 : vector<1x128xf32> to vector<2x128xf32>
    %122 = arith.addf %119, %121 : vector<2x128xf32>
    %cst_113 = arith.constant 0.000000e+00 : f32
    %123 = vector.broadcast %cst_113 : f32 to vector<2x128xf32>
    %124 = arith.subf %123, %122 : vector<2x128xf32>
    %125 = math.exp %124 : vector<2x128xf32>
    %cst_114 = arith.constant 1.000000e+00 : f32
    %126 = vector.broadcast %cst_114 : f32 to vector<2x128xf32>
    %127 = arith.addf %126, %125 : vector<2x128xf32>
    %cst_115 = arith.constant 1.000000e+00 : f32
    %128 = vector.broadcast %cst_115 : f32 to vector<2x128xf32>
    %129 = arith.divf %128, %127 : vector<2x128xf32>
    %130 = arith.truncf %129 : vector<2x128xf32> to vector<2x128xbf16>
    %c0_116 = arith.constant 0 : index
    %c0_117 = arith.constant 0 : index
    %131 = vector.load %arg17[%c0_116, %c0_117] : memref<128x16xbf16, #tpu.memory_space<vmem>>, vector<128x16xbf16>
    %cst_118 = arith.constant dense<0.000000e+00> : vector<2x16xf32>
    %132 = tpu.matmul %130, %131, %cst_118 {dimension_numbers = #tpu.dot_dimension_numbers<[1], [0], [0], [1], [0, 0, 1, 1], [], []>} : vector<2x128xbf16>, vector<128x16xbf16>, vector<2x16xf32> -> vector<2x16xf32>
    %c0_119 = arith.constant 0 : index
    %c0_120 = arith.constant 0 : index
    %133 = vector.load %arg18[%c0_119, %c0_120] : memref<1x16xf32, #tpu.memory_space<vmem>>, vector<1x16xf32>
    %134 = vector.broadcast %133 : vector<1x16xf32> to vector<2x16xf32>
    %135 = arith.addf %132, %134 : vector<2x16xf32>
    %136 = arith.truncf %135 : vector<2x16xf32> to vector<2x16xbf16>
    %c0_121 = arith.constant 0 : index
    %c0_122 = arith.constant 0 : index
    %137 = vector.load %arg19[%c0_121, %c0_122] : memref<16x4xbf16, #tpu.memory_space<vmem>>, vector<16x4xbf16>
    %cst_123 = arith.constant dense<0.000000e+00> : vector<2x4xf32>
    %138 = tpu.matmul %136, %137, %cst_123 {dimension_numbers = #tpu.dot_dimension_numbers<[1], [0], [0], [1], [0, 0, 1, 1], [], []>} : vector<2x16xbf16>, vector<16x4xbf16>, vector<2x4xf32> -> vector<2x4xf32>
    %c0_124 = arith.constant 0 : index
    %c0_125 = arith.constant 0 : index
    %139 = vector.load %arg20[%c0_124, %c0_125] : memref<1x4xf32, #tpu.memory_space<vmem>>, vector<1x4xf32>
    %140 = vector.broadcast %139 : vector<1x4xf32> to vector<2x4xf32>
    %141 = arith.addf %138, %140 : vector<2x4xf32>
    %c0_126 = arith.constant 0 : index
    %c0_127 = arith.constant 0 : index
    %142 = vector.load %arg21[%c0_126, %c0_127] : memref<2x4xf32, #tpu.memory_space<vmem>>, vector<2x4xf32>
    tpu.vector_store %arg21[%c0_126, %c0_127], %141 {strides = array<i32>} : memref<2x4xf32, #tpu.memory_space<vmem>>, vector<2x4xf32>,
    return
  }
}

</mosaic_0001>

<llo_original>
// kernel: _lambda_.1
$region0: #{_lambda_.1}
  #allocation0 [shape = 'u32[]', space=smem, size = 0x4, offset = 0x4, fixed_abs, tag = 'smem constant byte address 0x4 - core index']
  #allocation1 [shape = 'u32[144,128]{1,0:T(1,128)}', space=vmem, size = 0x12000, scoped, tag = 'internal scratch']
  %s0 = inlined_call_operand.vmem [shape: f32[64,96], index: 0, kind: input, shape index: {}]
  %s1 = inlined_call_operand.vmem [shape: f32[3,30,64], index: 1, kind: input, shape index: {}]
  %s2 = inlined_call_operand.vmem [shape: bf16[3,96,240], index: 2, kind: input, shape index: {}]
  %s3 = inlined_call_operand.vmem [shape: f32[1,240], index: 3, kind: input, shape index: {}]
  %s4 = inlined_call_operand.vmem [shape: f32[1,240], index: 4, kind: input, shape index: {}]
  %s5 = inlined_call_operand.vmem [shape: f32[3,14,30], index: 5, kind: input, shape index: {}]
  %s6 = inlined_call_operand.vmem [shape: bf16[3,240,224], index: 6, kind: input, shape index: {}]
  %s7 = inlined_call_operand.vmem [shape: f32[1,224], index: 7, kind: input, shape index: {}]
  %s8 = inlined_call_operand.vmem [shape: f32[1,224], index: 8, kind: input, shape index: {}]
  %s9 = inlined_call_operand.vmem [shape: f32[3,6,14], index: 9, kind: input, shape index: {}]
  %s10 = inlined_call_operand.vmem [shape: bf16[3,224,192], index: 10, kind: input, shape index: {}]
  %s11 = inlined_call_operand.vmem [shape: f32[1,192], index: 11, kind: input, shape index: {}]
  %s12 = inlined_call_operand.vmem [shape: f32[1,192], index: 12, kind: input, shape index: {}]
  %s13 = inlined_call_operand.vmem [shape: f32[3,2,6], index: 13, kind: input, shape index: {}]
  %s14 = inlined_call_operand.vmem [shape: bf16[3,192,128], index: 14, kind: input, shape index: {}]
  %s15 = inlined_call_operand.vmem [shape: f32[1,128], index: 15, kind: input, shape index: {}]
  %s16 = inlined_call_operand.vmem [shape: f32[1,128], index: 16, kind: input, shape index: {}]
  %s17 = inlined_call_operand.vmem [shape: bf16[128,16], index: 17, kind: input, shape index: {}]
  %s18 = inlined_call_operand.vmem [shape: f32[1,16], index: 18, kind: input, shape index: {}]
  %s19 = inlined_call_operand.vmem [shape: bf16[16,4], index: 19, kind: input, shape index: {}]
  %s20 = inlined_call_operand.vmem [shape: f32[1,4], index: 20, kind: input, shape index: {}]
  %s21 = inlined_call_operand.hbm [shape: f32[2,4], index: 21, kind: output, shape index: {}]
  %s22 = sld [smem:[#allocation0]]
  $region94: #{_lambda_.1} parent=0
    _
  %s24 = ssub.s32 1, %s22
  %s25 = scalar_select 0, %s24, %s22
  $region1: #{_lambda_.1} parent=0
    #allocation2 [shape = 'u8[1024]{0}', space=vmem, size = 0x400, scoped, tag = 'output window, operand 0, single buffered']
    #allocation3 [shape = 's32[1]{0}', space=sflag, size = 0x4, scoped, tag = 'scoped memory for _lambda_.1']
    %26 = vsyncpa [#allocation3], 0
    // Predicated region
    $region2: #{_lambda_.1} parent=1 // pred_check
      _
    $region3: #{_lambda_.1} parent=1 // pred_check_branch
      %28 = sbr.rel (0) target = $region5
    $region4: #{_lambda_.1} parent=1 // pred_region
      _
    $region5: #{_lambda_.1} parent=1 // pred_fallthru
      _
    // Predicated region
    $region6: #{_lambda_.1} parent=1 // pred_check
      _
    $region7: #{_lambda_.1} parent=1 // pred_check_branch
      %30 = sbr.rel (0) target = $region9
    $region8: #{_lambda_.1} parent=1 // pred_region
      _
    $region9: #{_lambda_.1} parent=1 // pred_fallthru
      _
    // Predicated region
    $region10: #{_lambda_.1} parent=1 // pred_check
      _
    $region11: #{_lambda_.1} parent=1 // pred_check_branch
      %32 = sbr.rel (0) target = $region13
    $region12: #{_lambda_.1} parent=1 // pred_region
      _
    $region13: #{_lambda_.1} parent=1 // pred_fallthru
      _
    // Predicated region
    $region14: #{_lambda_.1} parent=1 // pred_check
      _
    $region15: #{_lambda_.1} parent=1 // pred_check_branch
      %34 = sbr.rel (0) target = $region17
    $region16: #{_lambda_.1} parent=1 // pred_region
      _
    $region17: #{_lambda_.1} parent=1 // pred_fallthru
      _
    // Predicated region
    $region18: #{_lambda_.1} parent=1 // pred_check
      _
    $region19: #{_lambda_.1} parent=1 // pred_check_branch
      %36 = sbr.rel (0) target = $region21
    $region20: #{_lambda_.1} parent=1 // pred_region
      _
    $region21: #{_lambda_.1} parent=1 // pred_fallthru
      _
    // Predicated region
    $region22: #{_lambda_.1} parent=1 // pred_check
      _
    $region23: #{_lambda_.1} parent=1 // pred_check_branch
      %38 = sbr.rel (0) target = $region25
    $region24: #{_lambda_.1} parent=1 // pred_region
      _
    $region25: #{_lambda_.1} parent=1 // pred_fallthru
      _
    // Predicated region
    $region26: #{_lambda_.1} parent=1 // pred_check
      _
    $region27: #{_lambda_.1} parent=1 // pred_check_branch
      %40 = sbr.rel (0) target = $region29
    $region28: #{_lambda_.1} parent=1 // pred_region
      _
    $region29: #{_lambda_.1} parent=1 // pred_fallthru
      _
    // Predicated region
    $region30: #{_lambda_.1} parent=1 // pred_check
      _
    $region31: #{_lambda_.1} parent=1 // pred_check_branch
      %42 = sbr.rel (0) target = $region33
    $region32: #{_lambda_.1} parent=1 // pred_region
      _
    $region33: #{_lambda_.1} parent=1 // pred_fallthru
      _
    // Predicated region
    $region34: #{_lambda_.1} parent=1 // pred_check
      _
    $region35: #{_lambda_.1} parent=1 // pred_check_branch
      %44 = sbr.rel (0) target = $region37
    $region36: #{_lambda_.1} parent=1 // pred_region
      _
    $region37: #{_lambda_.1} parent=1 // pred_fallthru
      _
    // Predicated region
    $region38: #{_lambda_.1} parent=1 // pred_check
      _
    $region39: #{_lambda_.1} parent=1 // pred_check_branch
      %46 = sbr.rel (0) target = $region41
    $region40: #{_lambda_.1} parent=1 // pred_region
      _
    $region41: #{_lambda_.1} parent=1 // pred_fallthru
      _
    // Predicated region
    $region42: #{_lambda_.1} parent=1 // pred_check
      _
    $region43: #{_lambda_.1} parent=1 // pred_check_branch
      %48 = sbr.rel (0) target = $region45
    $region44: #{_lambda_.1} parent=1 // pred_region
      _
    $region45: #{_lambda_.1} parent=1 // pred_fallthru
      _
    // Predicated region
    $region46: #{_lambda_.1} parent=1 // pred_check
      _
    $region47: #{_lambda_.1} parent=1 // pred_check_branch
      %50 = sbr.rel (0) target = $region49
    $region48: #{_lambda_.1} parent=1 // pred_region
      _
    $region49: #{_lambda_.1} parent=1 // pred_fallthru
      _
    // Predicated region
    $region50: #{_lambda_.1} parent=1 // pred_check
      _
    $region51: #{_lambda_.1} parent=1 // pred_check_branch
      %52 = sbr.rel (0) target = $region53
    $region52: #{_lambda_.1} parent=1 // pred_region
      _
    $region53: #{_lambda_.1} parent=1 // pred_fallthru
      _
    // Predicated region
    $region54: #{_lambda_.1} parent=1 // pred_check
      _
    $region55: #{_lambda_.1} parent=1 // pred_check_branch
      %54 = sbr.rel (0) target = $region57
    $region56: #{_lambda_.1} parent=1 // pred_region
      _
    $region57: #{_lambda_.1} parent=1 // pred_fallthru
      _
    // Predicated region
    $region58: #{_lambda_.1} parent=1 // pred_check
      _
    $region59: #{_lambda_.1} parent=1 // pred_check_branch
      %56 = sbr.rel (0) target = $region61
    $region60: #{_lambda_.1} parent=1 // pred_region
      _
    $region61: #{_lambda_.1} parent=1 // pred_fallthru
      _
    // Predicated region
    $region62: #{_lambda_.1} parent=1 // pred_check
      _
    $region63: #{_lambda_.1} parent=1 // pred_check_branch
      %58 = sbr.rel (0) target = $region65
    $region64: #{_lambda_.1} parent=1 // pred_region
      _
    $region65: #{_lambda_.1} parent=1 // pred_fallthru
      _
    // Predicated region
    $region66: #{_lambda_.1} parent=1 // pred_check
      _
    $region67: #{_lambda_.1} parent=1 // pred_check_branch
      %60 = sbr.rel (0) target = $region69
    $region68: #{_lambda_.1} parent=1 // pred_region
      _
    $region69: #{_lambda_.1} parent=1 // pred_fallthru
      _
    // Predicated region
    $region70: #{_lambda_.1} parent=1 // pred_check
      _
    $region71: #{_lambda_.1} parent=1 // pred_check_branch
      %62 = sbr.rel (0) target = $region73
    $region72: #{_lambda_.1} parent=1 // pred_region
      _
    $region73: #{_lambda_.1} parent=1 // pred_fallthru
      _
    // Predicated region
    $region74: #{_lambda_.1} parent=1 // pred_check
      _
    $region75: #{_lambda_.1} parent=1 // pred_check_branch
      %64 = sbr.rel (0) target = $region77
    $region76: #{_lambda_.1} parent=1 // pred_region
      _
    $region77: #{_lambda_.1} parent=1 // pred_fallthru
      _
    // Predicated region
    $region78: #{_lambda_.1} parent=1 // pred_check
      _
    $region79: #{_lambda_.1} parent=1 // pred_check_branch
      %66 = sbr.rel (0) target = $region81
    $region80: #{_lambda_.1} parent=1 // pred_region
      _
    $region81: #{_lambda_.1} parent=1 // pred_fallthru
      _
    // Predicated region
    $region82: #{_lambda_.1} parent=1 // pred_check
      _
    $region83: #{_lambda_.1} parent=1 // pred_check_branch
      %68 = sbr.rel (0) target = $region85
    $region84: #{_lambda_.1} parent=1 // pred_region
      _
    $region85: #{_lambda_.1} parent=1 // pred_fallthru
      _
    %v70 = vld [vmem:[%s0] sm:$0xff]
    %v71 = vld [vmem:[%s0 + $0x8] sm:$0xff]
    %v72 = vld [vmem:[%s0 + $0x10] sm:$0xff]
    %v73 = vld [vmem:[%s0 + $0x18] sm:$0xff]
    %v74 = vld [vmem:[%s0 + $0x20] sm:$0xff]
    %v75 = vld [vmem:[%s0 + $0x28] sm:$0xff]
    %v76 = vld [vmem:[%s0 + $0x30] sm:$0xff]
    %v77 = vld [vmem:[%s0 + $0x38] sm:$0xff]
    %v78 = vld [vmem:[%s1] sm:$0xff]
    %v79 = vld [vmem:[%s1 + $0x8] sm:$0xff]
    %v80 = vld [vmem:[%s1 + $0x10] sm:$0xff]
    %v81 = vld [vmem:[%s1 + $0x18] sm:$0x3f]
    %vm82 = vcmask 523264
    %v84 = vsel %vm82, %v78, 0
    %v87 = vsel %vm82, %v79, 0
    %v90 = vsel %vm82, %v80, 0
    %v93 = vsel %vm82, %v81, 0
    %95 = vmatprep.subr.mxu0 0.0
    %96 = vmatpush1.msra.mxu0 %v70
    %97 = vmatprep.subr.mxu0 0.0
    %98 = vmatpush1.msra.mxu0 %v71
    %99 = vmatprep.subr.mxu0 0.0
    %100 = vmatpush1.msra.mxu0 %v72
    %101 = vmatprep.subr.mxu0 0.0
    %102 = vmatpush1.msra.mxu0 %v73
    %103 = vmatprep.subr.mxu0 0.0
    %104 = vmatpush1.msra.mxu0 %v74
    %105 = vmatprep.subr.mxu0 0.0
    %106 = vmatpush1.msra.mxu0 %v75
    %107 = vmatprep.subr.mxu0 0.0
    %108 = vmatpush1.msra.mxu0 %v76
    %109 = vmatprep.subr.mxu0 0.0
    %110 = vmatpush1.msra.mxu0 %v77
    %111 = vmatprep.subr.mxu0 0.0
    %112 = vmatpush1.msra.mxu0 0.0
    %113 = vmatprep.subr.mxu0 0.0
    %114 = vmatpush1.msra.mxu0 0.0
    %115 = vmatprep.subr.mxu0 0.0
    %116 = vmatpush1.msra.mxu0 0.0
    %117 = vmatprep.subr.mxu0 0.0
    %118 = vmatpush1.msra.mxu0 0.0
    %119 = vmatprep.subr.mxu0 0.0
    %120 = vmatpush1.msra.mxu0 0.0
    %121 = vmatprep.subr.mxu0 0.0
    %122 = vmatpush1.msra.mxu0 0.0
    %123 = vmatprep.subr.mxu0 0.0
    %124 = vmatpush1.msra.mxu0 0.0
    %125 = vmatprep.subr.mxu0 0.0
    %126 = vmatpush1.msra.mxu0 0.0
    %127 = vmatprep.subr.mxu0 0.0
    %128 = vmatpush1.msra.mxu0 0.0
    %129 = vmatprep.subr.mxu0 0.0
    %130 = vmatpush1.msra.mxu0 0.0
    %131 = vmatprep.subr.mxu0 0.0
    %132 = vmatpush1.msra.mxu0 0.0
    %133 = vmatprep.subr.mxu0 0.0
    %134 = vmatpush1.msra.mxu0 0.0
    %135 = vmatprep.subr.mxu0 0.0
    %136 = vmatpush1.msra.mxu0 0.0
    %137 = vmatprep.subr.mxu0 0.0
    %138 = vmatpush1.msra.mxu0 0.0
    %139 = vmatprep.subr.mxu0 0.0
    %140 = vmatpush1.msra.mxu0 0.0
    %141 = vmatprep.subr.mxu0 0.0
    %142 = vmatpush1.msra.mxu0 0.0
    %143 = vmatprep.subr.mxu0 0.0
    %144 = vmatpush1.msra.mxu0 0.0
    %145 = vmatprep.subr.mxu0 0.0
    %146 = vmatpush1.msra.mxu0 0.0
    %147 = vmatprep.subr.mxu0 0.0
    %148 = vmatpush1.msra.mxu0 0.0
    %149 = vmatprep.subr.mxu0 0.0
    %150 = vmatpush1.msra.mxu0 0.0
    %151 = vmatprep.subr.mxu0 0.0
    %152 = vmatpush1.msra.mxu0 0.0
    %153 = vmatprep.subr.mxu0 0.0
    %154 = vmatpush1.msra.mxu0 0.0
    %155 = vmatprep.subr.mxu0 0.0
    %156 = vmatpush1.msra.mxu0 0.0
    %157 = vmatprep.subr.mxu0 0.0
    %158 = vmatpush1.msra.mxu0 0.0
    %159 = vmatprep.mubr.f32.mxu0 0.0
    %160 = vmatmul.mubr.f32.gmra.mrb[0].mxu0 %v84
    %v161 = vpop.f32.mrb[0].mxu0
    %v162 = vadd.f32 0.0, %v161
    %v163 = vpop.f32.mrb[0].mxu0
    %164 = vmatprep.mubr.f32.mxu0 0.0
    %165 = vmatmul.mubr.f32.gmra.mrb[0].mxu0 %v87
    %v166 = vpop.f32.mrb[0].mxu0
    %v167 = vadd.f32 0.0, %v166
    %v168 = vpop.f32.mrb[0].mxu0
    %169 = vmatprep.mubr.f32.mxu0 0.0
    %170 = vmatmul.mubr.f32.gmra.mrb[0].mxu0 %v90
    %v171 = vpop.f32.mrb[0].mxu0
    %v172 = vadd.f32 0.0, %v171
    %v173 = vpop.f32.mrb[0].mxu0
    %174 = vmatprep.mubr.f32.mxu0 0.0
    %175 = vmatmul.mubr.f32.gmra.mrb[0].mxu0 %v93
    %v176 = vpop.f32.mrb[0].mxu0
    %v177 = vadd.f32 0.0, %v176
    %v178 = vpop.f32.mrb[0].mxu0
    %179 = vdwg.mxu0
    %v180 = vpack.c.bf16 %v167, %v162
    %v181 = vpack.c.bf16 %v177, %v172
    %v182 = vld [vmem:[%s2] sm:$0xff]
    %v183 = vld [vmem:[%s2 + $0x8] sm:$0xff]
    %v184 = vld [vmem:[%s2 + $0x10] sm:$0xff]
    %v185 = vld [vmem:[%s2 + $0x18] sm:$0xff]
    %v186 = vld [vmem:[%s2 + $0x20] sm:$0xff]
    %v187 = vld [vmem:[%s2 + $0x28] sm:$0xff]
    %v188 = vld [vmem:[%s2 + $0x30] sm:$0xff]
    %v189 = vld [vmem:[%s2 + $0x38] sm:$0xff]
    %v190 = vld [vmem:[%s2 + $0x40] sm:$0xff]
    %v191 = vld [vmem:[%s2 + $0x48] sm:$0xff]
    %v192 = vld [vmem:[%s2 + $0x50] sm:$0xff]
    %v193 = vld [vmem:[%s2 + $0x58] sm:$0xff]
    %s194 = scalar_lea.vmem %s1, 32
    %v195 = vld [vmem:[%s194] sm:$0xff]
    %v196 = vld [vmem:[%s194 + $0x8] sm:$0xff]
    %v197 = vld [vmem:[%s194 + $0x10] sm:$0xff]
    %v198 = vld [vmem:[%s194 + $0x18] sm:$0x3f]
    %v200 = vsel %vm82, %v195, 0
    %v203 = vsel %vm82, %v196, 0
    %v206 = vsel %vm82, %v197, 0
    %v209 = vsel %vm82, %v198, 0
    %211 = vmatprep.subr.mxu0 0.0
    %212 = vmatpush1.msra.mxu0 %v70
    %213 = vmatprep.subr.mxu0 0.0
    %214 = vmatpush1.msra.mxu0 %v71
    %215 = vmatprep.subr.mxu0 0.0
    %216 = vmatpush1.msra.mxu0 %v72
    %217 = vmatprep.subr.mxu0 0.0
    %218 = vmatpush1.msra.mxu0 %v73
    %219 = vmatprep.subr.mxu0 0.0
    %220 = vmatpush1.msra.mxu0 %v74
    %221 = vmatprep.subr.mxu0 0.0
    %222 = vmatpush1.msra.mxu0 %v75
    %223 = vmatprep.subr.mxu0 0.0
    %224 = vmatpush1.msra.mxu0 %v76
    %225 = vmatprep.subr.mxu0 0.0
    %226 = vmatpush1.msra.mxu0 %v77
    %227 = vmatprep.subr.mxu0 0.0
    %228 = vmatpush1.msra.mxu0 0.0
    %229 = vmatprep.subr.mxu0 0.0
    %230 = vmatpush1.msra.mxu0 0.0
    %231 = vmatprep.subr.mxu0 0.0
    %232 = vmatpush1.msra.mxu0 0.0
    %233 = vmatprep.subr.mxu0 0.0
    %234 = vmatpush1.msra.mxu0 0.0
    %235 = vmatprep.subr.mxu0 0.0
    %236 = vmatpush1.msra.mxu0 0.0
    %237 = vmatprep.subr.mxu0 0.0
    %238 = vmatpush1.msra.mxu0 0.0
    %239 = vmatprep.subr.mxu0 0.0
    %240 = vmatpush1.msra.mxu0 0.0
    %241 = vmatprep.subr.mxu0 0.0
    %242 = vmatpush1.msra.mxu0 0.0
    %243 = vmatprep.subr.mxu0 0.0
    %244 = vmatpush1.msra.mxu0 0.0
    %245 = vmatprep.subr.mxu0 0.0
    %246 = vmatpush1.msra.mxu0 0.0
    %247 = vmatprep.subr.mxu0 0.0
    %248 = vmatpush1.msra.mxu0 0.0
    %249 = vmatprep.subr.mxu0 0.0
    %250 = vmatpush1.msra.mxu0 0.0
    %251 = vmatprep.subr.mxu0 0.0
    %252 = vmatpush1.msra.mxu0 0.0
    %253 = vmatprep.subr.mxu0 0.0
    %254 = vmatpush1.msra.mxu0 0.0
    %255 = vmatprep.subr.mxu0 0.0
    %256 = vmatpush1.msra.mxu0 0.0
    %257 = vmatprep.subr.mxu0 0.0
    %258 = vmatpush1.msra.mxu0 0.0
    %259 = vmatprep.subr.mxu0 0.0
    %260 = vmatpush1.msra.mxu0 0.0
    %261 = vmatprep.subr.mxu0 0.0
    %262 = vmatpush1.msra.mxu0 0.0
    %263 = vmatprep.subr.mxu0 0.0
    %264 = vmatpush1.msra.mxu0 0.0
    %265 = vmatprep.subr.mxu0 0.0
    %266 = vmatpush1.msra.mxu0 0.0
    %267 = vmatprep.subr.mxu0 0.0
    %268 = vmatpush1.msra.mxu0 0.0
    %269 = vmatprep.subr.mxu0 0.0
    %270 = vmatpush1.msra.mxu0 0.0
    %271 = vmatprep.subr.mxu0 0.0
    %272 = vmatpush1.msra.mxu0 0.0
    %273 = vmatprep.subr.mxu0 0.0
    %274 = vmatpush1.msra.mxu0 0.0
    %275 = vmatprep.mubr.f32.mxu0 0.0
    %276 = vmatmul.mubr.f32.gmra.mrb[0].mxu0 %v200
    %v277 = vpop.f32.mrb[0].mxu0
    %v278 = vadd.f32 0.0, %v277
    %v279 = vpop.f32.mrb[0].mxu0
    %280 = vmatprep.mubr.f32.mxu0 0.0
    %281 = vmatmul.mubr.f32.gmra.mrb[0].mxu0 %v203
    %v282 = vpop.f32.mrb[0].mxu0
    %v283 = vadd.f32 0.0, %v282
    %v284 = vpop.f32.mrb[0].mxu0
    %285 = vmatprep.mubr.f32.mxu0 0.0
    %286 = vmatmul.mubr.f32.gmra.mrb[0].mxu0 %v206
    %v287 = vpop.f32.mrb[0].mxu0
    %v288 = vadd.f32 0.0, %v287
    %v289 = vpop.f32.mrb[0].mxu0
    %290 = vmatprep.mubr.f32.mxu0 0.0
    %291 = vmatmul.mubr.f32.gmra.mrb[0].mxu0 %v209
    %v292 = vpop.f32.mrb[0].mxu0
    %v293 = vadd.f32 0.0, %v292
    %v294 = vpop.f32.mrb[0].mxu0
    %295 = vdwg.mxu0
    %v296 = vpack.c.bf16 %v283, %v278
    %v297 = vpack.c.bf16 %v293, %v288
    %s298 = scalar_lea.vmem %s2, 96
    %v299 = vld [vmem:[%s298] sm:$0xff]
    %v300 = vld [vmem:[%s298 + $0x8] sm:$0xff]
    %v301 = vld [vmem:[%s298 + $0x10] sm:$0xff]
    %v302 = vld [vmem:[%s298 + $0x18] sm:$0xff]
    %v303 = vld [vmem:[%s298 + $0x20] sm:$0xff]
    %v304 = vld [vmem:[%s298 + $0x28] sm:$0xff]
    %v305 = vld [vmem:[%s298 + $0x30] sm:$0xff]
    %v306 = vld [vmem:[%s298 + $0x38] sm:$0xff]
    %v307 = vld [vmem:[%s298 + $0x40] sm:$0xff]
    %v308 = vld [vmem:[%s298 + $0x48] sm:$0xff]
    %v309 = vld [vmem:[%s298 + $0x50] sm:$0xff]
    %v310 = vld [vmem:[%s298 + $0x58] sm:$0xff]
    %v323 = vunpack.c.l.b16 %v299
    %v324 = vunpack.c.h.b16 %v299
    %v325 = vunpack.c.l.b16 %v300
    %v326 = vunpack.c.h.b16 %v300
    %v327 = vunpack.c.l.b16 %v301
    %v328 = vunpack.c.h.b16 %v301
    %v329 = vunpack.c.l.b16 %v302
    %v330 = vunpack.c.h.b16 %v302
    %v331 = vunpack.c.l.b16 %v303
    %v332 = vunpack.c.h.b16 %v303
    %v333 = vunpack.c.l.b16 %v304
    %v334 = vunpack.c.h.b16 %v304
    %v335 = vunpack.c.l.b16 %v305
    %v336 = vunpack.c.h.b16 %v305
    %v337 = vunpack.c.l.b16 %v306
    %v338 = vunpack.c.h.b16 %v306
    %v339 = vunpack.c.l.b16 %v307
    %v340 = vunpack.c.h.b16 %v307
    %v341 = vunpack.c.l.b16 %v308
    %v342 = vunpack.c.h.b16 %v308
    %v343 = vunpack.c.l.b16 %v309
    %v344 = vunpack.c.h.b16 %v309
    %v345 = vunpack.c.l.b16 %v310
    %v346 = vunpack.c.h.b16 %v310
    %v347 = vpack.c.b16 %v325, %v323
    %v348 = vpack.c.b16 %v326, %v324
    %v349 = vpack.c.b16 %v329, %v327
    %v350 = vpack.c.b16 %v330, %v328
    %v351 = vpack.c.b16 %v333, %v331
    %v352 = vpack.c.b16 %v334, %v332
    %v353 = vpack.c.b16 %v337, %v335
    %v354 = vpack.c.b16 %v338, %v336
    %v355 = vpack.c.b16 %v341, %v339
    %v356 = vpack.c.b16 %v342, %v340
    %v357 = vpack.c.b16 %v345, %v343
    %v358 = vpack.c.b16 %v346, %v344
    %vm371 = vcmask 785408
    %v373 = vsel %vm371, %v296, 0
    %v376 = vsel %vm371, %v297, 0
    %378 = vmatprep.subr.bf16.mxu0 %v348
    %379 = vmatpush1.bf16.msra.mxu0 %v347
    %380 = vmatprep.subr.bf16.mxu0 %v350
    %381 = vmatpush1.bf16.msra.mxu0 %v349
    %382 = vmatprep.subr.bf16.mxu0 %v352
    %383 = vmatpush1.bf16.msra.mxu0 %v351
    %384 = vmatprep.subr.bf16.mxu0 %v354
    %385 = vmatpush1.bf16.msra.mxu0 %v353
    %386 = vmatprep.subr.bf16.mxu0 %v356
    %387 = vmatpush1.bf16.msra.mxu0 %v355
    %388 = vmatprep.subr.bf16.mxu0 %v358
    %389 = vmatpush1.bf16.msra.mxu0 %v357
    %390 = vmatprep.subr.bf16.mxu0 0
    %391 = vmatpush1.bf16.msra.mxu0 0
    %392 = vmatprep.subr.bf16.mxu0 0
    %393 = vmatpush1.bf16.msra.mxu0 0
    %394 = vmatprep.subr.bf16.mxu0 0
    %395 = vmatpush1.bf16.msra.mxu0 0
    %396 = vmatprep.subr.bf16.mxu0 0
    %397 = vmatpush1.bf16.msra.mxu0 0
    %398 = vmatprep.subr.bf16.mxu0 0
    %399 = vmatpush1.bf16.msra.mxu0 0
    %400 = vmatprep.subr.bf16.mxu0 0
    %401 = vmatpush1.bf16.msra.mxu0 0
    %402 = vmatprep.subr.bf16.mxu0 0
    %403 = vmatpush1.bf16.msra.mxu0 0
    %404 = vmatprep.subr.bf16.mxu0 0
    %405 = vmatpush1.bf16.msra.mxu0 0
    %406 = vmatprep.subr.bf16.mxu0 0
    %407 = vmatpush1.bf16.msra.mxu0 0
    %408 = vmatprep.subr.bf16.mxu0 0
    %409 = vmatpush1.bf16.msra.mxu0 0
    %410 = vmatprep.mubr.bf16.mxu0 0
    %411 = vmatmul.mubr.bf16.gmra.mrb[0].mxu0 %v373
    %v412 = vpop.f32.mrb[0].mxu0
    %v413 = vadd.f32 0.0, %v412
    %v414 = vpop.f32.mrb[0].mxu0
    %v415 = vadd.f32 0.0, %v414
    %v416 = vpop.f32.mrb[0].mxu0
    %v417 = vadd.f32 0.0, %v416
    %v418 = vpop.f32.mrb[0].mxu0
    %v419 = vadd.f32 0.0, %v418
    %420 = vmatprep.mubr.bf16.mxu0 0
    %421 = vmatmul.mubr.bf16.gmra.mrb[0].mxu0 %v376
    %v422 = vpop.f32.mrb[0].mxu0
    %v423 = vadd.f32 0.0, %v422
    %v424 = vpop.f32.mrb[0].mxu0
    %v425 = vadd.f32 0.0, %v424
    %v426 = vpop.f32.mrb[0].mxu0
    %v427 = vadd.f32 0.0, %v426
    %v428 = vpop.f32.mrb[0].mxu0
    %v429 = vadd.f32 0.0, %v428
    %430 = vdwg.mxu0
    %v443 = vunpack.c.l.b16 %v182
    %v444 = vunpack.c.h.b16 %v182
    %v445 = vunpack.c.l.b16 %v183
    %v446 = vunpack.c.h.b16 %v183
    %v447 = vunpack.c.l.b16 %v184
    %v448 = vunpack.c.h.b16 %v184
    %v449 = vunpack.c.l.b16 %v185
    %v450 = vunpack.c.h.b16 %v185
    %v451 = vunpack.c.l.b16 %v186
    %v452 = vunpack.c.h.b16 %v186
    %v453 = vunpack.c.l.b16 %v187
    %v454 = vunpack.c.h.b16 %v187
    %v455 = vunpack.c.l.b16 %v188
    %v456 = vunpack.c.h.b16 %v188
    %v457 = vunpack.c.l.b16 %v189
    %v458 = vunpack.c.h.b16 %v189
    %v459 = vunpack.c.l.b16 %v190
    %v460 = vunpack.c.h.b16 %v190
    %v461 = vunpack.c.l.b16 %v191
    %v462 = vunpack.c.h.b16 %v191
    %v463 = vunpack.c.l.b16 %v192
    %v464 = vunpack.c.h.b16 %v192
    %v465 = vunpack.c.l.b16 %v193
    %v466 = vunpack.c.h.b16 %v193
    %v467 = vpack.c.b16 %v445, %v443
    %v468 = vpack.c.b16 %v446, %v444
    %v469 = vpack.c.b16 %v449, %v447
    %v470 = vpack.c.b16 %v450, %v448
    %v471 = vpack.c.b16 %v453, %v451
    %v472 = vpack.c.b16 %v454, %v452
    %v473 = vpack.c.b16 %v457, %v455
    %v474 = vpack.c.b16 %v458, %v456
    %v475 = vpack.c.b16 %v461, %v459
    %v476 = vpack.c.b16 %v462, %v460
    %v477 = vpack.c.b16 %v465, %v463
    %v478 = vpack.c.b16 %v466, %v464
    %v492 = vsel %vm371, %v180, 0
    %v495 = vsel %vm371, %v181, 0
    %497 = vmatprep.subr.bf16.mxu0 %v468
    %498 = vmatpush1.bf16.msra.mxu0 %v467
    %499 = vmatprep.subr.bf16.mxu0 %v470
    %500 = vmatpush1.bf16.msra.mxu0 %v469
    %501 = vmatprep.subr.bf16.mxu0 %v472
    %502 = vmatpush1.bf16.msra.mxu0 %v471
    %503 = vmatprep.subr.bf16.mxu0 %v474
    %504 = vmatpush1.bf16.msra.mxu0 %v473
    %505 = vmatprep.subr.bf16.mxu0 %v476
    %506 = vmatpush1.bf16.msra.mxu0 %v475
    %507 = vmatprep.subr.bf16.mxu0 %v478
    %508 = vmatpush1.bf16.msra.mxu0 %v477
    %509 = vmatprep.subr.bf16.mxu0 0
    %510 = vmatpush1.bf16.msra.mxu0 0
    %511 = vmatprep.subr.bf16.mxu0 0
    %512 = vmatpush1.bf16.msra.mxu0 0
    %513 = vmatprep.subr.bf16.mxu0 0
    %514 = vmatpush1.bf16.msra.mxu0 0
    %515 = vmatprep.subr.bf16.mxu0 0
    %516 = vmatpush1.bf16.msra.mxu0 0
    %517 = vmatprep.subr.bf16.mxu0 0
    %518 = vmatpush1.bf16.msra.mxu0 0
    %519 = vmatprep.subr.bf16.mxu0 0
    %520 = vmatpush1.bf16.msra.mxu0 0
    %521 = vmatprep.subr.bf16.mxu0 0
    %522 = vmatpush1.bf16.msra.mxu0 0
    %523 = vmatprep.subr.bf16.mxu0 0
    %524 = vmatpush1.bf16.msra.mxu0 0
    %525 = vmatprep.subr.bf16.mxu0 0
    %526 = vmatpush1.bf16.msra.mxu0 0
    %527 = vmatprep.subr.bf16.mxu0 0
    %528 = vmatpush1.bf16.msra.mxu0 0
    %529 = vmatprep.mubr.bf16.mxu0 0
    %530 = vmatmul.mubr.bf16.gmra.mrb[0].mxu0 %v492
    %v531 = vpop.f32.mrb[0].mxu0
    %v532 = vadd.f32 %v413, %v531
    %v533 = vpop.f32.mrb[0].mxu0
    %v534 = vadd.f32 %v415, %v533
    %v535 = vpop.f32.mrb[0].mxu0
    %v536 = vadd.f32 %v417, %v535
    %v537 = vpop.f32.mrb[0].mxu0
    %v538 = vadd.f32 %v419, %v537
    %539 = vmatprep.mubr.bf16.mxu0 0
    %540 = vmatmul.mubr.bf16.gmra.mrb[0].mxu0 %v495
    %v541 = vpop.f32.mrb[0].mxu0
    %v542 = vadd.f32 %v423, %v541
    %v543 = vpop.f32.mrb[0].mxu0
    %v544 = vadd.f32 %v425, %v543
    %v545 = vpop.f32.mrb[0].mxu0
    %v546 = vadd.f32 %v427, %v545
    %v547 = vpop.f32.mrb[0].mxu0
    %v548 = vadd.f32 %v429, %v547
    %549 = vdwg.mxu0
    %s550 = scalar_lea.vmem %s1, 64
    %v551 = vld [vmem:[%s550] sm:$0xff]
    %v552 = vld [vmem:[%s550 + $0x8] sm:$0xff]
    %v553 = vld [vmem:[%s550 + $0x10] sm:$0xff]
    %v554 = vld [vmem:[%s550 + $0x18] sm:$0x3f]
    %v556 = vsel %vm82, %v551, 0
    %v559 = vsel %vm82, %v552, 0
    %v562 = vsel %vm82, %v553, 0
    %v565 = vsel %vm82, %v554, 0
    %567 = vmatprep.subr.mxu0 0.0
    %568 = vmatpush1.msra.mxu0 %v70
    %569 = vmatprep.subr.mxu0 0.0
    %570 = vmatpush1.msra.mxu0 %v71
    %571 = vmatprep.subr.mxu0 0.0
    %572 = vmatpush1.msra.mxu0 %v72
    %573 = vmatprep.subr.mxu0 0.0
    %574 = vmatpush1.msra.mxu0 %v73
    %575 = vmatprep.subr.mxu0 0.0
    %576 = vmatpush1.msra.mxu0 %v74
    %577 = vmatprep.subr.mxu0 0.0
    %578 = vmatpush1.msra.mxu0 %v75
    %579 = vmatprep.subr.mxu0 0.0
    %580 = vmatpush1.msra.mxu0 %v76
    %581 = vmatprep.subr.mxu0 0.0
    %582 = vmatpush1.msra.mxu0 %v77
    %583 = vmatprep.subr.mxu0 0.0
    %584 = vmatpush1.msra.mxu0 0.0
    %585 = vmatprep.subr.mxu0 0.0
    %586 = vmatpush1.msra.mxu0 0.0
    %587 = vmatprep.subr.mxu0 0.0
    %588 = vmatpush1.msra.mxu0 0.0
    %589 = vmatprep.subr.mxu0 0.0
    %590 = vmatpush1.msra.mxu0 0.0
    %591 = vmatprep.subr.mxu0 0.0
    %592 = vmatpush1.msra.mxu0 0.0
    %593 = vmatprep.subr.mxu0 0.0
    %594 = vmatpush1.msra.mxu0 0.0
    %595 = vmatprep.subr.mxu0 0.0
    %596 = vmatpush1.msra.mxu0 0.0
    %597 = vmatprep.subr.mxu0 0.0
    %598 = vmatpush1.msra.mxu0 0.0
    %599 = vmatprep.subr.mxu0 0.0
    %600 = vmatpush1.msra.mxu0 0.0
    %601 = vmatprep.subr.mxu0 0.0
    %602 = vmatpush1.msra.mxu0 0.0
    %603 = vmatprep.subr.mxu0 0.0
    %604 = vmatpush1.msra.mxu0 0.0
    %605 = vmatprep.subr.mxu0 0.0
    %606 = vmatpush1.msra.mxu0 0.0
    %607 = vmatprep.subr.mxu0 0.0
    %608 = vmatpush1.msra.mxu0 0.0
    %609 = vmatprep.subr.mxu0 0.0
    %610 = vmatpush1.msra.mxu0 0.0
    %611 = vmatprep.subr.mxu0 0.0
    %612 = vmatpush1.msra.mxu0 0.0
    %613 = vmatprep.subr.mxu0 0.0
    %614 = vmatpush1.msra.mxu0 0.0
    %615 = vmatprep.subr.mxu0 0.0
    %616 = vmatpush1.msra.mxu0 0.0
    %617 = vmatprep.subr.mxu0 0.0
    %618 = vmatpush1.msra.mxu0 0.0
    %619 = vmatprep.subr.mxu0 0.0
    %620 = vmatpush1.msra.mxu0 0.0
    %621 = vmatprep.subr.mxu0 0.0
    %622 = vmatpush1.msra.mxu0 0.0
    %623 = vmatprep.subr.mxu0 0.0
    %624 = vmatpush1.msra.mxu0 0.0
    %625 = vmatprep.subr.mxu0 0.0
    %626 = vmatpush1.msra.mxu0 0.0
    %627 = vmatprep.subr.mxu0 0.0
    %628 = vmatpush1.msra.mxu0 0.0
    %629 = vmatprep.subr.mxu0 0.0
    %630 = vmatpush1.msra.mxu0 0.0
    %631 = vmatprep.mubr.f32.mxu0 0.0
    %632 = vmatmul.mubr.f32.gmra.mrb[0].mxu0 %v556
    %v633 = vpop.f32.mrb[0].mxu0
    %v634 = vadd.f32 0.0, %v633
    %v635 = vpop.f32.mrb[0].mxu0
    %636 = vmatprep.mubr.f32.mxu0 0.0
    %637 = vmatmul.mubr.f32.gmra.mrb[0].mxu0 %v559
    %v638 = vpop.f32.mrb[0].mxu0
    %v639 = vadd.f32 0.0, %v638
    %v640 = vpop.f32.mrb[0].mxu0
    %641 = vmatprep.mubr.f32.mxu0 0.0
    %642 = vmatmul.mubr.f32.gmra.mrb[0].mxu0 %v562
    %v643 = vpop.f32.mrb[0].mxu0
    %v644 = vadd.f32 0.0, %v643
    %v645 = vpop.f32.mrb[0].mxu0
    %646 = vmatprep.mubr.f32.mxu0 0.0
    %647 = vmatmul.mubr.f32.gmra.mrb[0].mxu0 %v565
    %v648 = vpop.f32.mrb[0].mxu0
    %v649 = vadd.f32 0.0, %v648
    %v650 = vpop.f32.mrb[0].mxu0
    %651 = vdwg.mxu0
    %v652 = vpack.c.bf16 %v639, %v634
    %v653 = vpack.c.bf16 %v649, %v644
    %s654 = scalar_lea.vmem %s2, 192
    %v655 = vld [vmem:[%s654] sm:$0xff]
    %v656 = vld [vmem:[%s654 + $0x8] sm:$0xff]
    %v657 = vld [vmem:[%s654 + $0x10] sm:$0xff]
    %v658 = vld [vmem:[%s654 + $0x18] sm:$0xff]
    %v659 = vld [vmem:[%s654 + $0x20] sm:$0xff]
    %v660 = vld [vmem:[%s654 + $0x28] sm:$0xff]
    %v661 = vld [vmem:[%s654 + $0x30] sm:$0xff]
    %v662 = vld [vmem:[%s654 + $0x38] sm:$0xff]
    %v663 = vld [vmem:[%s654 + $0x40] sm:$0xff]
    %v664 = vld [vmem:[%s654 + $0x48] sm:$0xff]
    %v665 = vld [vmem:[%s654 + $0x50] sm:$0xff]
    %v666 = vld [vmem:[%s654 + $0x58] sm:$0xff]
    %v679 = vunpack.c.l.b16 %v655
    %v680 = vunpack.c.h.b16 %v655
    %v681 = vunpack.c.l.b16 %v656
    %v682 = vunpack.c.h.b16 %v656
    %v683 = vunpack.c.l.b16 %v657
    %v684 = vunpack.c.h.b16 %v657
    %v685 = vunpack.c.l.b16 %v658
    %v686 = vunpack.c.h.b16 %v658
    %v687 = vunpack.c.l.b16 %v659
    %v688 = vunpack.c.h.b16 %v659
    %v689 = vunpack.c.l.b16 %v660
    %v690 = vunpack.c.h.b16 %v660
    %v691 = vunpack.c.l.b16 %v661
    %v692 = vunpack.c.h.b16 %v661
    %v693 = vunpack.c.l.b16 %v662
    %v694 = vunpack.c.h.b16 %v662
    %v695 = vunpack.c.l.b16 %v663
    %v696 = vunpack.c.h.b16 %v663
    %v697 = vunpack.c.l.b16 %v664
    %v698 = vunpack.c.h.b16 %v664
    %v699 = vunpack.c.l.b16 %v665
    %v700 = vunpack.c.h.b16 %v665
    %v701 = vunpack.c.l.b16 %v666
    %v702 = vunpack.c.h.b16 %v666
    %v703 = vpack.c.b16 %v681, %v679
    %v704 = vpack.c.b16 %v682, %v680
    %v705 = vpack.c.b16 %v685, %v683
    %v706 = vpack.c.b16 %v686, %v684
    %v707 = vpack.c.b16 %v689, %v687
    %v708 = vpack.c.b16 %v690, %v688
    %v709 = vpack.c.b16 %v693, %v691
    %v710 = vpack.c.b16 %v694, %v692
    %v711 = vpack.c.b16 %v697, %v695
    %v712 = vpack.c.b16 %v698, %v696
    %v713 = vpack.c.b16 %v701, %v699
    %v714 = vpack.c.b16 %v702, %v700
    %v728 = vsel %vm371, %v652, 0
    %v731 = vsel %vm371, %v653, 0
    %733 = vmatprep.subr.bf16.mxu0 %v704
    %734 = vmatpush1.bf16.msra.mxu0 %v703
    %735 = vmatprep.subr.bf16.mxu0 %v706
    %736 = vmatpush1.bf16.msra.mxu0 %v705
    %737 = vmatprep.subr.bf16.mxu0 %v708
    %738 = vmatpush1.bf16.msra.mxu0 %v707
    %739 = vmatprep.subr.bf16.mxu0 %v710
    %740 = vmatpush1.bf16.msra.mxu0 %v709
    %741 = vmatprep.subr.bf16.mxu0 %v712
    %742 = vmatpush1.bf16.msra.mxu0 %v711
    %743 = vmatprep.subr.bf16.mxu0 %v714
    %744 = vmatpush1.bf16.msra.mxu0 %v713
    %745 = vmatprep.subr.bf16.mxu0 0
    %746 = vmatpush1.bf16.msra.mxu0 0
    %747 = vmatprep.subr.bf16.mxu0 0
    %748 = vmatpush1.bf16.msra.mxu0 0
    %749 = vmatprep.subr.bf16.mxu0 0
    %750 = vmatpush1.bf16.msra.mxu0 0
    %751 = vmatprep.subr.bf16.mxu0 0
    %752 = vmatpush1.bf16.msra.mxu0 0
    %753 = vmatprep.subr.bf16.mxu0 0
    %754 = vmatpush1.bf16.msra.mxu0 0
    %755 = vmatprep.subr.bf16.mxu0 0
    %756 = vmatpush1.bf16.msra.mxu0 0
    %757 = vmatprep.subr.bf16.mxu0 0
    %758 = vmatpush1.bf16.msra.mxu0 0
    %759 = vmatprep.subr.bf16.mxu0 0
    %760 = vmatpush1.bf16.msra.mxu0 0
    %761 = vmatprep.subr.bf16.mxu0 0
    %762 = vmatpush1.bf16.msra.mxu0 0
    %763 = vmatprep.subr.bf16.mxu0 0
    %764 = vmatpush1.bf16.msra.mxu0 0
    %765 = vmatprep.mubr.bf16.mxu0 0
    %766 = vmatmul.mubr.bf16.gmra.mrb[0].mxu0 %v728
    %v767 = vpop.f32.mrb[0].mxu0
    %v768 = vadd.f32 0.0, %v767
    %v769 = vpop.f32.mrb[0].mxu0
    %v770 = vadd.f32 0.0, %v769
    %v771 = vpop.f32.mrb[0].mxu0
    %v772 = vadd.f32 0.0, %v771
    %v773 = vpop.f32.mrb[0].mxu0
    %v774 = vadd.f32 0.0, %v773
    %775 = vmatprep.mubr.bf16.mxu0 0
    %776 = vmatmul.mubr.bf16.gmra.mrb[0].mxu0 %v731
    %v777 = vpop.f32.mrb[0].mxu0
    %v778 = vadd.f32 0.0, %v777
    %v779 = vpop.f32.mrb[0].mxu0
    %v780 = vadd.f32 0.0, %v779
    %v781 = vpop.f32.mrb[0].mxu0
    %v782 = vadd.f32 0.0, %v781
    %v783 = vpop.f32.mrb[0].mxu0
    %v784 = vadd.f32 0.0, %v783
    %785 = vdwg.mxu0
    %v786 = vadd.f32 %v532, %v768
    %v787 = vadd.f32 %v534, %v770
    %v788 = vadd.f32 %v536, %v772
    %v789 = vadd.f32 %v538, %v774
    %v790 = vadd.f32 %v542, %v778
    %v791 = vadd.f32 %v544, %v780
    %v792 = vadd.f32 %v546, %v782
    %v793 = vadd.f32 %v548, %v784
    %v794 = vld [vmem:[%s3] sm:$0x3]
    %v796 = vlaneseq
    %v797 = vshrl.u32 %v796, 7
    %v798 = vsub.s32 0, %v797
    %v799 = vrot.slane %v794, %v798
    %v800 = vlaneseq
    %v801 = vshrl.u32 %v800, 7
    %v802 = vsub.s32 1, %v801
    %v803 = vrot.slane %v794, %v802
    %v806 = vmul.f32 %v786, %v799
    %v807 = vmul.f32 %v787, %v803
    %v808 = vmul.f32 %v788, %v799
    %v809 = vmul.f32 %v789, %v803
    %v810 = vmul.f32 %v790, %v799
    %v811 = vmul.f32 %v791, %v803
    %v812 = vmul.f32 %v792, %v799
    %v813 = vmul.f32 %v793, %v803
    %v814 = vld [vmem:[%s4] sm:$0x3]
    %v816 = vlaneseq
    %v817 = vshrl.u32 %v816, 7
    %v818 = vsub.s32 0, %v817
    %v819 = vrot.slane %v814, %v818
    %v820 = vlaneseq
    %v821 = vshrl.u32 %v820, 7
    %v822 = vsub.s32 1, %v821
    %v823 = vrot.slane %v814, %v822
    %v826 = vadd.f32 %v806, %v819
    %v827 = vadd.f32 %v807, %v823
    %v828 = vadd.f32 %v808, %v819
    %v829 = vadd.f32 %v809, %v823
    %v830 = vadd.f32 %v810, %v819
    %v831 = vadd.f32 %v811, %v823
    %v832 = vadd.f32 %v812, %v819
    %v833 = vadd.f32 %v813, %v823
    %v834 = vmax.f32 %v826, 0.0
    %v835 = vmax.f32 %v827, 0.0
    %v836 = vmax.f32 %v828, 0.0
    %v837 = vmax.f32 %v829, 0.0
    %v838 = vmax.f32 %v830, 0.0
    %v839 = vmax.f32 %v831, 0.0
    %v840 = vmax.f32 %v832, 0.0
    %v841 = vmax.f32 %v833, 0.0
    %v842 = vld [vmem:[%s5] sm:$0xff]
    %v843 = vld [vmem:[%s5 + $0x8] sm:$0x3f]
    %vm844 = vcmask 244736
    %v846 = vsel %vm844, %v842, 0
    %v849 = vsel %vm844, %v843, 0
    %vm851 = vcmask 1045504
    %v853 = vsel %vm851, %v840, 0
    %v856 = vsel %vm851, %v841, 0
    %858 = vmatprep.subr.mxu0 %v835
    %859 = vmatpush1.msra.mxu0 %v834
    %860 = vmatprep.subr.mxu0 %v837
    %861 = vmatpush1.msra.mxu0 %v836
    %862 = vmatprep.subr.mxu0 %v839
    %863 = vmatpush1.msra.mxu0 %v838
    %864 = vmatprep.subr.mxu0 %v856
    %865 = vmatpush1.msra.mxu0 %v853
    %866 = vmatprep.subr.mxu0 0.0
    %867 = vmatpush1.msra.mxu0 0.0
    %868 = vmatprep.subr.mxu0 0.0
    %869 = vmatpush1.msra.mxu0 0.0
    %870 = vmatprep.subr.mxu0 0.0
    %871 = vmatpush1.msra.mxu0 0.0
    %872 = vmatprep.subr.mxu0 0.0
    %873 = vmatpush1.msra.mxu0 0.0
    %874 = vmatprep.subr.mxu0 0.0
    %875 = vmatpush1.msra.mxu0 0.0
    %876 = vmatprep.subr.mxu0 0.0
    %877 = vmatpush1.msra.mxu0 0.0
    %878 = vmatprep.subr.mxu0 0.0
    %879 = vmatpush1.msra.mxu0 0.0
    %880 = vmatprep.subr.mxu0 0.0
    %881 = vmatpush1.msra.mxu0 0.0
    %882 = vmatprep.subr.mxu0 0.0
    %883 = vmatpush1.msra.mxu0 0.0
    %884 = vmatprep.subr.mxu0 0.0
    %885 = vmatpush1.msra.mxu0 0.0
    %886 = vmatprep.subr.mxu0 0.0
    %887 = vmatpush1.msra.mxu0 0.0
    %888 = vmatprep.subr.mxu0 0.0
    %889 = vmatpush1.msra.mxu0 0.0
    %890 = vmatprep.subr.mxu0 0.0
    %891 = vmatpush1.msra.mxu0 0.0
    %892 = vmatprep.subr.mxu0 0.0
    %893 = vmatpush1.msra.mxu0 0.0
    %894 = vmatprep.subr.mxu0 0.0
    %895 = vmatpush1.msra.mxu0 0.0
    %896 = vmatprep.subr.mxu0 0.0
    %897 = vmatpush1.msra.mxu0 0.0
    %898 = vmatprep.subr.mxu0 0.0
    %899 = vmatpush1.msra.mxu0 0.0
    %900 = vmatprep.subr.mxu0 0.0
    %901 = vmatpush1.msra.mxu0 0.0
    %902 = vmatprep.subr.mxu0 0.0
    %903 = vmatpush1.msra.mxu0 0.0
    %904 = vmatprep.subr.mxu0 0.0
    %905 = vmatpush1.msra.mxu0 0.0
    %906 = vmatprep.subr.mxu0 0.0
    %907 = vmatpush1.msra.mxu0 0.0
    %908 = vmatprep.subr.mxu0 0.0
    %909 = vmatpush1.msra.mxu0 0.0
    %910 = vmatprep.subr.mxu0 0.0
    %911 = vmatpush1.msra.mxu0 0.0
    %912 = vmatprep.subr.mxu0 0.0
    %913 = vmatpush1.msra.mxu0 0.0
    %914 = vmatprep.subr.mxu0 0.0
    %915 = vmatpush1.msra.mxu0 0.0
    %916 = vmatprep.subr.mxu0 0.0
    %917 = vmatpush1.msra.mxu0 0.0
    %918 = vmatprep.subr.mxu0 0.0
    %919 = vmatpush1.msra.mxu0 0.0
    %920 = vmatprep.subr.mxu0 0.0
    %921 = vmatpush1.msra.mxu0 0.0
    %922 = vmatprep.mubr.f32.mxu0 0.0
    %923 = vmatmul.mubr.f32.gmra.mrb[0].mxu0 %v846
    %v924 = vpop.f32.mrb[0].mxu0
    %v925 = vadd.f32 0.0, %v924
    %v926 = vpop.f32.mrb[0].mxu0
    %v927 = vadd.f32 0.0, %v926
    %928 = vmatprep.mubr.f32.mxu0 0.0
    %929 = vmatmul.mubr.f32.gmra.mrb[0].mxu0 %v849
    %v930 = vpop.f32.mrb[0].mxu0
    %v931 = vadd.f32 0.0, %v930
    %v932 = vpop.f32.mrb[0].mxu0
    %v933 = vadd.f32 0.0, %v932
    %934 = vdwg.mxu0
    %v935 = vpack.c.bf16 %v931, %v925
    %v936 = vpack.c.bf16 %v933, %v927
    %v937 = vld [vmem:[%s6] sm:$0xff]
    %v938 = vld [vmem:[%s6 + $0x8] sm:$0xff]
    %v939 = vld [vmem:[%s6 + $0x10] sm:$0xff]
    %v940 = vld [vmem:[%s6 + $0x18] sm:$0xff]
    %v941 = vld [vmem:[%s6 + $0x20] sm:$0xff]
    %v942 = vld [vmem:[%s6 + $0x28] sm:$0xff]
    %v943 = vld [vmem:[%s6 + $0x30] sm:$0xff]
    %v944 = vld [vmem:[%s6 + $0x38] sm:$0xff]
    %v945 = vld [vmem:[%s6 + $0x40] sm:$0xff]
    %v946 = vld [vmem:[%s6 + $0x48] sm:$0xff]
    %v947 = vld [vmem:[%s6 + $0x50] sm:$0xff]
    %v948 = vld [vmem:[%s6 + $0x58] sm:$0xff]
    %v949 = vld [vmem:[%s6 + $0x60] sm:$0xff]
    %v950 = vld [vmem:[%s6 + $0x68] sm:$0xff]
    %v951 = vld [vmem:[%s6 + $0x70] sm:$0xff]
    %v952 = vld [vmem:[%s6 + $0x78] sm:$0xff]
    %v953 = vld [vmem:[%s6 + $0x80] sm:$0xff]
    %v954 = vld [vmem:[%s6 + $0x88] sm:$0xff]
    %v955 = vld [vmem:[%s6 + $0x90] sm:$0xff]
    %v956 = vld [vmem:[%s6 + $0x98] sm:$0xff]
    %v957 = vld [vmem:[%s6 + $0xa0] sm:$0xff]
    %v958 = vld [vmem:[%s6 + $0xa8] sm:$0xff]
    %v959 = vld [vmem:[%s6 + $0xb0] sm:$0xff]
    %v960 = vld [vmem:[%s6 + $0xb8] sm:$0xff]
    %v961 = vld [vmem:[%s6 + $0xc0] sm:$0xff]
    %v962 = vld [vmem:[%s6 + $0xc8] sm:$0xff]
    %v963 = vld [vmem:[%s6 + $0xd0] sm:$0xff]
    %v964 = vld [vmem:[%s6 + $0xd8] sm:$0xff]
    %v965 = vld [vmem:[%s6 + $0xe0] sm:$0xff]
    %v966 = vld [vmem:[%s6 + $0xe8] sm:$0xff]
    %s967 = scalar_lea.vmem %s5, 16
    %v968 = vld [vmem:[%s967] sm:$0xff]
    %v969 = vld [vmem:[%s967 + $0x8] sm:$0x3f]
    %v971 = vsel %vm844, %v968, 0
    %v974 = vsel %vm844, %v969, 0
    %976 = vmatprep.subr.mxu0 %v835
    %977 = vmatpush1.msra.mxu0 %v834
    %978 = vmatprep.subr.mxu0 %v837
    %979 = vmatpush1.msra.mxu0 %v836
    %980 = vmatprep.subr.mxu0 %v839
    %981 = vmatpush1.msra.mxu0 %v838
    %982 = vmatprep.subr.mxu0 %v856
    %983 = vmatpush1.msra.mxu0 %v853
    %984 = vmatprep.subr.mxu0 0.0
    %985 = vmatpush1.msra.mxu0 0.0
    %986 = vmatprep.subr.mxu0 0.0
    %987 = vmatpush1.msra.mxu0 0.0
    %988 = vmatprep.subr.mxu0 0.0
    %989 = vmatpush1.msra.mxu0 0.0
    %990 = vmatprep.subr.mxu0 0.0
    %991 = vmatpush1.msra.mxu0 0.0
    %992 = vmatprep.subr.mxu0 0.0
    %993 = vmatpush1.msra.mxu0 0.0
    %994 = vmatprep.subr.mxu0 0.0
    %995 = vmatpush1.msra.mxu0 0.0
    %996 = vmatprep.subr.mxu0 0.0
    %997 = vmatpush1.msra.mxu0 0.0
    %998 = vmatprep.subr.mxu0 0.0
    %999 = vmatpush1.msra.mxu0 0.0
    %1000 = vmatprep.subr.mxu0 0.0
    %1001 = vmatpush1.msra.mxu0 0.0
    %1002 = vmatprep.subr.mxu0 0.0
    %1003 = vmatpush1.msra.mxu0 0.0
    %1004 = vmatprep.subr.mxu0 0.0
    %1005 = vmatpush1.msra.mxu0 0.0
    %1006 = vmatprep.subr.mxu0 0.0
    %1007 = vmatpush1.msra.mxu0 0.0
    %1008 = vmatprep.subr.mxu0 0.0
    %1009 = vmatpush1.msra.mxu0 0.0
    %1010 = vmatprep.subr.mxu0 0.0
    %1011 = vmatpush1.msra.mxu0 0.0
    %1012 = vmatprep.subr.mxu0 0.0
    %1013 = vmatpush1.msra.mxu0 0.0
    %1014 = vmatprep.subr.mxu0 0.0
    %1015 = vmatpush1.msra.mxu0 0.0
    %1016 = vmatprep.subr.mxu0 0.0
    %1017 = vmatpush1.msra.mxu0 0.0
    %1018 = vmatprep.subr.mxu0 0.0
    %1019 = vmatpush1.msra.mxu0 0.0
    %1020 = vmatprep.subr.mxu0 0.0
    %1021 = vmatpush1.msra.mxu0 0.0
    %1022 = vmatprep.subr.mxu0 0.0
    %1023 = vmatpush1.msra.mxu0 0.0
    %1024 = vmatprep.subr.mxu0 0.0
    %1025 = vmatpush1.msra.mxu0 0.0
    %1026 = vmatprep.subr.mxu0 0.0
    %1027 = vmatpush1.msra.mxu0 0.0
    %1028 = vmatprep.subr.mxu0 0.0
    %1029 = vmatpush1.msra.mxu0 0.0
    %1030 = vmatprep.subr.mxu0 0.0
    %1031 = vmatpush1.msra.mxu0 0.0
    %1032 = vmatprep.subr.mxu0 0.0
    %1033 = vmatpush1.msra.mxu0 0.0
    %1034 = vmatprep.subr.mxu0 0.0
    %1035 = vmatpush1.msra.mxu0 0.0
    %1036 = vmatprep.subr.mxu0 0.0
    %1037 = vmatpush1.msra.mxu0 0.0
    %1038 = vmatprep.subr.mxu0 0.0
    %1039 = vmatpush1.msra.mxu0 0.0
    %1040 = vmatprep.mubr.f32.mxu0 0.0
    %1041 = vmatmul.mubr.f32.gmra.mrb[0].mxu0 %v971
    %v1042 = vpop.f32.mrb[0].mxu0
    %v1043 = vadd.f32 0.0, %v1042
    %v1044 = vpop.f32.mrb[0].mxu0
    %v1045 = vadd.f32 0.0, %v1044
    %1046 = vmatprep.mubr.f32.mxu0 0.0
    %1047 = vmatmul.mubr.f32.gmra.mrb[0].mxu0 %v974
    %v1048 = vpop.f32.mrb[0].mxu0
    %v1049 = vadd.f32 0.0, %v1048
    %v1050 = vpop.f32.mrb[0].mxu0
    %v1051 = vadd.f32 0.0, %v1050
    %1052 = vdwg.mxu0
    %v1053 = vpack.c.bf16 %v1049, %v1043
    %v1054 = vpack.c.bf16 %v1051, %v1045
    %s1055 = scalar_lea.vmem %s6, 240
    %v1056 = vld [vmem:[%s1055] sm:$0xff]
    %v1057 = vld [vmem:[%s1055 + $0x8] sm:$0xff]
    %v1058 = vld [vmem:[%s1055 + $0x10] sm:$0xff]
    %v1059 = vld [vmem:[%s1055 + $0x18] sm:$0xff]
    %v1060 = vld [vmem:[%s1055 + $0x20] sm:$0xff]
    %v1061 = vld [vmem:[%s1055 + $0x28] sm:$0xff]
    %v1062 = vld [vmem:[%s1055 + $0x30] sm:$0xff]
    %v1063 = vld [vmem:[%s1055 + $0x38] sm:$0xff]
    %v1064 = vld [vmem:[%s1055 + $0x40] sm:$0xff]
    %v1065 = vld [vmem:[%s1055 + $0x48] sm:$0xff]
    %v1066 = vld [vmem:[%s1055 + $0x50] sm:$0xff]
    %v1067 = vld [vmem:[%s1055 + $0x58] sm:$0xff]
    %v1068 = vld [vmem:[%s1055 + $0x60] sm:$0xff]
    %v1069 = vld [vmem:[%s1055 + $0x68] sm:$0xff]
    %v1070 = vld [vmem:[%s1055 + $0x70] sm:$0xff]
    %v1071 = vld [vmem:[%s1055 + $0x78] sm:$0xff]
    %v1072 = vld [vmem:[%s1055 + $0x80] sm:$0xff]
    %v1073 = vld [vmem:[%s1055 + $0x88] sm:$0xff]
    %v1074 = vld [vmem:[%s1055 + $0x90] sm:$0xff]
    %v1075 = vld [vmem:[%s1055 + $0x98] sm:$0xff]
    %v1076 = vld [vmem:[%s1055 + $0xa0] sm:$0xff]
    %v1077 = vld [vmem:[%s1055 + $0xa8] sm:$0xff]
    %v1078 = vld [vmem:[%s1055 + $0xb0] sm:$0xff]
    %v1079 = vld [vmem:[%s1055 + $0xb8] sm:$0xff]
    %v1080 = vld [vmem:[%s1055 + $0xc0] sm:$0xff]
    %v1081 = vld [vmem:[%s1055 + $0xc8] sm:$0xff]
    %v1082 = vld [vmem:[%s1055 + $0xd0] sm:$0xff]
    %v1083 = vld [vmem:[%s1055 + $0xd8] sm:$0xff]
    %v1084 = vld [vmem:[%s1055 + $0xe0] sm:$0xff]
    %v1085 = vld [vmem:[%s1055 + $0xe8] sm:$0xff]
    %v1116 = vunpack.c.l.b16 %v1056
    %v1117 = vunpack.c.h.b16 %v1056
    %v1118 = vunpack.c.l.b16 %v1057
    %v1119 = vunpack.c.h.b16 %v1057
    %v1120 = vunpack.c.l.b16 %v1058
    %v1121 = vunpack.c.h.b16 %v1058
    %v1122 = vunpack.c.l.b16 %v1059
    %v1123 = vunpack.c.h.b16 %v1059
    %v1124 = vunpack.c.l.b16 %v1060
    %v1125 = vunpack.c.h.b16 %v1060
    %v1126 = vunpack.c.l.b16 %v1061
    %v1127 = vunpack.c.h.b16 %v1061
    %v1128 = vunpack.c.l.b16 %v1062
    %v1129 = vunpack.c.h.b16 %v1062
    %v1130 = vunpack.c.l.b16 %v1063
    %v1131 = vunpack.c.h.b16 %v1063
    %v1132 = vunpack.c.l.b16 %v1064
    %v1133 = vunpack.c.h.b16 %v1064
    %v1134 = vunpack.c.l.b16 %v1065
    %v1135 = vunpack.c.h.b16 %v1065
    %v1136 = vunpack.c.l.b16 %v1066
    %v1137 = vunpack.c.h.b16 %v1066
    %v1138 = vunpack.c.l.b16 %v1067
    %v1139 = vunpack.c.h.b16 %v1067
    %v1140 = vunpack.c.l.b16 %v1068
    %v1141 = vunpack.c.h.b16 %v1068
    %v1142 = vunpack.c.l.b16 %v1069
    %v1143 = vunpack.c.h.b16 %v1069
    %v1144 = vunpack.c.l.b16 %v1070
    %v1145 = vunpack.c.h.b16 %v1070
    %v1146 = vunpack.c.l.b16 %v1071
    %v1147 = vunpack.c.h.b16 %v1071
    %v1148 = vunpack.c.l.b16 %v1072
    %v1149 = vunpack.c.h.b16 %v1072
    %v1150 = vunpack.c.l.b16 %v1073
    %v1151 = vunpack.c.h.b16 %v1073
    %v1152 = vunpack.c.l.b16 %v1074
    %v1153 = vunpack.c.h.b16 %v1074
    %v1154 = vunpack.c.l.b16 %v1075
    %v1155 = vunpack.c.h.b16 %v1075
    %v1156 = vunpack.c.l.b16 %v1076
    %v1157 = vunpack.c.h.b16 %v1076
    %v1158 = vunpack.c.l.b16 %v1077
    %v1159 = vunpack.c.h.b16 %v1077
    %v1160 = vunpack.c.l.b16 %v1078
    %v1161 = vunpack.c.h.b16 %v1078
    %v1162 = vunpack.c.l.b16 %v1079
    %v1163 = vunpack.c.h.b16 %v1079
    %v1164 = vunpack.c.l.b16 %v1080
    %v1165 = vunpack.c.h.b16 %v1080
    %v1166 = vunpack.c.l.b16 %v1081
    %v1167 = vunpack.c.h.b16 %v1081
    %v1168 = vunpack.c.l.b16 %v1082
    %v1169 = vunpack.c.h.b16 %v1082
    %v1170 = vunpack.c.l.b16 %v1083
    %v1171 = vunpack.c.h.b16 %v1083
    %v1172 = vunpack.c.l.b16 %v1084
    %v1173 = vunpack.c.h.b16 %v1084
    %v1174 = vunpack.c.l.b16 %v1085
    %v1175 = vunpack.c.h.b16 %v1085
    %v1176 = vpack.c.b16 %v1118, %v1116
    %v1177 = vpack.c.b16 %v1119, %v1117
    %v1178 = vpack.c.b16 %v1122, %v1120
    %v1179 = vpack.c.b16 %v1123, %v1121
    %v1180 = vpack.c.b16 %v1126, %v1124
    %v1181 = vpack.c.b16 %v1127, %v1125
    %v1182 = vpack.c.b16 %v1130, %v1128
    %v1183 = vpack.c.b16 %v1131, %v1129
    %v1184 = vpack.c.b16 %v1134, %v1132
    %v1185 = vpack.c.b16 %v1135, %v1133
    %v1186 = vpack.c.b16 %v1138, %v1136
    %v1187 = vpack.c.b16 %v1139, %v1137
    %v1188 = vpack.c.b16 %v1142, %v1140
    %v1189 = vpack.c.b16 %v1143, %v1141
    %v1190 = vpack.c.b16 %v1146, %v1144
    %v1191 = vpack.c.b16 %v1147, %v1145
    %v1192 = vpack.c.b16 %v1150, %v1148
    %v1193 = vpack.c.b16 %v1151, %v1149
    %v1194 = vpack.c.b16 %v1154, %v1152
    %v1195 = vpack.c.b16 %v1155, %v1153
    %v1196 = vpack.c.b16 %v1158, %v1156
    %v1197 = vpack.c.b16 %v1159, %v1157
    %v1198 = vpack.c.b16 %v1162, %v1160
    %v1199 = vpack.c.b16 %v1163, %v1161
    %v1200 = vpack.c.b16 %v1166, %v1164
    %v1201 = vpack.c.b16 %v1167, %v1165
    %v1202 = vpack.c.b16 %v1170, %v1168
    %v1203 = vpack.c.b16 %v1171, %v1169
    %v1204 = vpack.c.b16 %v1174, %v1172
    %v1205 = vpack.c.b16 %v1175, %v1173
    %vm1236 = vcmask 916480
    %v1238 = vsel %vm1236, %v1054, 0
    %1240 = vmatprep.subr.bf16.mxu0 %v1177
    %1241 = vmatpush1.bf16.msra.mxu0 %v1176
    %1242 = vmatprep.subr.bf16.mxu0 %v1179
    %1243 = vmatpush1.bf16.msra.mxu0 %v1178
    %1244 = vmatprep.subr.bf16.mxu0 %v1181
    %1245 = vmatpush1.bf16.msra.mxu0 %v1180
    %1246 = vmatprep.subr.bf16.mxu0 %v1183
    %1247 = vmatpush1.bf16.msra.mxu0 %v1182
    %1248 = vmatprep.subr.bf16.mxu0 %v1185
    %1249 = vmatpush1.bf16.msra.mxu0 %v1184
    %1250 = vmatprep.subr.bf16.mxu0 %v1187
    %1251 = vmatpush1.bf16.msra.mxu0 %v1186
    %1252 = vmatprep.subr.bf16.mxu0 %v1189
    %1253 = vmatpush1.bf16.msra.mxu0 %v1188
    %1254 = vmatprep.subr.bf16.mxu0 %v1191
    %1255 = vmatpush1.bf16.msra.mxu0 %v1190
    %1256 = vmatprep.subr.bf16.mxu0 %v1193
    %1257 = vmatpush1.bf16.msra.mxu0 %v1192
    %1258 = vmatprep.subr.bf16.mxu0 %v1195
    %1259 = vmatpush1.bf16.msra.mxu0 %v1194
    %1260 = vmatprep.subr.bf16.mxu0 %v1197
    %1261 = vmatpush1.bf16.msra.mxu0 %v1196
    %1262 = vmatprep.subr.bf16.mxu0 %v1199
    %1263 = vmatpush1.bf16.msra.mxu0 %v1198
    %1264 = vmatprep.subr.bf16.mxu0 %v1201
    %1265 = vmatpush1.bf16.msra.mxu0 %v1200
    %1266 = vmatprep.subr.bf16.mxu0 %v1203
    %1267 = vmatpush1.bf16.msra.mxu0 %v1202
    %1268 = vmatprep.subr.bf16.mxu0 %v1205
    %1269 = vmatpush1.bf16.msra.mxu0 %v1204
    %1270 = vmatprep.subr.bf16.mxu0 0
    %1271 = vmatpush1.bf16.msra.mxu0 0
    %1272 = vmatprep.mubr.bf16.mxu0 %v1238
    %1273 = vmatmul.mubr.bf16.gmra.mrb[0].mxu0 %v1053
    %v1274 = vpop.f32.mrb[0].mxu0
    %v1275 = vadd.f32 0.0, %v1274
    %v1276 = vpop.f32.mrb[0].mxu0
    %v1277 = vadd.f32 0.0, %v1276
    %v1278 = vpop.f32.mrb[0].mxu0
    %v1279 = vadd.f32 0.0, %v1278
    %v1280 = vpop.f32.mrb[0].mxu0
    %v1281 = vadd.f32 0.0, %v1280
    %1282 = vdwg.mxu0
    %v1313 = vunpack.c.l.b16 %v937
    %v1314 = vunpack.c.h.b16 %v937
    %v1315 = vunpack.c.l.b16 %v938
    %v1316 = vunpack.c.h.b16 %v938
    %v1317 = vunpack.c.l.b16 %v939
    %v1318 = vunpack.c.h.b16 %v939
    %v1319 = vunpack.c.l.b16 %v940
    %v1320 = vunpack.c.h.b16 %v940
    %v1321 = vunpack.c.l.b16 %v941
    %v1322 = vunpack.c.h.b16 %v941
    %v1323 = vunpack.c.l.b16 %v942
    %v1324 = vunpack.c.h.b16 %v942
    %v1325 = vunpack.c.l.b16 %v943
    %v1326 = vunpack.c.h.b16 %v943
    %v1327 = vunpack.c.l.b16 %v944
    %v1328 = vunpack.c.h.b16 %v944
    %v1329 = vunpack.c.l.b16 %v945
    %v1330 = vunpack.c.h.b16 %v945
    %v1331 = vunpack.c.l.b16 %v946
    %v1332 = vunpack.c.h.b16 %v946
    %v1333 = vunpack.c.l.b16 %v947
    %v1334 = vunpack.c.h.b16 %v947
    %v1335 = vunpack.c.l.b16 %v948
    %v1336 = vunpack.c.h.b16 %v948
    %v1337 = vunpack.c.l.b16 %v949
    %v1338 = vunpack.c.h.b16 %v949
    %v1339 = vunpack.c.l.b16 %v950
    %v1340 = vunpack.c.h.b16 %v950
    %v1341 = vunpack.c.l.b16 %v951
    %v1342 = vunpack.c.h.b16 %v951
    %v1343 = vunpack.c.l.b16 %v952
    %v1344 = vunpack.c.h.b16 %v952
    %v1345 = vunpack.c.l.b16 %v953
    %v1346 = vunpack.c.h.b16 %v953
    %v1347 = vunpack.c.l.b16 %v954
    %v1348 = vunpack.c.h.b16 %v954
    %v1349 = vunpack.c.l.b16 %v955
    %v1350 = vunpack.c.h.b16 %v955
    %v1351 = vunpack.c.l.b16 %v956
    %v1352 = vunpack.c.h.b16 %v956
    %v1353 = vunpack.c.l.b16 %v957
    %v1354 = vunpack.c.h.b16 %v957
    %v1355 = vunpack.c.l.b16 %v958
    %v1356 = vunpack.c.h.b16 %v958
    %v1357 = vunpack.c.l.b16 %v959
    %v1358 = vunpack.c.h.b16 %v959
    %v1359 = vunpack.c.l.b16 %v960
    %v1360 = vunpack.c.h.b16 %v960
    %v1361 = vunpack.c.l.b16 %v961
    %v1362 = vunpack.c.h.b16 %v961
    %v1363 = vunpack.c.l.b16 %v962
    %v1364 = vunpack.c.h.b16 %v962
    %v1365 = vunpack.c.l.b16 %v963
    %v1366 = vunpack.c.h.b16 %v963
    %v1367 = vunpack.c.l.b16 %v964
    %v1368 = vunpack.c.h.b16 %v964
    %v1369 = vunpack.c.l.b16 %v965
    %v1370 = vunpack.c.h.b16 %v965
    %v1371 = vunpack.c.l.b16 %v966
    %v1372 = vunpack.c.h.b16 %v966
    %v1373 = vpack.c.b16 %v1315, %v1313
    %v1374 = vpack.c.b16 %v1316, %v1314
    %v1375 = vpack.c.b16 %v1319, %v1317
    %v1376 = vpack.c.b16 %v1320, %v1318
    %v1377 = vpack.c.b16 %v1323, %v1321
    %v1378 = vpack.c.b16 %v1324, %v1322
    %v1379 = vpack.c.b16 %v1327, %v1325
    %v1380 = vpack.c.b16 %v1328, %v1326
    %v1381 = vpack.c.b16 %v1331, %v1329
    %v1382 = vpack.c.b16 %v1332, %v1330
    %v1383 = vpack.c.b16 %v1335, %v1333
    %v1384 = vpack.c.b16 %v1336, %v1334
    %v1385 = vpack.c.b16 %v1339, %v1337
    %v1386 = vpack.c.b16 %v1340, %v1338
    %v1387 = vpack.c.b16 %v1343, %v1341
    %v1388 = vpack.c.b16 %v1344, %v1342
    %v1389 = vpack.c.b16 %v1347, %v1345
    %v1390 = vpack.c.b16 %v1348, %v1346
    %v1391 = vpack.c.b16 %v1351, %v1349
    %v1392 = vpack.c.b16 %v1352, %v1350
    %v1393 = vpack.c.b16 %v1355, %v1353
    %v1394 = vpack.c.b16 %v1356, %v1354
    %v1395 = vpack.c.b16 %v1359, %v1357
    %v1396 = vpack.c.b16 %v1360, %v1358
    %v1397 = vpack.c.b16 %v1363, %v1361
    %v1398 = vpack.c.b16 %v1364, %v1362
    %v1399 = vpack.c.b16 %v1367, %v1365
    %v1400 = vpack.c.b16 %v1368, %v1366
    %v1401 = vpack.c.b16 %v1371, %v1369
    %v1402 = vpack.c.b16 %v1372, %v1370
    %v1434 = vsel %vm1236, %v936, 0
    %1436 = vmatprep.subr.bf16.mxu0 %v1374
    %1437 = vmatpush1.bf16.msra.mxu0 %v1373
    %1438 = vmatprep.subr.bf16.mxu0 %v1376
    %1439 = vmatpush1.bf16.msra.mxu0 %v1375
    %1440 = vmatprep.subr.bf16.mxu0 %v1378
    %1441 = vmatpush1.bf16.msra.mxu0 %v1377
    %1442 = vmatprep.subr.bf16.mxu0 %v1380
    %1443 = vmatpush1.bf16.msra.mxu0 %v1379
    %1444 = vmatprep.subr.bf16.mxu0 %v1382
    %1445 = vmatpush1.bf16.msra.mxu0 %v1381
    %1446 = vmatprep.subr.bf16.mxu0 %v1384
    %1447 = vmatpush1.bf16.msra.mxu0 %v1383
    %1448 = vmatprep.subr.bf16.mxu0 %v1386
    %1449 = vmatpush1.bf16.msra.mxu0 %v1385
    %1450 = vmatprep.subr.bf16.mxu0 %v1388
    %1451 = vmatpush1.bf16.msra.mxu0 %v1387
    %1452 = vmatprep.subr.bf16.mxu0 %v1390
    %1453 = vmatpush1.bf16.msra.mxu0 %v1389
    %1454 = vmatprep.subr.bf16.mxu0 %v1392
    %1455 = vmatpush1.bf16.msra.mxu0 %v1391
    %1456 = vmatprep.subr.bf16.mxu0 %v1394
    %1457 = vmatpush1.bf16.msra.mxu0 %v1393
    %1458 = vmatprep.subr.bf16.mxu0 %v1396
    %1459 = vmatpush1.bf16.msra.mxu0 %v1395
    %1460 = vmatprep.subr.bf16.mxu0 %v1398
    %1461 = vmatpush1.bf16.msra.mxu0 %v1397
    %1462 = vmatprep.subr.bf16.mxu0 %v1400
    %1463 = vmatpush1.bf16.msra.mxu0 %v1399
    %1464 = vmatprep.subr.bf16.mxu0 %v1402
    %1465 = vmatpush1.bf16.msra.mxu0 %v1401
    %1466 = vmatprep.subr.bf16.mxu0 0
    %1467 = vmatpush1.bf16.msra.mxu0 0
    %1468 = vmatprep.mubr.bf16.mxu0 %v1434
    %1469 = vmatmul.mubr.bf16.gmra.mrb[0].mxu0 %v935
    %v1470 = vpop.f32.mrb[0].mxu0
    %v1471 = vadd.f32 %v1275, %v1470
    %v1472 = vpop.f32.mrb[0].mxu0
    %v1473 = vadd.f32 %v1277, %v1472
    %v1474 = vpop.f32.mrb[0].mxu0
    %v1475 = vadd.f32 %v1279, %v1474
    %v1476 = vpop.f32.mrb[0].mxu0
    %v1477 = vadd.f32 %v1281, %v1476
    %1478 = vdwg.mxu0
    %s1479 = scalar_lea.vmem %s5, 32
    %v1480 = vld [vmem:[%s1479] sm:$0xff]
    %v1481 = vld [vmem:[%s1479 + $0x8] sm:$0x3f]
    %v1483 = vsel %vm844, %v1480, 0
    %v1486 = vsel %vm844, %v1481, 0
    %1488 = vmatprep.subr.mxu0 %v835
    %1489 = vmatpush1.msra.mxu0 %v834
    %1490 = vmatprep.subr.mxu0 %v837
    %1491 = vmatpush1.msra.mxu0 %v836
    %1492 = vmatprep.subr.mxu0 %v839
    %1493 = vmatpush1.msra.mxu0 %v838
    %1494 = vmatprep.subr.mxu0 %v856
    %1495 = vmatpush1.msra.mxu0 %v853
    %1496 = vmatprep.subr.mxu0 0.0
    %1497 = vmatpush1.msra.mxu0 0.0
    %1498 = vmatprep.subr.mxu0 0.0
    %1499 = vmatpush1.msra.mxu0 0.0
    %1500 = vmatprep.subr.mxu0 0.0
    %1501 = vmatpush1.msra.mxu0 0.0
    %1502 = vmatprep.subr.mxu0 0.0
    %1503 = vmatpush1.msra.mxu0 0.0
    %1504 = vmatprep.subr.mxu0 0.0
    %1505 = vmatpush1.msra.mxu0 0.0
    %1506 = vmatprep.subr.mxu0 0.0
    %1507 = vmatpush1.msra.mxu0 0.0
    %1508 = vmatprep.subr.mxu0 0.0
    %1509 = vmatpush1.msra.mxu0 0.0
    %1510 = vmatprep.subr.mxu0 0.0
    %1511 = vmatpush1.msra.mxu0 0.0
    %1512 = vmatprep.subr.mxu0 0.0
    %1513 = vmatpush1.msra.mxu0 0.0
    %1514 = vmatprep.subr.mxu0 0.0
    %1515 = vmatpush1.msra.mxu0 0.0
    %1516 = vmatprep.subr.mxu0 0.0
    %1517 = vmatpush1.msra.mxu0 0.0
    %1518 = vmatprep.subr.mxu0 0.0
    %1519 = vmatpush1.msra.mxu0 0.0
    %1520 = vmatprep.subr.mxu0 0.0
    %1521 = vmatpush1.msra.mxu0 0.0
    %1522 = vmatprep.subr.mxu0 0.0
    %1523 = vmatpush1.msra.mxu0 0.0
    %1524 = vmatprep.subr.mxu0 0.0
    %1525 = vmatpush1.msra.mxu0 0.0
    %1526 = vmatprep.subr.mxu0 0.0
    %1527 = vmatpush1.msra.mxu0 0.0
    %1528 = vmatprep.subr.mxu0 0.0
    %1529 = vmatpush1.msra.mxu0 0.0
    %1530 = vmatprep.subr.mxu0 0.0
    %1531 = vmatpush1.msra.mxu0 0.0
    %1532 = vmatprep.subr.mxu0 0.0
    %1533 = vmatpush1.msra.mxu0 0.0
    %1534 = vmatprep.subr.mxu0 0.0
    %1535 = vmatpush1.msra.mxu0 0.0
    %1536 = vmatprep.subr.mxu0 0.0
    %1537 = vmatpush1.msra.mxu0 0.0
    %1538 = vmatprep.subr.mxu0 0.0
    %1539 = vmatpush1.msra.mxu0 0.0
    %1540 = vmatprep.subr.mxu0 0.0
    %1541 = vmatpush1.msra.mxu0 0.0
    %1542 = vmatprep.subr.mxu0 0.0
    %1543 = vmatpush1.msra.mxu0 0.0
    %1544 = vmatprep.subr.mxu0 0.0
    %1545 = vmatpush1.msra.mxu0 0.0
    %1546 = vmatprep.subr.mxu0 0.0
    %1547 = vmatpush1.msra.mxu0 0.0
    %1548 = vmatprep.subr.mxu0 0.0
    %1549 = vmatpush1.msra.mxu0 0.0
    %1550 = vmatprep.subr.mxu0 0.0
    %1551 = vmatpush1.msra.mxu0 0.0
    %1552 = vmatprep.mubr.f32.mxu0 0.0
    %1553 = vmatmul.mubr.f32.gmra.mrb[0].mxu0 %v1483
    %v1554 = vpop.f32.mrb[0].mxu0
    %v1555 = vadd.f32 0.0, %v1554
    %v1556 = vpop.f32.mrb[0].mxu0
    %v1557 = vadd.f32 0.0, %v1556
    %1558 = vmatprep.mubr.f32.mxu0 0.0
    %1559 = vmatmul.mubr.f32.gmra.mrb[0].mxu0 %v1486
    %v1560 = vpop.f32.mrb[0].mxu0
    %v1561 = vadd.f32 0.0, %v1560
    %v1562 = vpop.f32.mrb[0].mxu0
    %v1563 = vadd.f32 0.0, %v1562
    %1564 = vdwg.mxu0
    %v1565 = vpack.c.bf16 %v1561, %v1555
    %v1566 = vpack.c.bf16 %v1563, %v1557
    %s1567 = scalar_lea.vmem %s6, 480
    %v1568 = vld [vmem:[%s1567] sm:$0xff]
    %v1569 = vld [vmem:[%s1567 + $0x8] sm:$0xff]
    %v1570 = vld [vmem:[%s1567 + $0x10] sm:$0xff]
    %v1571 = vld [vmem:[%s1567 + $0x18] sm:$0xff]
    %v1572 = vld [vmem:[%s1567 + $0x20] sm:$0xff]
    %v1573 = vld [vmem:[%s1567 + $0x28] sm:$0xff]
    %v1574 = vld [vmem:[%s1567 + $0x30] sm:$0xff]
    %v1575 = vld [vmem:[%s1567 + $0x38] sm:$0xff]
    %v1576 = vld [vmem:[%s1567 + $0x40] sm:$0xff]
    %v1577 = vld [vmem:[%s1567 + $0x48] sm:$0xff]
    %v1578 = vld [vmem:[%s1567 + $0x50] sm:$0xff]
    %v1579 = vld [vmem:[%s1567 + $0x58] sm:$0xff]
    %v1580 = vld [vmem:[%s1567 + $0x60] sm:$0xff]
    %v1581 = vld [vmem:[%s1567 + $0x68] sm:$0xff]
    %v1582 = vld [vmem:[%s1567 + $0x70] sm:$0xff]
    %v1583 = vld [vmem:[%s1567 + $0x78] sm:$0xff]
    %v1584 = vld [vmem:[%s1567 + $0x80] sm:$0xff]
    %v1585 = vld [vmem:[%s1567 + $0x88] sm:$0xff]
    %v1586 = vld [vmem:[%s1567 + $0x90] sm:$0xff]
    %v1587 = vld [vmem:[%s1567 + $0x98] sm:$0xff]
    %v1588 = vld [vmem:[%s1567 + $0xa0] sm:$0xff]
    %v1589 = vld [vmem:[%s1567 + $0xa8] sm:$0xff]
    %v1590 = vld [vmem:[%s1567 + $0xb0] sm:$0xff]
    %v1591 = vld [vmem:[%s1567 + $0xb8] sm:$0xff]
    %v1592 = vld [vmem:[%s1567 + $0xc0] sm:$0xff]
    %v1593 = vld [vmem:[%s1567 + $0xc8] sm:$0xff]
    %v1594 = vld [vmem:[%s1567 + $0xd0] sm:$0xff]
    %v1595 = vld [vmem:[%s1567 + $0xd8] sm:$0xff]
    %v1596 = vld [vmem:[%s1567 + $0xe0] sm:$0xff]
    %v1597 = vld [vmem:[%s1567 + $0xe8] sm:$0xff]
    %v1628 = vunpack.c.l.b16 %v1568
    %v1629 = vunpack.c.h.b16 %v1568
    %v1630 = vunpack.c.l.b16 %v1569
    %v1631 = vunpack.c.h.b16 %v1569
    %v1632 = vunpack.c.l.b16 %v1570
    %v1633 = vunpack.c.h.b16 %v1570
    %v1634 = vunpack.c.l.b16 %v1571
    %v1635 = vunpack.c.h.b16 %v1571
    %v1636 = vunpack.c.l.b16 %v1572
    %v1637 = vunpack.c.h.b16 %v1572
    %v1638 = vunpack.c.l.b16 %v1573
    %v1639 = vunpack.c.h.b16 %v1573
    %v1640 = vunpack.c.l.b16 %v1574
    %v1641 = vunpack.c.h.b16 %v1574
    %v1642 = vunpack.c.l.b16 %v1575
    %v1643 = vunpack.c.h.b16 %v1575
    %v1644 = vunpack.c.l.b16 %v1576
    %v1645 = vunpack.c.h.b16 %v1576
    %v1646 = vunpack.c.l.b16 %v1577
    %v1647 = vunpack.c.h.b16 %v1577
    %v1648 = vunpack.c.l.b16 %v1578
    %v1649 = vunpack.c.h.b16 %v1578
    %v1650 = vunpack.c.l.b16 %v1579
    %v1651 = vunpack.c.h.b16 %v1579
    %v1652 = vunpack.c.l.b16 %v1580
    %v1653 = vunpack.c.h.b16 %v1580
    %v1654 = vunpack.c.l.b16 %v1581
    %v1655 = vunpack.c.h.b16 %v1581
    %v1656 = vunpack.c.l.b16 %v1582
    %v1657 = vunpack.c.h.b16 %v1582
    %v1658 = vunpack.c.l.b16 %v1583
    %v1659 = vunpack.c.h.b16 %v1583
    %v1660 = vunpack.c.l.b16 %v1584
    %v1661 = vunpack.c.h.b16 %v1584
    %v1662 = vunpack.c.l.b16 %v1585
    %v1663 = vunpack.c.h.b16 %v1585
    %v1664 = vunpack.c.l.b16 %v1586
    %v1665 = vunpack.c.h.b16 %v1586
    %v1666 = vunpack.c.l.b16 %v1587
    %v1667 = vunpack.c.h.b16 %v1587
    %v1668 = vunpack.c.l.b16 %v1588
    %v1669 = vunpack.c.h.b16 %v1588
    %v1670 = vunpack.c.l.b16 %v1589
    %v1671 = vunpack.c.h.b16 %v1589
    %v1672 = vunpack.c.l.b16 %v1590
    %v1673 = vunpack.c.h.b16 %v1590
    %v1674 = vunpack.c.l.b16 %v1591
    %v1675 = vunpack.c.h.b16 %v1591
    %v1676 = vunpack.c.l.b16 %v1592
    %v1677 = vunpack.c.h.b16 %v1592
    %v1678 = vunpack.c.l.b16 %v1593
    %v1679 = vunpack.c.h.b16 %v1593
    %v1680 = vunpack.c.l.b16 %v1594
    %v1681 = vunpack.c.h.b16 %v1594
    %v1682 = vunpack.c.l.b16 %v1595
    %v1683 = vunpack.c.h.b16 %v1595
    %v1684 = vunpack.c.l.b16 %v1596
    %v1685 = vunpack.c.h.b16 %v1596
    %v1686 = vunpack.c.l.b16 %v1597
    %v1687 = vunpack.c.h.b16 %v1597
    %v1688 = vpack.c.b16 %v1630, %v1628
    %v1689 = vpack.c.b16 %v1631, %v1629
    %v1690 = vpack.c.b16 %v1634, %v1632
    %v1691 = vpack.c.b16 %v1635, %v1633
    %v1692 = vpack.c.b16 %v1638, %v1636
    %v1693 = vpack.c.b16 %v1639, %v1637
    %v1694 = vpack.c.b16 %v1642, %v1640
    %v1695 = vpack.c.b16 %v1643, %v1641
    %v1696 = vpack.c.b16 %v1646, %v1644
    %v1697 = vpack.c.b16 %v1647, %v1645
    %v1698 = vpack.c.b16 %v1650, %v1648
    %v1699 = vpack.c.b16 %v1651, %v1649
    %v1700 = vpack.c.b16 %v1654, %v1652
    %v1701 = vpack.c.b16 %v1655, %v1653
    %v1702 = vpack.c.b16 %v1658, %v1656
    %v1703 = vpack.c.b16 %v1659, %v1657
    %v1704 = vpack.c.b16 %v1662, %v1660
    %v1705 = vpack.c.b16 %v1663, %v1661
    %v1706 = vpack.c.b16 %v1666, %v1664
    %v1707 = vpack.c.b16 %v1667, %v1665
    %v1708 = vpack.c.b16 %v1670, %v1668
    %v1709 = vpack.c.b16 %v1671, %v1669
    %v1710 = vpack.c.b16 %v1674, %v1672
    %v1711 = vpack.c.b16 %v1675, %v1673
    %v1712 = vpack.c.b16 %v1678, %v1676
    %v1713 = vpack.c.b16 %v1679, %v1677
    %v1714 = vpack.c.b16 %v1682, %v1680
    %v1715 = vpack.c.b16 %v1683, %v1681
    %v1716 = vpack.c.b16 %v1686, %v1684
    %v1717 = vpack.c.b16 %v1687, %v1685
    %v1749 = vsel %vm1236, %v1566, 0
    %1751 = vmatprep.subr.bf16.mxu0 %v1689
    %1752 = vmatpush1.bf16.msra.mxu0 %v1688
    %1753 = vmatprep.subr.bf16.mxu0 %v1691
    %1754 = vmatpush1.bf16.msra.mxu0 %v1690
    %1755 = vmatprep.subr.bf16.mxu0 %v1693
    %1756 = vmatpush1.bf16.msra.mxu0 %v1692
    %1757 = vmatprep.subr.bf16.mxu0 %v1695
    %1758 = vmatpush1.bf16.msra.mxu0 %v1694
    %1759 = vmatprep.subr.bf16.mxu0 %v1697
    %1760 = vmatpush1.bf16.msra.mxu0 %v1696
    %1761 = vmatprep.subr.bf16.mxu0 %v1699
    %1762 = vmatpush1.bf16.msra.mxu0 %v1698
    %1763 = vmatprep.subr.bf16.mxu0 %v1701
    %1764 = vmatpush1.bf16.msra.mxu0 %v1700
    %1765 = vmatprep.subr.bf16.mxu0 %v1703
    %1766 = vmatpush1.bf16.msra.mxu0 %v1702
    %1767 = vmatprep.subr.bf16.mxu0 %v1705
    %1768 = vmatpush1.bf16.msra.mxu0 %v1704
    %1769 = vmatprep.subr.bf16.mxu0 %v1707
    %1770 = vmatpush1.bf16.msra.mxu0 %v1706
    %1771 = vmatprep.subr.bf16.mxu0 %v1709
    %1772 = vmatpush1.bf16.msra.mxu0 %v1708
    %1773 = vmatprep.subr.bf16.mxu0 %v1711
    %1774 = vmatpush1.bf16.msra.mxu0 %v1710
    %1775 = vmatprep.subr.bf16.mxu0 %v1713
    %1776 = vmatpush1.bf16.msra.mxu0 %v1712
    %1777 = vmatprep.subr.bf16.mxu0 %v1715
    %1778 = vmatpush1.bf16.msra.mxu0 %v1714
    %1779 = vmatprep.subr.bf16.mxu0 %v1717
    %1780 = vmatpush1.bf16.msra.mxu0 %v1716
    %1781 = vmatprep.subr.bf16.mxu0 0
    %1782 = vmatpush1.bf16.msra.mxu0 0
    %1783 = vmatprep.mubr.bf16.mxu0 %v1749
    %1784 = vmatmul.mubr.bf16.gmra.mrb[0].mxu0 %v1565
    %v1785 = vpop.f32.mrb[0].mxu0
    %v1786 = vadd.f32 0.0, %v1785
    %v1787 = vpop.f32.mrb[0].mxu0
    %v1788 = vadd.f32 0.0, %v1787
    %v1789 = vpop.f32.mrb[0].mxu0
    %v1790 = vadd.f32 0.0, %v1789
    %v1791 = vpop.f32.mrb[0].mxu0
    %v1792 = vadd.f32 0.0, %v1791
    %1793 = vdwg.mxu0
    %v1794 = vadd.f32 %v1471, %v1786
    %v1795 = vadd.f32 %v1473, %v1788
    %v1796 = vadd.f32 %v1475, %v1790
    %v1797 = vadd.f32 %v1477, %v1792
    %v1798 = vld [vmem:[%s7] sm:$0x3]
    %v1800 = vlaneseq
    %v1801 = vshrl.u32 %v1800, 7
    %v1802 = vsub.s32 0, %v1801
    %v1803 = vrot.slane %v1798, %v1802
    %v1804 = vlaneseq
    %v1805 = vshrl.u32 %v1804, 7
    %v1806 = vsub.s32 1, %v1805
    %v1807 = vrot.slane %v1798, %v1806
    %v1810 = vmul.f32 %v1794, %v1803
    %v1811 = vmul.f32 %v1795, %v1807
    %v1812 = vmul.f32 %v1796, %v1803
    %v1813 = vmul.f32 %v1797, %v1807
    %v1814 = vld [vmem:[%s8] sm:$0x3]
    %v1816 = vlaneseq
    %v1817 = vshrl.u32 %v1816, 7
    %v1818 = vsub.s32 0, %v1817
    %v1819 = vrot.slane %v1814, %v1818
    %v1820 = vlaneseq
    %v1821 = vshrl.u32 %v1820, 7
    %v1822 = vsub.s32 1, %v1821
    %v1823 = vrot.slane %v1814, %v1822
    %v1826 = vadd.f32 %v1810, %v1819
    %v1827 = vadd.f32 %v1811, %v1823
    %v1828 = vadd.f32 %v1812, %v1819
    %v1829 = vadd.f32 %v1813, %v1823
    %v1830 = vmax.f32 %v1826, 0.0
    %v1831 = vmax.f32 %v1827, 0.0
    %v1832 = vmax.f32 %v1828, 0.0
    %v1833 = vmax.f32 %v1829, 0.0
    %v1834 = vld [vmem:[%s9] sm:$0x3f]
    %vm1835 = vcmask 113664
    %v1837 = vsel %vm1835, %v1834, 0
    %v1840 = vsel %vm851, %v1832, 0
    %v1843 = vsel %vm851, %v1833, 0
    %1845 = vmatprep.subr.mxu0 %v1831
    %1846 = vmatpush1.msra.mxu0 %v1830
    %1847 = vmatprep.subr.mxu0 %v1843
    %1848 = vmatpush1.msra.mxu0 %v1840
    %1849 = vmatprep.subr.mxu0 0.0
    %1850 = vmatpush1.msra.mxu0 0.0
    %1851 = vmatprep.subr.mxu0 0.0
    %1852 = vmatpush1.msra.mxu0 0.0
    %1853 = vmatprep.subr.mxu0 0.0
    %1854 = vmatpush1.msra.mxu0 0.0
    %1855 = vmatprep.subr.mxu0 0.0
    %1856 = vmatpush1.msra.mxu0 0.0
    %1857 = vmatprep.subr.mxu0 0.0
    %1858 = vmatpush1.msra.mxu0 0.0
    %1859 = vmatprep.subr.mxu0 0.0
    %1860 = vmatpush1.msra.mxu0 0.0
    %1861 = vmatprep.subr.mxu0 0.0
    %1862 = vmatpush1.msra.mxu0 0.0
    %1863 = vmatprep.subr.mxu0 0.0
    %1864 = vmatpush1.msra.mxu0 0.0
    %1865 = vmatprep.subr.mxu0 0.0
    %1866 = vmatpush1.msra.mxu0 0.0
    %1867 = vmatprep.subr.mxu0 0.0
    %1868 = vmatpush1.msra.mxu0 0.0
    %1869 = vmatprep.subr.mxu0 0.0
    %1870 = vmatpush1.msra.mxu0 0.0
    %1871 = vmatprep.subr.mxu0 0.0
    %1872 = vmatpush1.msra.mxu0 0.0
    %1873 = vmatprep.subr.mxu0 0.0
    %1874 = vmatpush1.msra.mxu0 0.0
    %1875 = vmatprep.subr.mxu0 0.0
    %1876 = vmatpush1.msra.mxu0 0.0
    %1877 = vmatprep.subr.mxu0 0.0
    %1878 = vmatpush1.msra.mxu0 0.0
    %1879 = vmatprep.subr.mxu0 0.0
    %1880 = vmatpush1.msra.mxu0 0.0
    %1881 = vmatprep.subr.mxu0 0.0
    %1882 = vmatpush1.msra.mxu0 0.0
    %1883 = vmatprep.subr.mxu0 0.0
    %1884 = vmatpush1.msra.mxu0 0.0
    %1885 = vmatprep.subr.mxu0 0.0
    %1886 = vmatpush1.msra.mxu0 0.0
    %1887 = vmatprep.subr.mxu0 0.0
    %1888 = vmatpush1.msra.mxu0 0.0
    %1889 = vmatprep.subr.mxu0 0.0
    %1890 = vmatpush1.msra.mxu0 0.0
    %1891 = vmatprep.subr.mxu0 0.0
    %1892 = vmatpush1.msra.mxu0 0.0
    %1893 = vmatprep.subr.mxu0 0.0
    %1894 = vmatpush1.msra.mxu0 0.0
    %1895 = vmatprep.subr.mxu0 0.0
    %1896 = vmatpush1.msra.mxu0 0.0
    %1897 = vmatprep.subr.mxu0 0.0
    %1898 = vmatpush1.msra.mxu0 0.0
    %1899 = vmatprep.subr.mxu0 0.0
    %1900 = vmatpush1.msra.mxu0 0.0
    %1901 = vmatprep.subr.mxu0 0.0
    %1902 = vmatpush1.msra.mxu0 0.0
    %1903 = vmatprep.subr.mxu0 0.0
    %1904 = vmatpush1.msra.mxu0 0.0
    %1905 = vmatprep.subr.mxu0 0.0
    %1906 = vmatpush1.msra.mxu0 0.0
    %1907 = vmatprep.subr.mxu0 0.0
    %1908 = vmatpush1.msra.mxu0 0.0
    %1909 = vmatprep.mubr.f32.mxu0 0.0
    %1910 = vmatmul.mubr.f32.gmra.mrb[0].mxu0 %v1837
    %v1911 = vpop.f32.mrb[0].mxu0
    %v1912 = vadd.f32 0.0, %v1911
    %v1913 = vpop.f32.mrb[0].mxu0
    %v1914 = vadd.f32 0.0, %v1913
    %1915 = vdwg.mxu0
    %v1916 = vpack.c.bf16 %v1912, %v1912
    %v1917 = vpack.c.bf16 %v1914, %v1914
    %v1918 = vld [vmem:[%s10] sm:$0xff]
    %v1919 = vld [vmem:[%s10 + $0x8] sm:$0xff]
    %v1920 = vld [vmem:[%s10 + $0x10] sm:$0xff]
    %v1921 = vld [vmem:[%s10 + $0x18] sm:$0xff]
    %v1922 = vld [vmem:[%s10 + $0x20] sm:$0xff]
    %v1923 = vld [vmem:[%s10 + $0x28] sm:$0xff]
    %v1924 = vld [vmem:[%s10 + $0x30] sm:$0xff]
    %v1925 = vld [vmem:[%s10 + $0x38] sm:$0xff]
    %v1926 = vld [vmem:[%s10 + $0x40] sm:$0xff]
    %v1927 = vld [vmem:[%s10 + $0x48] sm:$0xff]
    %v1928 = vld [vmem:[%s10 + $0x50] sm:$0xff]
    %v1929 = vld [vmem:[%s10 + $0x58] sm:$0xff]
    %v1930 = vld [vmem:[%s10 + $0x60] sm:$0xff]
    %v1931 = vld [vmem:[%s10 + $0x68] sm:$0xff]
    %v1932 = vld [vmem:[%s10 + $0x70] sm:$0xff]
    %v1933 = vld [vmem:[%s10 + $0x78] sm:$0xff]
    %v1934 = vld [vmem:[%s10 + $0x80] sm:$0xff]
    %v1935 = vld [vmem:[%s10 + $0x88] sm:$0xff]
    %v1936 = vld [vmem:[%s10 + $0x90] sm:$0xff]
    %v1937 = vld [vmem:[%s10 + $0x98] sm:$0xff]
    %v1938 = vld [vmem:[%s10 + $0xa0] sm:$0xff]
    %v1939 = vld [vmem:[%s10 + $0xa8] sm:$0xff]
    %v1940 = vld [vmem:[%s10 + $0xb0] sm:$0xff]
    %v1941 = vld [vmem:[%s10 + $0xb8] sm:$0xff]
    %v1942 = vld [vmem:[%s10 + $0xc0] sm:$0xff]
    %v1943 = vld [vmem:[%s10 + $0xc8] sm:$0xff]
    %v1944 = vld [vmem:[%s10 + $0xd0] sm:$0xff]
    %v1945 = vld [vmem:[%s10 + $0xd8] sm:$0xff]
    %s1946 = scalar_lea.vmem %s9, 8
    %v1947 = vld [vmem:[%s1946] sm:$0x3f]
    %v1949 = vsel %vm1835, %v1947, 0
    %1951 = vmatprep.subr.mxu0 %v1831
    %1952 = vmatpush1.msra.mxu0 %v1830
    %1953 = vmatprep.subr.mxu0 %v1843
    %1954 = vmatpush1.msra.mxu0 %v1840
    %1955 = vmatprep.subr.mxu0 0.0
    %1956 = vmatpush1.msra.mxu0 0.0
    %1957 = vmatprep.subr.mxu0 0.0
    %1958 = vmatpush1.msra.mxu0 0.0
    %1959 = vmatprep.subr.mxu0 0.0
    %1960 = vmatpush1.msra.mxu0 0.0
    %1961 = vmatprep.subr.mxu0 0.0
    %1962 = vmatpush1.msra.mxu0 0.0
    %1963 = vmatprep.subr.mxu0 0.0
    %1964 = vmatpush1.msra.mxu0 0.0
    %1965 = vmatprep.subr.mxu0 0.0
    %1966 = vmatpush1.msra.mxu0 0.0
    %1967 = vmatprep.subr.mxu0 0.0
    %1968 = vmatpush1.msra.mxu0 0.0
    %1969 = vmatprep.subr.mxu0 0.0
    %1970 = vmatpush1.msra.mxu0 0.0
    %1971 = vmatprep.subr.mxu0 0.0
    %1972 = vmatpush1.msra.mxu0 0.0
    %1973 = vmatprep.subr.mxu0 0.0
    %1974 = vmatpush1.msra.mxu0 0.0
    %1975 = vmatprep.subr.mxu0 0.0
    %1976 = vmatpush1.msra.mxu0 0.0
    %1977 = vmatprep.subr.mxu0 0.0
    %1978 = vmatpush1.msra.mxu0 0.0
    %1979 = vmatprep.subr.mxu0 0.0
    %1980 = vmatpush1.msra.mxu0 0.0
    %1981 = vmatprep.subr.mxu0 0.0
    %1982 = vmatpush1.msra.mxu0 0.0
    %1983 = vmatprep.subr.mxu0 0.0
    %1984 = vmatpush1.msra.mxu0 0.0
    %1985 = vmatprep.subr.mxu0 0.0
    %1986 = vmatpush1.msra.mxu0 0.0
    %1987 = vmatprep.subr.mxu0 0.0
    %1988 = vmatpush1.msra.mxu0 0.0
    %1989 = vmatprep.subr.mxu0 0.0
    %1990 = vmatpush1.msra.mxu0 0.0
    %1991 = vmatprep.subr.mxu0 0.0
    %1992 = vmatpush1.msra.mxu0 0.0
    %1993 = vmatprep.subr.mxu0 0.0
    %1994 = vmatpush1.msra.mxu0 0.0
    %1995 = vmatprep.subr.mxu0 0.0
    %1996 = vmatpush1.msra.mxu0 0.0
    %1997 = vmatprep.subr.mxu0 0.0
    %1998 = vmatpush1.msra.mxu0 0.0
    %1999 = vmatprep.subr.mxu0 0.0
    %2000 = vmatpush1.msra.mxu0 0.0
    %2001 = vmatprep.subr.mxu0 0.0
    %2002 = vmatpush1.msra.mxu0 0.0
    %2003 = vmatprep.subr.mxu0 0.0
    %2004 = vmatpush1.msra.mxu0 0.0
    %2005 = vmatprep.subr.mxu0 0.0
    %2006 = vmatpush1.msra.mxu0 0.0
    %2007 = vmatprep.subr.mxu0 0.0
    %2008 = vmatpush1.msra.mxu0 0.0
    %2009 = vmatprep.subr.mxu0 0.0
    %2010 = vmatpush1.msra.mxu0 0.0
    %2011 = vmatprep.subr.mxu0 0.0
    %2012 = vmatpush1.msra.mxu0 0.0
    %2013 = vmatprep.subr.mxu0 0.0
    %2014 = vmatpush1.msra.mxu0 0.0
    %2015 = vmatprep.mubr.f32.mxu0 0.0
    %2016 = vmatmul.mubr.f32.gmra.mrb[0].mxu0 %v1949
    %v2017 = vpop.f32.mrb[0].mxu0
    %v2018 = vadd.f32 0.0, %v2017
    %v2019 = vpop.f32.mrb[0].mxu0
    %v2020 = vadd.f32 0.0, %v2019
    %2021 = vdwg.mxu0
    %v2022 = vpack.c.bf16 %v2018, %v2018
    %v2023 = vpack.c.bf16 %v2020, %v2020
    %s2024 = scalar_lea.vmem %s10, 224
    %v2025 = vld [vmem:[%s2024] sm:$0xff]
    %v2026 = vld [vmem:[%s2024 + $0x8] sm:$0xff]
    %v2027 = vld [vmem:[%s2024 + $0x10] sm:$0xff]
    %v2028 = vld [vmem:[%s2024 + $0x18] sm:$0xff]
    %v2029 = vld [vmem:[%s2024 + $0x20] sm:$0xff]
    %v2030 = vld [vmem:[%s2024 + $0x28] sm:$0xff]
    %v2031 = vld [vmem:[%s2024 + $0x30] sm:$0xff]
    %v2032 = vld [vmem:[%s2024 + $0x38] sm:$0xff]
    %v2033 = vld [vmem:[%s2024 + $0x40] sm:$0xff]
    %v2034 = vld [vmem:[%s2024 + $0x48] sm:$0xff]
    %v2035 = vld [vmem:[%s2024 + $0x50] sm:$0xff]
    %v2036 = vld [vmem:[%s2024 + $0x58] sm:$0xff]
    %v2037 = vld [vmem:[%s2024 + $0x60] sm:$0xff]
    %v2038 = vld [vmem:[%s2024 + $0x68] sm:$0xff]
    %v2039 = vld [vmem:[%s2024 + $0x70] sm:$0xff]
    %v2040 = vld [vmem:[%s2024 + $0x78] sm:$0xff]
    %v2041 = vld [vmem:[%s2024 + $0x80] sm:$0xff]
    %v2042 = vld [vmem:[%s2024 + $0x88] sm:$0xff]
    %v2043 = vld [vmem:[%s2024 + $0x90] sm:$0xff]
    %v2044 = vld [vmem:[%s2024 + $0x98] sm:$0xff]
    %v2045 = vld [vmem:[%s2024 + $0xa0] sm:$0xff]
    %v2046 = vld [vmem:[%s2024 + $0xa8] sm:$0xff]
    %v2047 = vld [vmem:[%s2024 + $0xb0] sm:$0xff]
    %v2048 = vld [vmem:[%s2024 + $0xb8] sm:$0xff]
    %v2049 = vld [vmem:[%s2024 + $0xc0] sm:$0xff]
    %v2050 = vld [vmem:[%s2024 + $0xc8] sm:$0xff]
    %v2051 = vld [vmem:[%s2024 + $0xd0] sm:$0xff]
    %v2052 = vld [vmem:[%s2024 + $0xd8] sm:$0xff]
    %v2081 = vunpack.c.l.b16 %v2025
    %v2082 = vunpack.c.h.b16 %v2025
    %v2083 = vunpack.c.l.b16 %v2026
    %v2084 = vunpack.c.h.b16 %v2026
    %v2085 = vunpack.c.l.b16 %v2027
    %v2086 = vunpack.c.h.b16 %v2027
    %v2087 = vunpack.c.l.b16 %v2028
    %v2088 = vunpack.c.h.b16 %v2028
    %v2089 = vunpack.c.l.b16 %v2029
    %v2090 = vunpack.c.h.b16 %v2029
    %v2091 = vunpack.c.l.b16 %v2030
    %v2092 = vunpack.c.h.b16 %v2030
    %v2093 = vunpack.c.l.b16 %v2031
    %v2094 = vunpack.c.h.b16 %v2031
    %v2095 = vunpack.c.l.b16 %v2032
    %v2096 = vunpack.c.h.b16 %v2032
    %v2097 = vunpack.c.l.b16 %v2033
    %v2098 = vunpack.c.h.b16 %v2033
    %v2099 = vunpack.c.l.b16 %v2034
    %v2100 = vunpack.c.h.b16 %v2034
    %v2101 = vunpack.c.l.b16 %v2035
    %v2102 = vunpack.c.h.b16 %v2035
    %v2103 = vunpack.c.l.b16 %v2036
    %v2104 = vunpack.c.h.b16 %v2036
    %v2105 = vunpack.c.l.b16 %v2037
    %v2106 = vunpack.c.h.b16 %v2037
    %v2107 = vunpack.c.l.b16 %v2038
    %v2108 = vunpack.c.h.b16 %v2038
    %v2109 = vunpack.c.l.b16 %v2039
    %v2110 = vunpack.c.h.b16 %v2039
    %v2111 = vunpack.c.l.b16 %v2040
    %v2112 = vunpack.c.h.b16 %v2040
    %v2113 = vunpack.c.l.b16 %v2041
    %v2114 = vunpack.c.h.b16 %v2041
    %v2115 = vunpack.c.l.b16 %v2042
    %v2116 = vunpack.c.h.b16 %v2042
    %v2117 = vunpack.c.l.b16 %v2043
    %v2118 = vunpack.c.h.b16 %v2043
    %v2119 = vunpack.c.l.b16 %v2044
    %v2120 = vunpack.c.h.b16 %v2044
    %v2121 = vunpack.c.l.b16 %v2045
    %v2122 = vunpack.c.h.b16 %v2045
    %v2123 = vunpack.c.l.b16 %v2046
    %v2124 = vunpack.c.h.b16 %v2046
    %v2125 = vunpack.c.l.b16 %v2047
    %v2126 = vunpack.c.h.b16 %v2047
    %v2127 = vunpack.c.l.b16 %v2048
    %v2128 = vunpack.c.h.b16 %v2048
    %v2129 = vunpack.c.l.b16 %v2049
    %v2130 = vunpack.c.h.b16 %v2049
    %v2131 = vunpack.c.l.b16 %v2050
    %v2132 = vunpack.c.h.b16 %v2050
    %v2133 = vunpack.c.l.b16 %v2051
    %v2134 = vunpack.c.h.b16 %v2051
    %v2135 = vunpack.c.l.b16 %v2052
    %v2136 = vunpack.c.h.b16 %v2052
    %v2137 = vpack.c.b16 %v2083, %v2081
    %v2138 = vpack.c.b16 %v2084, %v2082
    %v2139 = vpack.c.b16 %v2087, %v2085
    %v2140 = vpack.c.b16 %v2088, %v2086
    %v2141 = vpack.c.b16 %v2091, %v2089
    %v2142 = vpack.c.b16 %v2092, %v2090
    %v2143 = vpack.c.b16 %v2095, %v2093
    %v2144 = vpack.c.b16 %v2096, %v2094
    %v2145 = vpack.c.b16 %v2099, %v2097
    %v2146 = vpack.c.b16 %v2100, %v2098
    %v2147 = vpack.c.b16 %v2103, %v2101
    %v2148 = vpack.c.b16 %v2104, %v2102
    %v2149 = vpack.c.b16 %v2107, %v2105
    %v2150 = vpack.c.b16 %v2108, %v2106
    %v2151 = vpack.c.b16 %v2111, %v2109
    %v2152 = vpack.c.b16 %v2112, %v2110
    %v2153 = vpack.c.b16 %v2115, %v2113
    %v2154 = vpack.c.b16 %v2116, %v2114
    %v2155 = vpack.c.b16 %v2119, %v2117
    %v2156 = vpack.c.b16 %v2120, %v2118
    %v2157 = vpack.c.b16 %v2123, %v2121
    %v2158 = vpack.c.b16 %v2124, %v2122
    %v2159 = vpack.c.b16 %v2127, %v2125
    %v2160 = vpack.c.b16 %v2128, %v2126
    %v2161 = vpack.c.b16 %v2131, %v2129
    %v2162 = vpack.c.b16 %v2132, %v2130
    %v2163 = vpack.c.b16 %v2135, %v2133
    %v2164 = vpack.c.b16 %v2136, %v2134
    %v2194 = vsel %vm371, %v2023, 0
    %2196 = vmatprep.subr.bf16.mxu0 %v2138
    %2197 = vmatpush1.bf16.msra.mxu0 %v2137
    %2198 = vmatprep.subr.bf16.mxu0 %v2140
    %2199 = vmatpush1.bf16.msra.mxu0 %v2139
    %2200 = vmatprep.subr.bf16.mxu0 %v2142
    %2201 = vmatpush1.bf16.msra.mxu0 %v2141
    %2202 = vmatprep.subr.bf16.mxu0 %v2144
    %2203 = vmatpush1.bf16.msra.mxu0 %v2143
    %2204 = vmatprep.subr.bf16.mxu0 %v2146
    %2205 = vmatpush1.bf16.msra.mxu0 %v2145
    %2206 = vmatprep.subr.bf16.mxu0 %v2148
    %2207 = vmatpush1.bf16.msra.mxu0 %v2147
    %2208 = vmatprep.subr.bf16.mxu0 %v2150
    %2209 = vmatpush1.bf16.msra.mxu0 %v2149
    %2210 = vmatprep.subr.bf16.mxu0 %v2152
    %2211 = vmatpush1.bf16.msra.mxu0 %v2151
    %2212 = vmatprep.subr.bf16.mxu0 %v2154
    %2213 = vmatpush1.bf16.msra.mxu0 %v2153
    %2214 = vmatprep.subr.bf16.mxu0 %v2156
    %2215 = vmatpush1.bf16.msra.mxu0 %v2155
    %2216 = vmatprep.subr.bf16.mxu0 %v2158
    %2217 = vmatpush1.bf16.msra.mxu0 %v2157
    %2218 = vmatprep.subr.bf16.mxu0 %v2160
    %2219 = vmatpush1.bf16.msra.mxu0 %v2159
    %2220 = vmatprep.subr.bf16.mxu0 %v2162
    %2221 = vmatpush1.bf16.msra.mxu0 %v2161
    %2222 = vmatprep.subr.bf16.mxu0 %v2164
    %2223 = vmatpush1.bf16.msra.mxu0 %v2163
    %2224 = vmatprep.subr.bf16.mxu0 0
    %2225 = vmatpush1.bf16.msra.mxu0 0
    %2226 = vmatprep.subr.bf16.mxu0 0
    %2227 = vmatpush1.bf16.msra.mxu0 0
    %2228 = vmatprep.mubr.bf16.mxu0 %v2194
    %2229 = vmatmul.mubr.bf16.gmra.mrb[0].mxu0 %v2022
    %v2230 = vpop.f32.mrb[0].mxu0
    %v2231 = vadd.f32 0.0, %v2230
    %v2232 = vpop.f32.mrb[0].mxu0
    %v2233 = vadd.f32 0.0, %v2232
    %v2234 = vpop.f32.mrb[0].mxu0
    %v2235 = vpop.f32.mrb[0].mxu0
    %2236 = vdwg.mxu0
    %v2265 = vunpack.c.l.b16 %v1918
    %v2266 = vunpack.c.h.b16 %v1918
    %v2267 = vunpack.c.l.b16 %v1919
    %v2268 = vunpack.c.h.b16 %v1919
    %v2269 = vunpack.c.l.b16 %v1920
    %v2270 = vunpack.c.h.b16 %v1920
    %v2271 = vunpack.c.l.b16 %v1921
    %v2272 = vunpack.c.h.b16 %v1921
    %v2273 = vunpack.c.l.b16 %v1922
    %v2274 = vunpack.c.h.b16 %v1922
    %v2275 = vunpack.c.l.b16 %v1923
    %v2276 = vunpack.c.h.b16 %v1923
    %v2277 = vunpack.c.l.b16 %v1924
    %v2278 = vunpack.c.h.b16 %v1924
    %v2279 = vunpack.c.l.b16 %v1925
    %v2280 = vunpack.c.h.b16 %v1925
    %v2281 = vunpack.c.l.b16 %v1926
    %v2282 = vunpack.c.h.b16 %v1926
    %v2283 = vunpack.c.l.b16 %v1927
    %v2284 = vunpack.c.h.b16 %v1927
    %v2285 = vunpack.c.l.b16 %v1928
    %v2286 = vunpack.c.h.b16 %v1928
    %v2287 = vunpack.c.l.b16 %v1929
    %v2288 = vunpack.c.h.b16 %v1929
    %v2289 = vunpack.c.l.b16 %v1930
    %v2290 = vunpack.c.h.b16 %v1930
    %v2291 = vunpack.c.l.b16 %v1931
    %v2292 = vunpack.c.h.b16 %v1931
    %v2293 = vunpack.c.l.b16 %v1932
    %v2294 = vunpack.c.h.b16 %v1932
    %v2295 = vunpack.c.l.b16 %v1933
    %v2296 = vunpack.c.h.b16 %v1933
    %v2297 = vunpack.c.l.b16 %v1934
    %v2298 = vunpack.c.h.b16 %v1934
    %v2299 = vunpack.c.l.b16 %v1935
    %v2300 = vunpack.c.h.b16 %v1935
    %v2301 = vunpack.c.l.b16 %v1936
    %v2302 = vunpack.c.h.b16 %v1936
    %v2303 = vunpack.c.l.b16 %v1937
    %v2304 = vunpack.c.h.b16 %v1937
    %v2305 = vunpack.c.l.b16 %v1938
    %v2306 = vunpack.c.h.b16 %v1938
    %v2307 = vunpack.c.l.b16 %v1939
    %v2308 = vunpack.c.h.b16 %v1939
    %v2309 = vunpack.c.l.b16 %v1940
    %v2310 = vunpack.c.h.b16 %v1940
    %v2311 = vunpack.c.l.b16 %v1941
    %v2312 = vunpack.c.h.b16 %v1941
    %v2313 = vunpack.c.l.b16 %v1942
    %v2314 = vunpack.c.h.b16 %v1942
    %v2315 = vunpack.c.l.b16 %v1943
    %v2316 = vunpack.c.h.b16 %v1943
    %v2317 = vunpack.c.l.b16 %v1944
    %v2318 = vunpack.c.h.b16 %v1944
    %v2319 = vunpack.c.l.b16 %v1945
    %v2320 = vunpack.c.h.b16 %v1945
    %v2321 = vpack.c.b16 %v2267, %v2265
    %v2322 = vpack.c.b16 %v2268, %v2266
    %v2323 = vpack.c.b16 %v2271, %v2269
    %v2324 = vpack.c.b16 %v2272, %v2270
    %v2325 = vpack.c.b16 %v2275, %v2273
    %v2326 = vpack.c.b16 %v2276, %v2274
    %v2327 = vpack.c.b16 %v2279, %v2277
    %v2328 = vpack.c.b16 %v2280, %v2278
    %v2329 = vpack.c.b16 %v2283, %v2281
    %v2330 = vpack.c.b16 %v2284, %v2282
    %v2331 = vpack.c.b16 %v2287, %v2285
    %v2332 = vpack.c.b16 %v2288, %v2286
    %v2333 = vpack.c.b16 %v2291, %v2289
    %v2334 = vpack.c.b16 %v2292, %v2290
    %v2335 = vpack.c.b16 %v2295, %v2293
    %v2336 = vpack.c.b16 %v2296, %v2294
    %v2337 = vpack.c.b16 %v2299, %v2297
    %v2338 = vpack.c.b16 %v2300, %v2298
    %v2339 = vpack.c.b16 %v2303, %v2301
    %v2340 = vpack.c.b16 %v2304, %v2302
    %v2341 = vpack.c.b16 %v2307, %v2305
    %v2342 = vpack.c.b16 %v2308, %v2306
    %v2343 = vpack.c.b16 %v2311, %v2309
    %v2344 = vpack.c.b16 %v2312, %v2310
    %v2345 = vpack.c.b16 %v2315, %v2313
    %v2346 = vpack.c.b16 %v2316, %v2314
    %v2347 = vpack.c.b16 %v2319, %v2317
    %v2348 = vpack.c.b16 %v2320, %v2318
    %v2378 = vsel %vm371, %v1917, 0
    %2380 = vmatprep.subr.bf16.mxu0 %v2322
    %2381 = vmatpush1.bf16.msra.mxu0 %v2321
    %2382 = vmatprep.subr.bf16.mxu0 %v2324
    %2383 = vmatpush1.bf16.msra.mxu0 %v2323
    %2384 = vmatprep.subr.bf16.mxu0 %v2326
    %2385 = vmatpush1.bf16.msra.mxu0 %v2325
    %2386 = vmatprep.subr.bf16.mxu0 %v2328
    %2387 = vmatpush1.bf16.msra.mxu0 %v2327
    %2388 = vmatprep.subr.bf16.mxu0 %v2330
    %2389 = vmatpush1.bf16.msra.mxu0 %v2329
    %2390 = vmatprep.subr.bf16.mxu0 %v2332
    %2391 = vmatpush1.bf16.msra.mxu0 %v2331
    %2392 = vmatprep.subr.bf16.mxu0 %v2334
    %2393 = vmatpush1.bf16.msra.mxu0 %v2333
    %2394 = vmatprep.subr.bf16.mxu0 %v2336
    %2395 = vmatpush1.bf16.msra.mxu0 %v2335
    %2396 = vmatprep.subr.bf16.mxu0 %v2338
    %2397 = vmatpush1.bf16.msra.mxu0 %v2337
    %2398 = vmatprep.subr.bf16.mxu0 %v2340
    %2399 = vmatpush1.bf16.msra.mxu0 %v2339
    %2400 = vmatprep.subr.bf16.mxu0 %v2342
    %2401 = vmatpush1.bf16.msra.mxu0 %v2341
    %2402 = vmatprep.subr.bf16.mxu0 %v2344
    %2403 = vmatpush1.bf16.msra.mxu0 %v2343
    %2404 = vmatprep.subr.bf16.mxu0 %v2346
    %2405 = vmatpush1.bf16.msra.mxu0 %v2345
    %2406 = vmatprep.subr.bf16.mxu0 %v2348
    %2407 = vmatpush1.bf16.msra.mxu0 %v2347
    %2408 = vmatprep.subr.bf16.mxu0 0
    %2409 = vmatpush1.bf16.msra.mxu0 0
    %2410 = vmatprep.subr.bf16.mxu0 0
    %2411 = vmatpush1.bf16.msra.mxu0 0
    %2412 = vmatprep.mubr.bf16.mxu0 %v2378
    %2413 = vmatmul.mubr.bf16.gmra.mrb[0].mxu0 %v1916
    %v2414 = vpop.f32.mrb[0].mxu0
    %v2415 = vadd.f32 %v2231, %v2414
    %v2416 = vpop.f32.mrb[0].mxu0
    %v2417 = vadd.f32 %v2233, %v2416
    %v2418 = vpop.f32.mrb[0].mxu0
    %v2419 = vpop.f32.mrb[0].mxu0
    %2420 = vdwg.mxu0
    %s2421 = scalar_lea.vmem %s9, 16
    %v2422 = vld [vmem:[%s2421] sm:$0x3f]
    %v2424 = vsel %vm1835, %v2422, 0
    %2426 = vmatprep.subr.mxu0 %v1831
    %2427 = vmatpush1.msra.mxu0 %v1830
    %2428 = vmatprep.subr.mxu0 %v1843
    %2429 = vmatpush1.msra.mxu0 %v1840
    %2430 = vmatprep.subr.mxu0 0.0
    %2431 = vmatpush1.msra.mxu0 0.0
    %2432 = vmatprep.subr.mxu0 0.0
    %2433 = vmatpush1.msra.mxu0 0.0
    %2434 = vmatprep.subr.mxu0 0.0
    %2435 = vmatpush1.msra.mxu0 0.0
    %2436 = vmatprep.subr.mxu0 0.0
    %2437 = vmatpush1.msra.mxu0 0.0
    %2438 = vmatprep.subr.mxu0 0.0
    %2439 = vmatpush1.msra.mxu0 0.0
    %2440 = vmatprep.subr.mxu0 0.0
    %2441 = vmatpush1.msra.mxu0 0.0
    %2442 = vmatprep.subr.mxu0 0.0
    %2443 = vmatpush1.msra.mxu0 0.0
    %2444 = vmatprep.subr.mxu0 0.0
    %2445 = vmatpush1.msra.mxu0 0.0
    %2446 = vmatprep.subr.mxu0 0.0
    %2447 = vmatpush1.msra.mxu0 0.0
    %2448 = vmatprep.subr.mxu0 0.0
    %2449 = vmatpush1.msra.mxu0 0.0
    %2450 = vmatprep.subr.mxu0 0.0
    %2451 = vmatpush1.msra.mxu0 0.0
    %2452 = vmatprep.subr.mxu0 0.0
    %2453 = vmatpush1.msra.mxu0 0.0
    %2454 = vmatprep.subr.mxu0 0.0
    %2455 = vmatpush1.msra.mxu0 0.0
    %2456 = vmatprep.subr.mxu0 0.0
    %2457 = vmatpush1.msra.mxu0 0.0
    %2458 = vmatprep.subr.mxu0 0.0
    %2459 = vmatpush1.msra.mxu0 0.0
    %2460 = vmatprep.subr.mxu0 0.0
    %2461 = vmatpush1.msra.mxu0 0.0
    %2462 = vmatprep.subr.mxu0 0.0
    %2463 = vmatpush1.msra.mxu0 0.0
    %2464 = vmatprep.subr.mxu0 0.0
    %2465 = vmatpush1.msra.mxu0 0.0
    %2466 = vmatprep.subr.mxu0 0.0
    %2467 = vmatpush1.msra.mxu0 0.0
    %2468 = vmatprep.subr.mxu0 0.0
    %2469 = vmatpush1.msra.mxu0 0.0
    %2470 = vmatprep.subr.mxu0 0.0
    %2471 = vmatpush1.msra.mxu0 0.0
    %2472 = vmatprep.subr.mxu0 0.0
    %2473 = vmatpush1.msra.mxu0 0.0
    %2474 = vmatprep.subr.mxu0 0.0
    %2475 = vmatpush1.msra.mxu0 0.0
    %2476 = vmatprep.subr.mxu0 0.0
    %2477 = vmatpush1.msra.mxu0 0.0
    %2478 = vmatprep.subr.mxu0 0.0
    %2479 = vmatpush1.msra.mxu0 0.0
    %2480 = vmatprep.subr.mxu0 0.0
    %2481 = vmatpush1.msra.mxu0 0.0
    %2482 = vmatprep.subr.mxu0 0.0
    %2483 = vmatpush1.msra.mxu0 0.0
    %2484 = vmatprep.subr.mxu0 0.0
    %2485 = vmatpush1.msra.mxu0 0.0
    %2486 = vmatprep.subr.mxu0 0.0
    %2487 = vmatpush1.msra.mxu0 0.0
    %2488 = vmatprep.subr.mxu0 0.0
    %2489 = vmatpush1.msra.mxu0 0.0
    %2490 = vmatprep.mubr.f32.mxu0 0.0
    %2491 = vmatmul.mubr.f32.gmra.mrb[0].mxu0 %v2424
    %v2492 = vpop.f32.mrb[0].mxu0
    %v2493 = vadd.f32 0.0, %v2492
    %v2494 = vpop.f32.mrb[0].mxu0
    %v2495 = vadd.f32 0.0, %v2494
    %2496 = vdwg.mxu0
    %v2497 = vpack.c.bf16 %v2493, %v2493
    %v2498 = vpack.c.bf16 %v2495, %v2495
    %s2499 = scalar_lea.vmem %s10, 448
    %v2500 = vld [vmem:[%s2499] sm:$0xff]
    %v2501 = vld [vmem:[%s2499 + $0x8] sm:$0xff]
    %v2502 = vld [vmem:[%s2499 + $0x10] sm:$0xff]
    %v2503 = vld [vmem:[%s2499 + $0x18] sm:$0xff]
    %v2504 = vld [vmem:[%s2499 + $0x20] sm:$0xff]
    %v2505 = vld [vmem:[%s2499 + $0x28] sm:$0xff]
    %v2506 = vld [vmem:[%s2499 + $0x30] sm:$0xff]
    %v2507 = vld [vmem:[%s2499 + $0x38] sm:$0xff]
    %v2508 = vld [vmem:[%s2499 + $0x40] sm:$0xff]
    %v2509 = vld [vmem:[%s2499 + $0x48] sm:$0xff]
    %v2510 = vld [vmem:[%s2499 + $0x50] sm:$0xff]
    %v2511 = vld [vmem:[%s2499 + $0x58] sm:$0xff]
    %v2512 = vld [vmem:[%s2499 + $0x60] sm:$0xff]
    %v2513 = vld [vmem:[%s2499 + $0x68] sm:$0xff]
    %v2514 = vld [vmem:[%s2499 + $0x70] sm:$0xff]
    %v2515 = vld [vmem:[%s2499 + $0x78] sm:$0xff]
    %v2516 = vld [vmem:[%s2499 + $0x80] sm:$0xff]
    %v2517 = vld [vmem:[%s2499 + $0x88] sm:$0xff]
    %v2518 = vld [vmem:[%s2499 + $0x90] sm:$0xff]
    %v2519 = vld [vmem:[%s2499 + $0x98] sm:$0xff]
    %v2520 = vld [vmem:[%s2499 + $0xa0] sm:$0xff]
    %v2521 = vld [vmem:[%s2499 + $0xa8] sm:$0xff]
    %v2522 = vld [vmem:[%s2499 + $0xb0] sm:$0xff]
    %v2523 = vld [vmem:[%s2499 + $0xb8] sm:$0xff]
    %v2524 = vld [vmem:[%s2499 + $0xc0] sm:$0xff]
    %v2525 = vld [vmem:[%s2499 + $0xc8] sm:$0xff]
    %v2526 = vld [vmem:[%s2499 + $0xd0] sm:$0xff]
    %v2527 = vld [vmem:[%s2499 + $0xd8] sm:$0xff]
    %v2556 = vunpack.c.l.b16 %v2500
    %v2557 = vunpack.c.h.b16 %v2500
    %v2558 = vunpack.c.l.b16 %v2501
    %v2559 = vunpack.c.h.b16 %v2501
    %v2560 = vunpack.c.l.b16 %v2502
    %v2561 = vunpack.c.h.b16 %v2502
    %v2562 = vunpack.c.l.b16 %v2503
    %v2563 = vunpack.c.h.b16 %v2503
    %v2564 = vunpack.c.l.b16 %v2504
    %v2565 = vunpack.c.h.b16 %v2504
    %v2566 = vunpack.c.l.b16 %v2505
    %v2567 = vunpack.c.h.b16 %v2505
    %v2568 = vunpack.c.l.b16 %v2506
    %v2569 = vunpack.c.h.b16 %v2506
    %v2570 = vunpack.c.l.b16 %v2507
    %v2571 = vunpack.c.h.b16 %v2507
    %v2572 = vunpack.c.l.b16 %v2508
    %v2573 = vunpack.c.h.b16 %v2508
    %v2574 = vunpack.c.l.b16 %v2509
    %v2575 = vunpack.c.h.b16 %v2509
    %v2576 = vunpack.c.l.b16 %v2510
    %v2577 = vunpack.c.h.b16 %v2510
    %v2578 = vunpack.c.l.b16 %v2511
    %v2579 = vunpack.c.h.b16 %v2511
    %v2580 = vunpack.c.l.b16 %v2512
    %v2581 = vunpack.c.h.b16 %v2512
    %v2582 = vunpack.c.l.b16 %v2513
    %v2583 = vunpack.c.h.b16 %v2513
    %v2584 = vunpack.c.l.b16 %v2514
    %v2585 = vunpack.c.h.b16 %v2514
    %v2586 = vunpack.c.l.b16 %v2515
    %v2587 = vunpack.c.h.b16 %v2515
    %v2588 = vunpack.c.l.b16 %v2516
    %v2589 = vunpack.c.h.b16 %v2516
    %v2590 = vunpack.c.l.b16 %v2517
    %v2591 = vunpack.c.h.b16 %v2517
    %v2592 = vunpack.c.l.b16 %v2518
    %v2593 = vunpack.c.h.b16 %v2518
    %v2594 = vunpack.c.l.b16 %v2519
    %v2595 = vunpack.c.h.b16 %v2519
    %v2596 = vunpack.c.l.b16 %v2520
    %v2597 = vunpack.c.h.b16 %v2520
    %v2598 = vunpack.c.l.b16 %v2521
    %v2599 = vunpack.c.h.b16 %v2521
    %v2600 = vunpack.c.l.b16 %v2522
    %v2601 = vunpack.c.h.b16 %v2522
    %v2602 = vunpack.c.l.b16 %v2523
    %v2603 = vunpack.c.h.b16 %v2523
    %v2604 = vunpack.c.l.b16 %v2524
    %v2605 = vunpack.c.h.b16 %v2524
    %v2606 = vunpack.c.l.b16 %v2525
    %v2607 = vunpack.c.h.b16 %v2525
    %v2608 = vunpack.c.l.b16 %v2526
    %v2609 = vunpack.c.h.b16 %v2526
    %v2610 = vunpack.c.l.b16 %v2527
    %v2611 = vunpack.c.h.b16 %v2527
    %v2612 = vpack.c.b16 %v2558, %v2556
    %v2613 = vpack.c.b16 %v2559, %v2557
    %v2614 = vpack.c.b16 %v2562, %v2560
    %v2615 = vpack.c.b16 %v2563, %v2561
    %v2616 = vpack.c.b16 %v2566, %v2564
    %v2617 = vpack.c.b16 %v2567, %v2565
    %v2618 = vpack.c.b16 %v2570, %v2568
    %v2619 = vpack.c.b16 %v2571, %v2569
    %v2620 = vpack.c.b16 %v2574, %v2572
    %v2621 = vpack.c.b16 %v2575, %v2573
    %v2622 = vpack.c.b16 %v2578, %v2576
    %v2623 = vpack.c.b16 %v2579, %v2577
    %v2624 = vpack.c.b16 %v2582, %v2580
    %v2625 = vpack.c.b16 %v2583, %v2581
    %v2626 = vpack.c.b16 %v2586, %v2584
    %v2627 = vpack.c.b16 %v2587, %v2585
    %v2628 = vpack.c.b16 %v2590, %v2588
    %v2629 = vpack.c.b16 %v2591, %v2589
    %v2630 = vpack.c.b16 %v2594, %v2592
    %v2631 = vpack.c.b16 %v2595, %v2593
    %v2632 = vpack.c.b16 %v2598, %v2596
    %v2633 = vpack.c.b16 %v2599, %v2597
    %v2634 = vpack.c.b16 %v2602, %v2600
    %v2635 = vpack.c.b16 %v2603, %v2601
    %v2636 = vpack.c.b16 %v2606, %v2604
    %v2637 = vpack.c.b16 %v2607, %v2605
    %v2638 = vpack.c.b16 %v2610, %v2608
    %v2639 = vpack.c.b16 %v2611, %v2609
    %v2669 = vsel %vm371, %v2498, 0
    %2671 = vmatprep.subr.bf16.mxu0 %v2613
    %2672 = vmatpush1.bf16.msra.mxu0 %v2612
    %2673 = vmatprep.subr.bf16.mxu0 %v2615
    %2674 = vmatpush1.bf16.msra.mxu0 %v2614
    %2675 = vmatprep.subr.bf16.mxu0 %v2617
    %2676 = vmatpush1.bf16.msra.mxu0 %v2616
    %2677 = vmatprep.subr.bf16.mxu0 %v2619
    %2678 = vmatpush1.bf16.msra.mxu0 %v2618
    %2679 = vmatprep.subr.bf16.mxu0 %v2621
    %2680 = vmatpush1.bf16.msra.mxu0 %v2620
    %2681 = vmatprep.subr.bf16.mxu0 %v2623
    %2682 = vmatpush1.bf16.msra.mxu0 %v2622
    %2683 = vmatprep.subr.bf16.mxu0 %v2625
    %2684 = vmatpush1.bf16.msra.mxu0 %v2624
    %2685 = vmatprep.subr.bf16.mxu0 %v2627
    %2686 = vmatpush1.bf16.msra.mxu0 %v2626
    %2687 = vmatprep.subr.bf16.mxu0 %v2629
    %2688 = vmatpush1.bf16.msra.mxu0 %v2628
    %2689 = vmatprep.subr.bf16.mxu0 %v2631
    %2690 = vmatpush1.bf16.msra.mxu0 %v2630
    %2691 = vmatprep.subr.bf16.mxu0 %v2633
    %2692 = vmatpush1.bf16.msra.mxu0 %v2632
    %2693 = vmatprep.subr.bf16.mxu0 %v2635
    %2694 = vmatpush1.bf16.msra.mxu0 %v2634
    %2695 = vmatprep.subr.bf16.mxu0 %v2637
    %2696 = vmatpush1.bf16.msra.mxu0 %v2636
    %2697 = vmatprep.subr.bf16.mxu0 %v2639
    %2698 = vmatpush1.bf16.msra.mxu0 %v2638
    %2699 = vmatprep.subr.bf16.mxu0 0
    %2700 = vmatpush1.bf16.msra.mxu0 0
    %2701 = vmatprep.subr.bf16.mxu0 0
    %2702 = vmatpush1.bf16.msra.mxu0 0
    %2703 = vmatprep.mubr.bf16.mxu0 %v2669
    %2704 = vmatmul.mubr.bf16.gmra.mrb[0].mxu0 %v2497
    %v2705 = vpop.f32.mrb[0].mxu0
    %v2706 = vadd.f32 0.0, %v2705
    %v2707 = vpop.f32.mrb[0].mxu0
    %v2708 = vadd.f32 0.0, %v2707
    %v2709 = vpop.f32.mrb[0].mxu0
    %v2710 = vpop.f32.mrb[0].mxu0
    %2711 = vdwg.mxu0
    %v2712 = vadd.f32 %v2415, %v2706
    %v2713 = vadd.f32 %v2417, %v2708
    %v2714 = vld [vmem:[%s11] sm:$0x3]
    %v2716 = vlaneseq
    %v2717 = vshrl.u32 %v2716, 7
    %v2718 = vsub.s32 0, %v2717
    %v2719 = vrot.slane %v2714, %v2718
    %v2720 = vlaneseq
    %v2721 = vshrl.u32 %v2720, 7
    %v2722 = vsub.s32 1, %v2721
    %v2723 = vrot.slane %v2714, %v2722
    %v2726 = vmul.f32 %v2712, %v2719
    %v2727 = vmul.f32 %v2713, %v2723
    %v2728 = vld [vmem:[%s12] sm:$0x3]
    %v2730 = vlaneseq
    %v2731 = vshrl.u32 %v2730, 7
    %v2732 = vsub.s32 0, %v2731
    %v2733 = vrot.slane %v2728, %v2732
    %v2734 = vlaneseq
    %v2735 = vshrl.u32 %v2734, 7
    %v2736 = vsub.s32 1, %v2735
    %v2737 = vrot.slane %v2728, %v2736
    %v2740 = vadd.f32 %v2726, %v2733
    %v2741 = vadd.f32 %v2727, %v2737
    %v2742 = vmax.f32 %v2740, 0.0
    %v2743 = vmax.f32 %v2741, 0.0
    %v2744 = vld [vmem:[%s13] sm:$0x3]
    %vm2745 = vcmask 48128
    %v2747 = vsel %vm2745, %v2744, 0
    %v2750 = vsel %vm851, %v2742, 0
    %v2753 = vsel %vm851, %v2743, 0
    %2755 = vmatprep.subr.mxu0 %v2753
    %2756 = vmatpush1.msra.mxu0 %v2750
    %2757 = vmatprep.subr.mxu0 0.0
    %2758 = vmatpush1.msra.mxu0 0.0
    %2759 = vmatprep.subr.mxu0 0.0
    %2760 = vmatpush1.msra.mxu0 0.0
    %2761 = vmatprep.subr.mxu0 0.0
    %2762 = vmatpush1.msra.mxu0 0.0
    %2763 = vmatprep.subr.mxu0 0.0
    %2764 = vmatpush1.msra.mxu0 0.0
    %2765 = vmatprep.subr.mxu0 0.0
    %2766 = vmatpush1.msra.mxu0 0.0
    %2767 = vmatprep.subr.mxu0 0.0
    %2768 = vmatpush1.msra.mxu0 0.0
    %2769 = vmatprep.subr.mxu0 0.0
    %2770 = vmatpush1.msra.mxu0 0.0
    %2771 = vmatprep.subr.mxu0 0.0
    %2772 = vmatpush1.msra.mxu0 0.0
    %2773 = vmatprep.subr.mxu0 0.0
    %2774 = vmatpush1.msra.mxu0 0.0
    %2775 = vmatprep.subr.mxu0 0.0
    %2776 = vmatpush1.msra.mxu0 0.0
    %2777 = vmatprep.subr.mxu0 0.0
    %2778 = vmatpush1.msra.mxu0 0.0
    %2779 = vmatprep.subr.mxu0 0.0
    %2780 = vmatpush1.msra.mxu0 0.0
    %2781 = vmatprep.subr.mxu0 0.0
    %2782 = vmatpush1.msra.mxu0 0.0
    %2783 = vmatprep.subr.mxu0 0.0
    %2784 = vmatpush1.msra.mxu0 0.0
    %2785 = vmatprep.subr.mxu0 0.0
    %2786 = vmatpush1.msra.mxu0 0.0
    %2787 = vmatprep.subr.mxu0 0.0
    %2788 = vmatpush1.msra.mxu0 0.0
    %2789 = vmatprep.subr.mxu0 0.0
    %2790 = vmatpush1.msra.mxu0 0.0
    %2791 = vmatprep.subr.mxu0 0.0
    %2792 = vmatpush1.msra.mxu0 0.0
    %2793 = vmatprep.subr.mxu0 0.0
    %2794 = vmatpush1.msra.mxu0 0.0
    %2795 = vmatprep.subr.mxu0 0.0
    %2796 = vmatpush1.msra.mxu0 0.0
    %2797 = vmatprep.subr.mxu0 0.0
    %2798 = vmatpush1.msra.mxu0 0.0
    %2799 = vmatprep.subr.mxu0 0.0
    %2800 = vmatpush1.msra.mxu0 0.0
    %2801 = vmatprep.subr.mxu0 0.0
    %2802 = vmatpush1.msra.mxu0 0.0
    %2803 = vmatprep.subr.mxu0 0.0
    %2804 = vmatpush1.msra.mxu0 0.0
    %2805 = vmatprep.subr.mxu0 0.0
    %2806 = vmatpush1.msra.mxu0 0.0
    %2807 = vmatprep.subr.mxu0 0.0
    %2808 = vmatpush1.msra.mxu0 0.0
    %2809 = vmatprep.subr.mxu0 0.0
    %2810 = vmatpush1.msra.mxu0 0.0
    %2811 = vmatprep.subr.mxu0 0.0
    %2812 = vmatpush1.msra.mxu0 0.0
    %2813 = vmatprep.subr.mxu0 0.0
    %2814 = vmatpush1.msra.mxu0 0.0
    %2815 = vmatprep.subr.mxu0 0.0
    %2816 = vmatpush1.msra.mxu0 0.0
    %2817 = vmatprep.subr.mxu0 0.0
    %2818 = vmatpush1.msra.mxu0 0.0
    %2819 = vmatprep.mubr.f32.mxu0 0.0
    %2820 = vmatmul.mubr.f32.gmra.mrb[0].mxu0 %v2747
    %v2821 = vpop.f32.mrb[0].mxu0
    %v2822 = vadd.f32 0.0, %v2821
    %v2823 = vpop.f32.mrb[0].mxu0
    %v2824 = vadd.f32 0.0, %v2823
    %2825 = vdwg.mxu0
    %v2826 = vpack.c.bf16 %v2822, %v2822
    %v2827 = vpack.c.bf16 %v2824, %v2824
    %v2828 = vld [vmem:[%s14] sm:$0xf]
    %v2829 = vld [vmem:[%s14 + $0x4] sm:$0xf]
    %v2830 = vld [vmem:[%s14 + $0x8] sm:$0xf]
    %v2831 = vld [vmem:[%s14 + $0xc] sm:$0xf]
    %v2832 = vld [vmem:[%s14 + $0x10] sm:$0xf]
    %v2833 = vld [vmem:[%s14 + $0x14] sm:$0xf]
    %v2834 = vld [vmem:[%s14 + $0x18] sm:$0xf]
    %v2835 = vld [vmem:[%s14 + $0x1c] sm:$0xf]
    %v2836 = vld [vmem:[%s14 + $0x20] sm:$0xf]
    %v2837 = vld [vmem:[%s14 + $0x24] sm:$0xf]
    %v2838 = vld [vmem:[%s14 + $0x28] sm:$0xf]
    %v2839 = vld [vmem:[%s14 + $0x2c] sm:$0xf]
    %v2840 = vld [vmem:[%s14 + $0x30] sm:$0xf]
    %v2841 = vld [vmem:[%s14 + $0x34] sm:$0xf]
    %v2842 = vld [vmem:[%s14 + $0x38] sm:$0xf]
    %v2843 = vld [vmem:[%s14 + $0x3c] sm:$0xf]
    %v2844 = vld [vmem:[%s14 + $0x40] sm:$0xf]
    %v2845 = vld [vmem:[%s14 + $0x44] sm:$0xf]
    %v2846 = vld [vmem:[%s14 + $0x48] sm:$0xf]
    %v2847 = vld [vmem:[%s14 + $0x4c] sm:$0xf]
    %v2848 = vld [vmem:[%s14 + $0x50] sm:$0xf]
    %v2849 = vld [vmem:[%s14 + $0x54] sm:$0xf]
    %v2850 = vld [vmem:[%s14 + $0x58] sm:$0xf]
    %v2851 = vld [vmem:[%s14 + $0x5c] sm:$0xf]
    %s2852 = scalar_lea.vmem %s13, 2
    %v2853 = vld [vmem:[%s2852] sm:$0x3]
    %v2855 = vsel %vm2745, %v2853, 0
    %2857 = vmatprep.subr.mxu0 %v2753
    %2858 = vmatpush1.msra.mxu0 %v2750
    %2859 = vmatprep.subr.mxu0 0.0
    %2860 = vmatpush1.msra.mxu0 0.0
    %2861 = vmatprep.subr.mxu0 0.0
    %2862 = vmatpush1.msra.mxu0 0.0
    %2863 = vmatprep.subr.mxu0 0.0
    %2864 = vmatpush1.msra.mxu0 0.0
    %2865 = vmatprep.subr.mxu0 0.0
    %2866 = vmatpush1.msra.mxu0 0.0
    %2867 = vmatprep.subr.mxu0 0.0
    %2868 = vmatpush1.msra.mxu0 0.0
    %2869 = vmatprep.subr.mxu0 0.0
    %2870 = vmatpush1.msra.mxu0 0.0
    %2871 = vmatprep.subr.mxu0 0.0
    %2872 = vmatpush1.msra.mxu0 0.0
    %2873 = vmatprep.subr.mxu0 0.0
    %2874 = vmatpush1.msra.mxu0 0.0
    %2875 = vmatprep.subr.mxu0 0.0
    %2876 = vmatpush1.msra.mxu0 0.0
    %2877 = vmatprep.subr.mxu0 0.0
    %2878 = vmatpush1.msra.mxu0 0.0
    %2879 = vmatprep.subr.mxu0 0.0
    %2880 = vmatpush1.msra.mxu0 0.0
    %2881 = vmatprep.subr.mxu0 0.0
    %2882 = vmatpush1.msra.mxu0 0.0
    %2883 = vmatprep.subr.mxu0 0.0
    %2884 = vmatpush1.msra.mxu0 0.0
    %2885 = vmatprep.subr.mxu0 0.0
    %2886 = vmatpush1.msra.mxu0 0.0
    %2887 = vmatprep.subr.mxu0 0.0
    %2888 = vmatpush1.msra.mxu0 0.0
    %2889 = vmatprep.subr.mxu0 0.0
    %2890 = vmatpush1.msra.mxu0 0.0
    %2891 = vmatprep.subr.mxu0 0.0
    %2892 = vmatpush1.msra.mxu0 0.0
    %2893 = vmatprep.subr.mxu0 0.0
    %2894 = vmatpush1.msra.mxu0 0.0
    %2895 = vmatprep.subr.mxu0 0.0
    %2896 = vmatpush1.msra.mxu0 0.0
    %2897 = vmatprep.subr.mxu0 0.0
    %2898 = vmatpush1.msra.mxu0 0.0
    %2899 = vmatprep.subr.mxu0 0.0
    %2900 = vmatpush1.msra.mxu0 0.0
    %2901 = vmatprep.subr.mxu0 0.0
    %2902 = vmatpush1.msra.mxu0 0.0
    %2903 = vmatprep.subr.mxu0 0.0
    %2904 = vmatpush1.msra.mxu0 0.0
    %2905 = vmatprep.subr.mxu0 0.0
    %2906 = vmatpush1.msra.mxu0 0.0
    %2907 = vmatprep.subr.mxu0 0.0
    %2908 = vmatpush1.msra.mxu0 0.0
    %2909 = vmatprep.subr.mxu0 0.0
    %2910 = vmatpush1.msra.mxu0 0.0
    %2911 = vmatprep.subr.mxu0 0.0
    %2912 = vmatpush1.msra.mxu0 0.0
    %2913 = vmatprep.subr.mxu0 0.0
    %2914 = vmatpush1.msra.mxu0 0.0
    %2915 = vmatprep.subr.mxu0 0.0
    %2916 = vmatpush1.msra.mxu0 0.0
    %2917 = vmatprep.subr.mxu0 0.0
    %2918 = vmatpush1.msra.mxu0 0.0
    %2919 = vmatprep.subr.mxu0 0.0
    %2920 = vmatpush1.msra.mxu0 0.0
    %2921 = vmatprep.mubr.f32.mxu0 0.0
    %2922 = vmatmul.mubr.f32.gmra.mrb[0].mxu0 %v2855
    %v2923 = vpop.f32.mrb[0].mxu0
    %v2924 = vadd.f32 0.0, %v2923
    %v2925 = vpop.f32.mrb[0].mxu0
    %v2926 = vadd.f32 0.0, %v2925
    %2927 = vdwg.mxu0
    %v2928 = vpack.c.bf16 %v2924, %v2924
    %v2929 = vpack.c.bf16 %v2926, %v2926
    %s2930 = scalar_lea.vmem %s14, 96
    %v2931 = vld [vmem:[%s2930] sm:$0xf]
    %v2932 = vld [vmem:[%s2930 + $0x4] sm:$0xf]
    %v2933 = vld [vmem:[%s2930 + $0x8] sm:$0xf]
    %v2934 = vld [vmem:[%s2930 + $0xc] sm:$0xf]
    %v2935 = vld [vmem:[%s2930 + $0x10] sm:$0xf]
    %v2936 = vld [vmem:[%s2930 + $0x14] sm:$0xf]
    %v2937 = vld [vmem:[%s2930 + $0x18] sm:$0xf]
    %v2938 = vld [vmem:[%s2930 + $0x1c] sm:$0xf]
    %v2939 = vld [vmem:[%s2930 + $0x20] sm:$0xf]
    %v2940 = vld [vmem:[%s2930 + $0x24] sm:$0xf]
    %v2941 = vld [vmem:[%s2930 + $0x28] sm:$0xf]
    %v2942 = vld [vmem:[%s2930 + $0x2c] sm:$0xf]
    %v2943 = vld [vmem:[%s2930 + $0x30] sm:$0xf]
    %v2944 = vld [vmem:[%s2930 + $0x34] sm:$0xf]
    %v2945 = vld [vmem:[%s2930 + $0x38] sm:$0xf]
    %v2946 = vld [vmem:[%s2930 + $0x3c] sm:$0xf]
    %v2947 = vld [vmem:[%s2930 + $0x40] sm:$0xf]
    %v2948 = vld [vmem:[%s2930 + $0x44] sm:$0xf]
    %v2949 = vld [vmem:[%s2930 + $0x48] sm:$0xf]
    %v2950 = vld [vmem:[%s2930 + $0x4c] sm:$0xf]
    %v2951 = vld [vmem:[%s2930 + $0x50] sm:$0xf]
    %v2952 = vld [vmem:[%s2930 + $0x54] sm:$0xf]
    %v2953 = vld [vmem:[%s2930 + $0x58] sm:$0xf]
    %v2954 = vld [vmem:[%s2930 + $0x5c] sm:$0xf]
    %v2979 = vunpack.c.l.b16 %v2931
    %v2980 = vunpack.c.l.b16 %v2932
    %v2981 = vunpack.c.l.b16 %v2933
    %v2982 = vunpack.c.l.b16 %v2934
    %v2983 = vunpack.c.l.b16 %v2935
    %v2984 = vunpack.c.l.b16 %v2936
    %v2985 = vunpack.c.l.b16 %v2937
    %v2986 = vunpack.c.l.b16 %v2938
    %v2987 = vunpack.c.l.b16 %v2939
    %v2988 = vunpack.c.l.b16 %v2940
    %v2989 = vunpack.c.l.b16 %v2941
    %v2990 = vunpack.c.l.b16 %v2942
    %v2991 = vunpack.c.l.b16 %v2943
    %v2992 = vunpack.c.l.b16 %v2944
    %v2993 = vunpack.c.l.b16 %v2945
    %v2994 = vunpack.c.l.b16 %v2946
    %v2995 = vunpack.c.l.b16 %v2947
    %v2996 = vunpack.c.l.b16 %v2948
    %v2997 = vunpack.c.l.b16 %v2949
    %v2998 = vunpack.c.l.b16 %v2950
    %v2999 = vunpack.c.l.b16 %v2951
    %v3000 = vunpack.c.l.b16 %v2952
    %v3001 = vunpack.c.l.b16 %v2953
    %v3002 = vunpack.c.l.b16 %v2954
    %v3003 = vpack.c.b16 %v2980, %v2979
    %v3004 = vpack.c.b16 %v2982, %v2981
    %v3005 = vpack.c.b16 %v2984, %v2983
    %v3006 = vpack.c.b16 %v2986, %v2985
    %v3007 = vpack.c.b16 %v2988, %v2987
    %v3008 = vpack.c.b16 %v2990, %v2989
    %v3009 = vpack.c.b16 %v2992, %v2991
    %v3010 = vpack.c.b16 %v2994, %v2993
    %v3011 = vpack.c.b16 %v2996, %v2995
    %v3012 = vpack.c.b16 %v2998, %v2997
    %v3013 = vpack.c.b16 %v3000, %v2999
    %v3014 = vpack.c.b16 %v3002, %v3001
    %v3028 = vsel %vm82, %v2929, 0
    %3030 = vmatprep.subr.bf16.mxu0 0
    %3031 = vmatpush1.bf16.msra.mxu0 %v3003
    %3032 = vmatprep.subr.bf16.mxu0 0
    %3033 = vmatpush1.bf16.msra.mxu0 %v3004
    %3034 = vmatprep.subr.bf16.mxu0 0
    %3035 = vmatpush1.bf16.msra.mxu0 %v3005
    %3036 = vmatprep.subr.bf16.mxu0 0
    %3037 = vmatpush1.bf16.msra.mxu0 %v3006
    %3038 = vmatprep.subr.bf16.mxu0 0
    %3039 = vmatpush1.bf16.msra.mxu0 %v3007
    %3040 = vmatprep.subr.bf16.mxu0 0
    %3041 = vmatpush1.bf16.msra.mxu0 %v3008
    %3042 = vmatprep.subr.bf16.mxu0 0
    %3043 = vmatpush1.bf16.msra.mxu0 %v3009
    %3044 = vmatprep.subr.bf16.mxu0 0
    %3045 = vmatpush1.bf16.msra.mxu0 %v3010
    %3046 = vmatprep.subr.bf16.mxu0 0
    %3047 = vmatpush1.bf16.msra.mxu0 %v3011
    %3048 = vmatprep.subr.bf16.mxu0 0
    %3049 = vmatpush1.bf16.msra.mxu0 %v3012
    %3050 = vmatprep.subr.bf16.mxu0 0
    %3051 = vmatpush1.bf16.msra.mxu0 %v3013
    %3052 = vmatprep.subr.bf16.mxu0 0
    %3053 = vmatpush1.bf16.msra.mxu0 %v3014
    %3054 = vmatprep.subr.bf16.mxu0 0
    %3055 = vmatpush1.bf16.msra.mxu0 0
    %3056 = vmatprep.subr.bf16.mxu0 0
    %3057 = vmatpush1.bf16.msra.mxu0 0
    %3058 = vmatprep.subr.bf16.mxu0 0
    %3059 = vmatpush1.bf16.msra.mxu0 0
    %3060 = vmatprep.subr.bf16.mxu0 0
    %3061 = vmatpush1.bf16.msra.mxu0 0
    %3062 = vmatprep.mubr.bf16.mxu0 %v3028
    %3063 = vmatmul.mubr.bf16.gmra.mrb[0].mxu0 %v2928
    %v3064 = vpop.f32.mrb[0].mxu0
    %v3065 = vadd.f32 0.0, %v3064
    %v3066 = vpop.f32.mrb[0].mxu0
    %v3067 = vpop.f32.mrb[0].mxu0
    %v3068 = vpop.f32.mrb[0].mxu0
    %3069 = vdwg.mxu0
    %v3094 = vunpack.c.l.b16 %v2828
    %v3095 = vunpack.c.l.b16 %v2829
    %v3096 = vunpack.c.l.b16 %v2830
    %v3097 = vunpack.c.l.b16 %v2831
    %v3098 = vunpack.c.l.b16 %v2832
    %v3099 = vunpack.c.l.b16 %v2833
    %v3100 = vunpack.c.l.b16 %v2834
    %v3101 = vunpack.c.l.b16 %v2835
    %v3102 = vunpack.c.l.b16 %v2836
    %v3103 = vunpack.c.l.b16 %v2837
    %v3104 = vunpack.c.l.b16 %v2838
    %v3105 = vunpack.c.l.b16 %v2839
    %v3106 = vunpack.c.l.b16 %v2840
    %v3107 = vunpack.c.l.b16 %v2841
    %v3108 = vunpack.c.l.b16 %v2842
    %v3109 = vunpack.c.l.b16 %v2843
    %v3110 = vunpack.c.l.b16 %v2844
    %v3111 = vunpack.c.l.b16 %v2845
    %v3112 = vunpack.c.l.b16 %v2846
    %v3113 = vunpack.c.l.b16 %v2847
    %v3114 = vunpack.c.l.b16 %v2848
    %v3115 = vunpack.c.l.b16 %v2849
    %v3116 = vunpack.c.l.b16 %v2850
    %v3117 = vunpack.c.l.b16 %v2851
    %v3118 = vpack.c.b16 %v3095, %v3094
    %v3119 = vpack.c.b16 %v3097, %v3096
    %v3120 = vpack.c.b16 %v3099, %v3098
    %v3121 = vpack.c.b16 %v3101, %v3100
    %v3122 = vpack.c.b16 %v3103, %v3102
    %v3123 = vpack.c.b16 %v3105, %v3104
    %v3124 = vpack.c.b16 %v3107, %v3106
    %v3125 = vpack.c.b16 %v3109, %v3108
    %v3126 = vpack.c.b16 %v3111, %v3110
    %v3127 = vpack.c.b16 %v3113, %v3112
    %v3128 = vpack.c.b16 %v3115, %v3114
    %v3129 = vpack.c.b16 %v3117, %v3116
    %v3143 = vsel %vm82, %v2827, 0
    %3145 = vmatprep.subr.bf16.mxu0 0
    %3146 = vmatpush1.bf16.msra.mxu0 %v3118
    %3147 = vmatprep.subr.bf16.mxu0 0
    %3148 = vmatpush1.bf16.msra.mxu0 %v3119
    %3149 = vmatprep.subr.bf16.mxu0 0
    %3150 = vmatpush1.bf16.msra.mxu0 %v3120
    %3151 = vmatprep.subr.bf16.mxu0 0
    %3152 = vmatpush1.bf16.msra.mxu0 %v3121
    %3153 = vmatprep.subr.bf16.mxu0 0
    %3154 = vmatpush1.bf16.msra.mxu0 %v3122
    %3155 = vmatprep.subr.bf16.mxu0 0
    %3156 = vmatpush1.bf16.msra.mxu0 %v3123
    %3157 = vmatprep.subr.bf16.mxu0 0
    %3158 = vmatpush1.bf16.msra.mxu0 %v3124
    %3159 = vmatprep.subr.bf16.mxu0 0
    %3160 = vmatpush1.bf16.msra.mxu0 %v3125
    %3161 = vmatprep.subr.bf16.mxu0 0
    %3162 = vmatpush1.bf16.msra.mxu0 %v3126
    %3163 = vmatprep.subr.bf16.mxu0 0
    %3164 = vmatpush1.bf16.msra.mxu0 %v3127
    %3165 = vmatprep.subr.bf16.mxu0 0
    %3166 = vmatpush1.bf16.msra.mxu0 %v3128
    %3167 = vmatprep.subr.bf16.mxu0 0
    %3168 = vmatpush1.bf16.msra.mxu0 %v3129
    %3169 = vmatprep.subr.bf16.mxu0 0
    %3170 = vmatpush1.bf16.msra.mxu0 0
    %3171 = vmatprep.subr.bf16.mxu0 0
    %3172 = vmatpush1.bf16.msra.mxu0 0
    %3173 = vmatprep.subr.bf16.mxu0 0
    %3174 = vmatpush1.bf16.msra.mxu0 0
    %3175 = vmatprep.subr.bf16.mxu0 0
    %3176 = vmatpush1.bf16.msra.mxu0 0
    %3177 = vmatprep.mubr.bf16.mxu0 %v3143
    %3178 = vmatmul.mubr.bf16.gmra.mrb[0].mxu0 %v2826
    %v3179 = vpop.f32.mrb[0].mxu0
    %v3180 = vadd.f32 %v3065, %v3179
    %v3181 = vpop.f32.mrb[0].mxu0
    %v3182 = vpop.f32.mrb[0].mxu0
    %v3183 = vpop.f32.mrb[0].mxu0
    %3184 = vdwg.mxu0
    %s3185 = scalar_lea.vmem %s13, 4
    %v3186 = vld [vmem:[%s3185] sm:$0x3]
    %v3188 = vsel %vm2745, %v3186, 0
    %3190 = vmatprep.subr.mxu0 %v2753
    %3191 = vmatpush1.msra.mxu0 %v2750
    %3192 = vmatprep.subr.mxu0 0.0
    %3193 = vmatpush1.msra.mxu0 0.0
    %3194 = vmatprep.subr.mxu0 0.0
    %3195 = vmatpush1.msra.mxu0 0.0
    %3196 = vmatprep.subr.mxu0 0.0
    %3197 = vmatpush1.msra.mxu0 0.0
    %3198 = vmatprep.subr.mxu0 0.0
    %3199 = vmatpush1.msra.mxu0 0.0
    %3200 = vmatprep.subr.mxu0 0.0
    %3201 = vmatpush1.msra.mxu0 0.0
    %3202 = vmatprep.subr.mxu0 0.0
    %3203 = vmatpush1.msra.mxu0 0.0
    %3204 = vmatprep.subr.mxu0 0.0
    %3205 = vmatpush1.msra.mxu0 0.0
    %3206 = vmatprep.subr.mxu0 0.0
    %3207 = vmatpush1.msra.mxu0 0.0
    %3208 = vmatprep.subr.mxu0 0.0
    %3209 = vmatpush1.msra.mxu0 0.0
    %3210 = vmatprep.subr.mxu0 0.0
    %3211 = vmatpush1.msra.mxu0 0.0
    %3212 = vmatprep.subr.mxu0 0.0
    %3213 = vmatpush1.msra.mxu0 0.0
    %3214 = vmatprep.subr.mxu0 0.0
    %3215 = vmatpush1.msra.mxu0 0.0
    %3216 = vmatprep.subr.mxu0 0.0
    %3217 = vmatpush1.msra.mxu0 0.0
    %3218 = vmatprep.subr.mxu0 0.0
    %3219 = vmatpush1.msra.mxu0 0.0
    %3220 = vmatprep.subr.mxu0 0.0
    %3221 = vmatpush1.msra.mxu0 0.0
    %3222 = vmatprep.subr.mxu0 0.0
    %3223 = vmatpush1.msra.mxu0 0.0
    %3224 = vmatprep.subr.mxu0 0.0
    %3225 = vmatpush1.msra.mxu0 0.0
    %3226 = vmatprep.subr.mxu0 0.0
    %3227 = vmatpush1.msra.mxu0 0.0
    %3228 = vmatprep.subr.mxu0 0.0
    %3229 = vmatpush1.msra.mxu0 0.0
    %3230 = vmatprep.subr.mxu0 0.0
    %3231 = vmatpush1.msra.mxu0 0.0
    %3232 = vmatprep.subr.mxu0 0.0
    %3233 = vmatpush1.msra.mxu0 0.0
    %3234 = vmatprep.subr.mxu0 0.0
    %3235 = vmatpush1.msra.mxu0 0.0
    %3236 = vmatprep.subr.mxu0 0.0
    %3237 = vmatpush1.msra.mxu0 0.0
    %3238 = vmatprep.subr.mxu0 0.0
    %3239 = vmatpush1.msra.mxu0 0.0
    %3240 = vmatprep.subr.mxu0 0.0
    %3241 = vmatpush1.msra.mxu0 0.0
    %3242 = vmatprep.subr.mxu0 0.0
    %3243 = vmatpush1.msra.mxu0 0.0
    %3244 = vmatprep.subr.mxu0 0.0
    %3245 = vmatpush1.msra.mxu0 0.0
    %3246 = vmatprep.subr.mxu0 0.0
    %3247 = vmatpush1.msra.mxu0 0.0
    %3248 = vmatprep.subr.mxu0 0.0
    %3249 = vmatpush1.msra.mxu0 0.0
    %3250 = vmatprep.subr.mxu0 0.0
    %3251 = vmatpush1.msra.mxu0 0.0
    %3252 = vmatprep.subr.mxu0 0.0
    %3253 = vmatpush1.msra.mxu0 0.0
    %3254 = vmatprep.mubr.f32.mxu0 0.0
    %3255 = vmatmul.mubr.f32.gmra.mrb[0].mxu0 %v3188
    %v3256 = vpop.f32.mrb[0].mxu0
    %v3257 = vadd.f32 0.0, %v3256
    %v3258 = vpop.f32.mrb[0].mxu0
    %v3259 = vadd.f32 0.0, %v3258
    %3260 = vdwg.mxu0
    %v3261 = vpack.c.bf16 %v3257, %v3257
    %v3262 = vpack.c.bf16 %v3259, %v3259
    %s3263 = scalar_lea.vmem %s14, 192
    %v3264 = vld [vmem:[%s3263] sm:$0xf]
    %v3265 = vld [vmem:[%s3263 + $0x4] sm:$0xf]
    %v3266 = vld [vmem:[%s3263 + $0x8] sm:$0xf]
    %v3267 = vld [vmem:[%s3263 + $0xc] sm:$0xf]
    %v3268 = vld [vmem:[%s3263 + $0x10] sm:$0xf]
    %v3269 = vld [vmem:[%s3263 + $0x14] sm:$0xf]
    %v3270 = vld [vmem:[%s3263 + $0x18] sm:$0xf]
    %v3271 = vld [vmem:[%s3263 + $0x1c] sm:$0xf]
    %v3272 = vld [vmem:[%s3263 + $0x20] sm:$0xf]
    %v3273 = vld [vmem:[%s3263 + $0x24] sm:$0xf]
    %v3274 = vld [vmem:[%s3263 + $0x28] sm:$0xf]
    %v3275 = vld [vmem:[%s3263 + $0x2c] sm:$0xf]
    %v3276 = vld [vmem:[%s3263 + $0x30] sm:$0xf]
    %v3277 = vld [vmem:[%s3263 + $0x34] sm:$0xf]
    %v3278 = vld [vmem:[%s3263 + $0x38] sm:$0xf]
    %v3279 = vld [vmem:[%s3263 + $0x3c] sm:$0xf]
    %v3280 = vld [vmem:[%s3263 + $0x40] sm:$0xf]
    %v3281 = vld [vmem:[%s3263 + $0x44] sm:$0xf]
    %v3282 = vld [vmem:[%s3263 + $0x48] sm:$0xf]
    %v3283 = vld [vmem:[%s3263 + $0x4c] sm:$0xf]
    %v3284 = vld [vmem:[%s3263 + $0x50] sm:$0xf]
    %v3285 = vld [vmem:[%s3263 + $0x54] sm:$0xf]
    %v3286 = vld [vmem:[%s3263 + $0x58] sm:$0xf]
    %v3287 = vld [vmem:[%s3263 + $0x5c] sm:$0xf]
    %v3312 = vunpack.c.l.b16 %v3264
    %v3313 = vunpack.c.l.b16 %v3265
    %v3314 = vunpack.c.l.b16 %v3266
    %v3315 = vunpack.c.l.b16 %v3267
    %v3316 = vunpack.c.l.b16 %v3268
    %v3317 = vunpack.c.l.b16 %v3269
    %v3318 = vunpack.c.l.b16 %v3270
    %v3319 = vunpack.c.l.b16 %v3271
    %v3320 = vunpack.c.l.b16 %v3272
    %v3321 = vunpack.c.l.b16 %v3273
    %v3322 = vunpack.c.l.b16 %v3274
    %v3323 = vunpack.c.l.b16 %v3275
    %v3324 = vunpack.c.l.b16 %v3276
    %v3325 = vunpack.c.l.b16 %v3277
    %v3326 = vunpack.c.l.b16 %v3278
    %v3327 = vunpack.c.l.b16 %v3279
    %v3328 = vunpack.c.l.b16 %v3280
    %v3329 = vunpack.c.l.b16 %v3281
    %v3330 = vunpack.c.l.b16 %v3282
    %v3331 = vunpack.c.l.b16 %v3283
    %v3332 = vunpack.c.l.b16 %v3284
    %v3333 = vunpack.c.l.b16 %v3285
    %v3334 = vunpack.c.l.b16 %v3286
    %v3335 = vunpack.c.l.b16 %v3287
    %v3336 = vpack.c.b16 %v3313, %v3312
    %v3337 = vpack.c.b16 %v3315, %v3314
    %v3338 = vpack.c.b16 %v3317, %v3316
    %v3339 = vpack.c.b16 %v3319, %v3318
    %v3340 = vpack.c.b16 %v3321, %v3320
    %v3341 = vpack.c.b16 %v3323, %v3322
    %v3342 = vpack.c.b16 %v3325, %v3324
    %v3343 = vpack.c.b16 %v3327, %v3326
    %v3344 = vpack.c.b16 %v3329, %v3328
    %v3345 = vpack.c.b16 %v3331, %v3330
    %v3346 = vpack.c.b16 %v3333, %v3332
    %v3347 = vpack.c.b16 %v3335, %v3334
    %v3361 = vsel %vm82, %v3262, 0
    %3363 = vmatprep.subr.bf16.mxu0 0
    %3364 = vmatpush1.bf16.msra.mxu0 %v3336
    %3365 = vmatprep.subr.bf16.mxu0 0
    %3366 = vmatpush1.bf16.msra.mxu0 %v3337
    %3367 = vmatprep.subr.bf16.mxu0 0
    %3368 = vmatpush1.bf16.msra.mxu0 %v3338
    %3369 = vmatprep.subr.bf16.mxu0 0
    %3370 = vmatpush1.bf16.msra.mxu0 %v3339
    %3371 = vmatprep.subr.bf16.mxu0 0
    %3372 = vmatpush1.bf16.msra.mxu0 %v3340
    %3373 = vmatprep.subr.bf16.mxu0 0
    %3374 = vmatpush1.bf16.msra.mxu0 %v3341
    %3375 = vmatprep.subr.bf16.mxu0 0
    %3376 = vmatpush1.bf16.msra.mxu0 %v3342
    %3377 = vmatprep.subr.bf16.mxu0 0
    %3378 = vmatpush1.bf16.msra.mxu0 %v3343
    %3379 = vmatprep.subr.bf16.mxu0 0
    %3380 = vmatpush1.bf16.msra.mxu0 %v3344
    %3381 = vmatprep.subr.bf16.mxu0 0
    %3382 = vmatpush1.bf16.msra.mxu0 %v3345
    %3383 = vmatprep.subr.bf16.mxu0 0
    %3384 = vmatpush1.bf16.msra.mxu0 %v3346
    %3385 = vmatprep.subr.bf16.mxu0 0
    %3386 = vmatpush1.bf16.msra.mxu0 %v3347
    %3387 = vmatprep.subr.bf16.mxu0 0
    %3388 = vmatpush1.bf16.msra.mxu0 0
    %3389 = vmatprep.subr.bf16.mxu0 0
    %3390 = vmatpush1.bf16.msra.mxu0 0
    %3391 = vmatprep.subr.bf16.mxu0 0
    %3392 = vmatpush1.bf16.msra.mxu0 0
    %3393 = vmatprep.subr.bf16.mxu0 0
    %3394 = vmatpush1.bf16.msra.mxu0 0
    %3395 = vmatprep.mubr.bf16.mxu0 %v3361
    %3396 = vmatmul.mubr.bf16.gmra.mrb[0].mxu0 %v3261
    %v3397 = vpop.f32.mrb[0].mxu0
    %v3398 = vadd.f32 0.0, %v3397
    %v3399 = vpop.f32.mrb[0].mxu0
    %v3400 = vpop.f32.mrb[0].mxu0
    %v3401 = vpop.f32.mrb[0].mxu0
    %3402 = vdwg.mxu0
    %v3403 = vadd.f32 %v3180, %v3398
    %v3404 = vld [vmem:[%s15] sm:$0x1]
    %v3406 = vlaneseq
    %v3407 = vshrl.u32 %v3406, 7
    %v3408 = vsub.s32 0, %v3407
    %v3409 = vrot.slane %v3404, %v3408
    %v3411 = vmul.f32 %v3403, %v3409
    %v3412 = vld [vmem:[%s16] sm:$0x1]
    %v3414 = vlaneseq
    %v3415 = vshrl.u32 %v3414, 7
    %v3416 = vsub.s32 0, %v3415
    %v3417 = vrot.slane %v3412, %v3416
    %v3419 = vadd.f32 %v3411, %v3417
    %v3420 = vsub.f32 0.0, %v3419
    %v3421 = vmul.f32 %v3420, 1.442695
    %v3422 = vpow.pop %v3421
    %v3423 = vadd.f32 %v3422, 1.0
    %v3424 = vrcp.pop %v3423
    %v3425 = vmul.f32 1.0, %v3424
    %v3426 = vpack.c.bf16 %v3425, %v3425
    %v3427 = vld [vmem:[%s17] sm:$0xf]
    %v3428 = vld [vmem:[%s17 + $0x4] sm:$0xf]
    %v3429 = vld [vmem:[%s17 + $0x8] sm:$0xf]
    %v3430 = vld [vmem:[%s17 + $0xc] sm:$0xf]
    %v3431 = vld [vmem:[%s17 + $0x10] sm:$0xf]
    %v3432 = vld [vmem:[%s17 + $0x14] sm:$0xf]
    %v3433 = vld [vmem:[%s17 + $0x18] sm:$0xf]
    %v3434 = vld [vmem:[%s17 + $0x1c] sm:$0xf]
    %v3435 = vld [vmem:[%s17 + $0x20] sm:$0xf]
    %v3436 = vld [vmem:[%s17 + $0x24] sm:$0xf]
    %v3437 = vld [vmem:[%s17 + $0x28] sm:$0xf]
    %v3438 = vld [vmem:[%s17 + $0x2c] sm:$0xf]
    %v3439 = vld [vmem:[%s17 + $0x30] sm:$0xf]
    %v3440 = vld [vmem:[%s17 + $0x34] sm:$0xf]
    %v3441 = vld [vmem:[%s17 + $0x38] sm:$0xf]
    %v3442 = vld [vmem:[%s17 + $0x3c] sm:$0xf]
    %v3443 = vld [vmem:[%s18] sm:$0x1]
    %v3445 = vlaneseq
    %v3446 = vshrl.u32 %v3445, 7
    %v3447 = vsub.s32 0, %v3446
    %v3448 = vrot.slane %v3443, %v3447
    %v3466 = vunpack.c.l.b16 %v3427
    %v3467 = vunpack.c.l.b16 %v3428
    %v3468 = vunpack.c.l.b16 %v3429
    %v3469 = vunpack.c.l.b16 %v3430
    %v3470 = vunpack.c.l.b16 %v3431
    %v3471 = vunpack.c.l.b16 %v3432
    %v3472 = vunpack.c.l.b16 %v3433
    %v3473 = vunpack.c.l.b16 %v3434
    %v3474 = vunpack.c.l.b16 %v3435
    %v3475 = vunpack.c.l.b16 %v3436
    %v3476 = vunpack.c.l.b16 %v3437
    %v3477 = vunpack.c.l.b16 %v3438
    %v3478 = vunpack.c.l.b16 %v3439
    %v3479 = vunpack.c.l.b16 %v3440
    %v3480 = vunpack.c.l.b16 %v3441
    %v3481 = vunpack.c.l.b16 %v3442
    %v3482 = vpack.c.b16 %v3467, %v3466
    %v3483 = vpack.c.b16 %v3469, %v3468
    %v3484 = vpack.c.b16 %v3471, %v3470
    %v3485 = vpack.c.b16 %v3473, %v3472
    %v3486 = vpack.c.b16 %v3475, %v3474
    %v3487 = vpack.c.b16 %v3477, %v3476
    %v3488 = vpack.c.b16 %v3479, %v3478
    %v3489 = vpack.c.b16 %v3481, %v3480
    %3498 = vmatprep.subr.bf16.mxu0 0
    %3499 = vmatpush1.bf16.msra.mxu0 %v3482
    %3500 = vmatprep.subr.bf16.mxu0 0
    %3501 = vmatpush1.bf16.msra.mxu0 %v3483
    %3502 = vmatprep.subr.bf16.mxu0 0
    %3503 = vmatpush1.bf16.msra.mxu0 %v3484
    %3504 = vmatprep.subr.bf16.mxu0 0
    %3505 = vmatpush1.bf16.msra.mxu0 %v3485
    %3506 = vmatprep.subr.bf16.mxu0 0
    %3507 = vmatpush1.bf16.msra.mxu0 %v3486
    %3508 = vmatprep.subr.bf16.mxu0 0
    %3509 = vmatpush1.bf16.msra.mxu0 %v3487
    %3510 = vmatprep.subr.bf16.mxu0 0
    %3511 = vmatpush1.bf16.msra.mxu0 %v3488
    %3512 = vmatprep.subr.bf16.mxu0 0
    %3513 = vmatpush1.bf16.msra.mxu0 %v3489
    %3514 = vmatprep.subr.bf16.mxu0 0
    %3515 = vmatpush1.bf16.msra.mxu0 0
    %3516 = vmatprep.subr.bf16.mxu0 0
    %3517 = vmatpush1.bf16.msra.mxu0 0
    %3518 = vmatprep.subr.bf16.mxu0 0
    %3519 = vmatpush1.bf16.msra.mxu0 0
    %3520 = vmatprep.subr.bf16.mxu0 0
    %3521 = vmatpush1.bf16.msra.mxu0 0
    %3522 = vmatprep.subr.bf16.mxu0 0
    %3523 = vmatpush1.bf16.msra.mxu0 0
    %3524 = vmatprep.subr.bf16.mxu0 0
    %3525 = vmatpush1.bf16.msra.mxu0 0
    %3526 = vmatprep.subr.bf16.mxu0 0
    %3527 = vmatpush1.bf16.msra.mxu0 0
    %3528 = vmatprep.subr.bf16.mxu0 0
    %3529 = vmatpush1.bf16.msra.mxu0 0
    %3530 = vmatprep.mubr.bf16.mxu0 0
    %3531 = vmatmul.mubr.bf16.gmra.mrb[0].mxu0 %v3426
    %v3532 = vpop.f32.mrb[0].mxu0
    %v3533 = vadd.f32 %v3448, %v3532
    %v3534 = vpop.f32.mrb[0].mxu0
    %v3535 = vpop.f32.mrb[0].mxu0
    %v3536 = vpop.f32.mrb[0].mxu0
    %3537 = vdwg.mxu0
    %v3538 = vpack.c.bf16 %v3533, %v3533
    %v3539 = vld [vmem:[%s19] sm:$0xf]
    %v3540 = vld [vmem:[%s19 + $0x4] sm:$0xf]
    %v3541 = vld [vmem:[%s20] sm:$0x1]
    %v3543 = vlaneseq
    %v3544 = vshrl.u32 %v3543, 7
    %v3545 = vsub.s32 0, %v3544
    %v3546 = vrot.slane %v3541, %v3545
    %v3550 = vunpack.c.l.b16 %v3539
    %v3551 = vunpack.c.l.b16 %v3540
    %v3552 = vpack.c.b16 %v3551, %v3550
    %vm3554 = vcmask 130048
    %v3556 = vsel %vm3554, %v3538, 0
    %3558 = vmatprep.subr.bf16.mxu0 0
    %3559 = vmatpush1.bf16.msra.mxu0 %v3552
    %3560 = vmatprep.subr.bf16.mxu0 0
    %3561 = vmatpush1.bf16.msra.mxu0 0
    %3562 = vmatprep.subr.bf16.mxu0 0
    %3563 = vmatpush1.bf16.msra.mxu0 0
    %3564 = vmatprep.subr.bf16.mxu0 0
    %3565 = vmatpush1.bf16.msra.mxu0 0
    %3566 = vmatprep.subr.bf16.mxu0 0
    %3567 = vmatpush1.bf16.msra.mxu0 0
    %3568 = vmatprep.subr.bf16.mxu0 0
    %3569 = vmatpush1.bf16.msra.mxu0 0
    %3570 = vmatprep.subr.bf16.mxu0 0
    %3571 = vmatpush1.bf16.msra.mxu0 0
    %3572 = vmatprep.subr.bf16.mxu0 0
    %3573 = vmatpush1.bf16.msra.mxu0 0
    %3574 = vmatprep.subr.bf16.mxu0 0
    %3575 = vmatpush1.bf16.msra.mxu0 0
    %3576 = vmatprep.subr.bf16.mxu0 0
    %3577 = vmatpush1.bf16.msra.mxu0 0
    %3578 = vmatprep.subr.bf16.mxu0 0
    %3579 = vmatpush1.bf16.msra.mxu0 0
    %3580 = vmatprep.subr.bf16.mxu0 0
    %3581 = vmatpush1.bf16.msra.mxu0 0
    %3582 = vmatprep.subr.bf16.mxu0 0
    %3583 = vmatpush1.bf16.msra.mxu0 0
    %3584 = vmatprep.subr.bf16.mxu0 0
    %3585 = vmatpush1.bf16.msra.mxu0 0
    %3586 = vmatprep.subr.bf16.mxu0 0
    %3587 = vmatpush1.bf16.msra.mxu0 0
    %3588 = vmatprep.subr.bf16.mxu0 0
    %3589 = vmatpush1.bf16.msra.mxu0 0
    %3590 = vmatprep.mubr.bf16.mxu0 0
    %3591 = vmatmul.mubr.bf16.gmra.mrb[0].mxu0 %v3556
    %v3592 = vpop.f32.mrb[0].mxu0
    %v3593 = vadd.f32 %v3546, %v3592
    %v3594 = vpop.f32.mrb[0].mxu0
    %v3595 = vpop.f32.mrb[0].mxu0
    %v3596 = vpop.f32.mrb[0].mxu0
    %3597 = vdwg.mxu0
    %vm3598 = vcmask 25600
    %3599 = vst.msk [vmem:[#allocation2] sm:$0x3] %vm3598, %v3593
    // Predicated region
    $region86: #{_lambda_.1} parent=1 // pred_check
      _
    $region87: #{_lambda_.1} parent=1 // pred_check_branch
      %3601 = sbr.rel (0) target = $region89
    $region88: #{_lambda_.1} parent=1 // pred_region
      %s3603 = ssub.s32 32, 32
      %3604 = vsyncadd [#allocation3], %s3603
      %s3606 = sshll.u32 [#allocation2], 4
      %s3607 = int_to_ptr.vmem [resolvable:$true] %s3606
      %3609 = dma.vmem_to_hbm [thread:$0]  %s3607, 32, %s21, [#allocation3]
    $region89: #{_lambda_.1} parent=1 // pred_fallthru
      _
    // Predicated region
    $region90: #{_lambda_.1} parent=1 // pred_check
      _
    $region91: #{_lambda_.1} parent=1 // pred_check_branch
      %3611 = sbr.rel (0) target = $region93
    $region92: #{_lambda_.1} parent=1 // pred_region
      %3612 = dma.done [#allocation3], 32
    $region93: #{_lambda_.1} parent=1 // pred_fallthru
      _
    %3613 = vsyncpa [#allocation3], 1

</llo_original>
